<compile_context>
chip_gen: v7x
topology: tpu7x:2x2x1
jax: 0.10.0
libtpu: 0.0.40
codegen_flags: <defaults>
</compile_context>

<pallas_src>
import math

import numpy as np
import jax
import jax.numpy as jnp
from jax import lax
from jax.experimental import pallas as pl
from jax.experimental.pallas import tpu as pltpu

KERNEL_SIZE = 5
PAD = KERNEL_SIZE // 2                  # = 2, "same" padding per conv layer
NUM_CHANNELS_TAIL = [16, 32, 16, 2]     # channel plan from the PyTorch module
WEIGHT_LANES = 128                      # lane-pad of the packed weight array


def _round_up(x, m):
    return (x + m - 1) // m * m


def _layer_plan(in_channels):
    """Static per-layer plan: (cin_padded, cout_padded, row_offset in w_pack)."""
    cins = [in_channels] + NUM_CHANNELS_TAIL[:-1]
    couts = NUM_CHANNELS_TAIL
    plan, ro = [], 0
    for cin, cout in zip(cins, couts):
        cin_p, cout_p = _round_up(cin, 8), _round_up(cout, 8)
        plan.append((cin_p, cout_p, ro))
        ro += cout_p
    return plan, ro                      # ro == 72 for the standard net


def _choose_batch_tile(B, L):
    """Batch elements folded into one grid step (onto the lane axis)."""
    S = L + 2 * PAD
    lane_budget = 1024                   # bounds accumulator/slice vreg pressure
    bt_cap = max(1, lane_budget // S)
    target = max(1, B // 2)              # keep >= 2 grid steps for v7x megacore
    bt = max(1, min(bt_cap, target))
    while B % bt:                        # must divide the batch exactly
        bt -= 1
    return bt


# ------------------------------ fused kernel ------------------------------- #

def _make_kernel(plan, Bt, c_in, L, compute_dtype):
    S = L + 2 * PAD                      # per-element segment width on lanes
    W = Bt * S                           # packed slab width
    n_layers = len(plan)

    def kernel(x_ref, w_ref, out_ref, a_ref):
        # x_ref : (Bt, c_in, L)  f32
        # w_ref : (K+1, 72, 128) f32   (slot K holds biases in column 0)
        # out_ref: (Bt, 8, L)    f32   (row 0 = mu, row 1 = sigma, rest 0)
        # a_ref : (Cmax, W + 2*PAD) f32 VMEM activation scratch

        # -- 1) build the packed activation slab (zero halos) in VMEM --------
        a_ref[...] = jnp.zeros_like(a_ref)
        for b in range(Bt):              # Bt is small; static unroll
            off = b * S + 2 * PAD        # slab col b*S+PAD, +PAD scratch margin
            a_ref[0:c_in, off:off + L] = x_ref[b]

        # Hoisted valid-column mask (1.0 on each element's L real columns).
        col = lax.broadcasted_iota(jnp.int32, (1, W), 1)
        valid = None
        for b in range(Bt):
            vb = (col >= b * S + PAD) & (col < b * S + PAD + L)
            valid = vb if valid is None else jnp.logical_or(valid, vb)
        maskf = valid.astype(jnp.float32)

        # -- 2) conv layers: 5 accumulated per-tap MXU dots each -------------
        for li, (cin_p, cout_p, ro) in enumerate(plan):
            acc = None
            for k in range(KERNEL_SIZE):
                wk = w_ref[k, ro:ro + cout_p, 0:cin_p].astype(compute_dtype)
                hk = a_ref[0:cin_p, k:k + W].astype(compute_dtype)
                d = jnp.dot(wk, hk, preferred_element_type=jnp.float32)
                acc = d if acc is None else acc + d
            bias = w_ref[KERNEL_SIZE, ro:ro + cout_p, 0:1]      # f32 (cout_p,1)
            y = acc + bias                                       # (cout_p, W)

            if li < n_layers - 1:
                # ReLU + re-establish the zero halos the next layer reads.
                y = jnp.maximum(y, 0.0) * maskf
                a_ref[0:cout_p, PAD:PAD + W] = y
            else:
                # Head: row 0 = mu, row 1 = softplus(sigma); rows 2..7 == 0.
                sp = jnp.where(y > 20.0, y,
                               jnp.log1p(jnp.exp(jnp.minimum(y, 20.0))))
                row = lax.broadcasted_iota(jnp.int32, y.shape, 0)
                out8 = jnp.where(row == 1, sp, y)                # (8, W)
                for b in range(Bt):
                    out_ref[b] = out8[:, b * S + PAD:b * S + PAD + L]

    return kernel


# ------------------------------ JAX wrappers -------------------------------- #

def init_simple_cnn_params(key, in_channels):
    """Deterministic PyTorch-style init, kept in PyTorch layout
    [(w: (Cout, Cin, K), b: (Cout,)), ...]."""
    num_channels = [in_channels] + NUM_CHANNELS_TAIL
    params = []
    for cin, cout in zip(num_channels[:-1], num_channels[1:]):
        key, kw, kb = jax.random.split(key, 3)
        bound = 1.0 / math.sqrt(cin * KERNEL_SIZE)
        w = jax.random.uniform(kw, (cout, cin, KERNEL_SIZE), jnp.float32,
                               -bound, bound)
        b = jax.random.uniform(kb, (cout,), jnp.float32, -bound, bound)
        params.append((w, b))
    return params


def prepare_kernel_params(params_pt, in_channels):
    """One-time repack of all layers' weights+biases into a single lane-aligned
    array w_pack: (K+1, sum(Cout_pad)=72, 128) f32 with
      w_pack[k, row_off+o, ci] = W_layer[o, ci, k]
      w_pack[K, row_off+o, 0]  = b_layer[o]
    Padded rows/columns are zero and contribute nothing."""
    plan, total_rows = _layer_plan(in_channels)
    w_pack = np.zeros((KERNEL_SIZE + 1, total_rows, WEIGHT_LANES), np.float32)
    for (w, b), (_, _, ro) in zip(params_pt, plan):
        w = np.asarray(w); b = np.asarray(b)
        cout, cin, _ = w.shape
        w_pack[:KERNEL_SIZE, ro:ro + cout, :cin] = np.transpose(w, (2, 0, 1))
        w_pack[KERNEL_SIZE, ro:ro + cout, 0] = b
    return jnp.asarray(w_pack)


def simple_cnn_forward(t_h, w_pack, compute_dtype=jnp.bfloat16):
    """t_h: (B, in_channels, L) PyTorch NCL layout.
    Returns (y_mu, y_sigma), each (B, 1, L)."""
    B, c_in, L = t_h.shape
    plan, _ = _layer_plan(c_in)
    Bt = _choose_batch_tile(B, L)
    G = B // Bt
    S = L + 2 * PAD
    W = Bt * S
    cmax = max(max(cin_p, cout_p) for cin_p, cout_p, _ in plan)

    kernel = _make_kernel(plan, Bt, c_in, L, compute_dtype)

    out = pl.pallas_call(
        kernel,
        grid=(G,),
        in_specs=[
            pl.BlockSpec((Bt, c_in, L), lambda g: (g, 0, 0)),
            pl.BlockSpec(w_pack.shape, lambda g: (0, 0, 0)),   # fetched once
        ],
        out_specs=pl.BlockSpec((Bt, 8, L), lambda g: (g, 0, 0)),
        out_shape=jax.ShapeDtypeStruct((B, 8, L), jnp.float32),
        scratch_shapes=[pltpu.VMEM((cmax, W + 2 * PAD), jnp.float32)],
        compiler_params=pltpu.CompilerParams(
            dimension_semantics=("parallel",)),      # batch across TCs on v7x
    )(t_h, w_pack)

    return out[:, 0:1, :], out[:, 1:2, :]


# ------------------------- pure-JAX reference check ------------------------- #

def ref_forward(t_h, params_pt):
    x = t_h
    n = len(params_pt)
    for i, (w, b) in enumerate(params_pt):
        x = lax.conv_general_dilated(
            x, w, window_strides=(1,), padding=((PAD, PAD),),
            dimension_numbers=('NCH', 'OIH', 'NCH')) + b[None, :, None]
        if i < n - 1:
            x = jax.nn.relu(x)
    return x[:, 0:1], jax.nn.softplus(x[:, 1:2])


if __name__ == "__main__":
    B, C_IN, L = 4, 4, 128   # B=4 -> Bt=2 per step, grid=(2,): folding exercised
    key = jax.random.PRNGKey(0)
    k_x, k_p = jax.random.split(key)
    t_h = jax.random.normal(k_x, (B, C_IN, L), jnp.float32)
    params = init_simple_cnn_params(k_p, C_IN)
    w_pack = prepare_kernel_params(params, C_IN)

    fwd = jax.jit(simple_cnn_forward)
    y_mu, y_sigma = fwd(t_h, w_pack)
    jax.block_until_ready((y_mu, y_sigma))

    r_mu, r_sigma = ref_forward(t_h, params)
    assert y_mu.shape == (B, 1, L) and y_sigma.shape == (B, 1, L)
    # bf16 MXU operands with f32 accumulation -> compare at 2e-2.
    assert jnp.allclose(y_mu, r_mu, atol=2e-2, rtol=2e-2)
    assert jnp.allclose(y_sigma, r_sigma, atol=2e-2, rtol=2e-2)
    assert bool(jnp.all(y_sigma > 0))
    print("KERNEL_OK")
</pallas_src>

<mosaic_0001>
module attributes {stable_mosaic.version = 11 : i64} {
  func.func @kernel(%arg0: i32, %arg1: memref<2x4x128xf32, #tpu.memory_space<vmem>>, %arg2: memref<6x72x128xf32, #tpu.memory_space<vmem>>, %arg3: memref<2x8x128xf32, #tpu.memory_space<vmem>>, %arg4: memref<32x268xf32, #tpu.memory_space<vmem>>) attributes {dimension_semantics = [#tpu.dimension_semantics<parallel>], iteration_bounds = array<i64: 2>, scalar_prefetch = 0 : i64, scratch_operands = 1 : i64, tpu.core_type = #tpu.core_type<tc>, window_params = [{transform_indices = @transform_0, window_bounds = array<i64: 2, 4, 128>}, {pipeline_mode = #tpu.pipeline_mode<synchronous>, transform_indices = @transform_1, window_bounds = array<i64: 6, 72, 128>}, {transform_indices = @transform_2, window_bounds = array<i64: 2, 8, 128>}]} {
    %cst = arith.constant 0.000000e+00 : f32
    %0 = vector.broadcast %cst : f32 to vector<32x268xf32>
    %c0 = arith.constant 0 : index
    %c0_0 = arith.constant 0 : index
    %1 = vector.load %arg4[%c0, %c0_0] : memref<32x268xf32, #tpu.memory_space<vmem>>, vector<32x268xf32>
    tpu.vector_store %arg4[%c0, %c0_0], %0 {strides = array<i32>} : memref<32x268xf32, #tpu.memory_space<vmem>>, vector<32x268xf32>,
    %c0_1 = arith.constant 0 : index
    %c0_2 = arith.constant 0 : index
    %c0_3 = arith.constant 0 : index
    %2 = vector.load %arg1[%c0_1, %c0_2, %c0_3] : memref<2x4x128xf32, #tpu.memory_space<vmem>>, vector<1x4x128xf32>
    %3 = vector.shape_cast %2 : vector<1x4x128xf32> to vector<4x128xf32>
    %c0_4 = arith.constant 0 : index
    %c4 = arith.constant 4 : index
    %4 = vector.load %arg4[%c0_4, %c4] : memref<32x268xf32, #tpu.memory_space<vmem>>, vector<4x128xf32>
    tpu.vector_store %arg4[%c0_4, %c4], %3 {strides = array<i32>} : memref<32x268xf32, #tpu.memory_space<vmem>>, vector<4x128xf32>,
    %c1 = arith.constant 1 : index
    %c0_5 = arith.constant 0 : index
    %c0_6 = arith.constant 0 : index
    %5 = vector.load %arg1[%c1, %c0_5, %c0_6] : memref<2x4x128xf32, #tpu.memory_space<vmem>>, vector<1x4x128xf32>
    %6 = vector.shape_cast %5 : vector<1x4x128xf32> to vector<4x128xf32>
    %c0_7 = arith.constant 0 : index
    %c136 = arith.constant 136 : index
    %7 = vector.load %arg4[%c0_7, %c136] : memref<32x268xf32, #tpu.memory_space<vmem>>, vector<4x128xf32>
    tpu.vector_store %arg4[%c0_7, %c136], %6 {strides = array<i32>} : memref<32x268xf32, #tpu.memory_space<vmem>>, vector<4x128xf32>,
    %8 = tpu.iota {dimensions = array<i32: 1>} : vector<1x264xi32>
    %c2_i32 = arith.constant 2 : i32
    %9 = vector.broadcast %c2_i32 : i32 to vector<1x264xi32>
    %10 = arith.cmpi sge, %8, %9 : vector<1x264xi32>
    %c130_i32 = arith.constant 130 : i32
    %11 = vector.broadcast %c130_i32 : i32 to vector<1x264xi32>
    %12 = arith.cmpi slt, %8, %11 : vector<1x264xi32>
    %13 = arith.andi %10, %12 : vector<1x264xi1>
    %c134_i32 = arith.constant 134 : i32
    %14 = vector.broadcast %c134_i32 : i32 to vector<1x264xi32>
    %15 = arith.cmpi sge, %8, %14 : vector<1x264xi32>
    %c262_i32 = arith.constant 262 : i32
    %16 = vector.broadcast %c262_i32 : i32 to vector<1x264xi32>
    %17 = arith.cmpi slt, %8, %16 : vector<1x264xi32>
    %18 = arith.andi %15, %17 : vector<1x264xi1>
    %19 = arith.ori %13, %18 : vector<1x264xi1>
    %20 = arith.extui %19 : vector<1x264xi1> to vector<1x264xi32>
    %21 = arith.sitofp %20 : vector<1x264xi32> to vector<1x264xf32>
    %c0_8 = arith.constant 0 : index
    %c0_9 = arith.constant 0 : index
    %c0_10 = arith.constant 0 : index
    %22 = vector.load %arg2[%c0_8, %c0_9, %c0_10] : memref<6x72x128xf32, #tpu.memory_space<vmem>>, vector<1x16x8xf32>
    %23 = vector.shape_cast %22 : vector<1x16x8xf32> to vector<16x8xf32>
    %24 = arith.truncf %23 : vector<16x8xf32> to vector<16x8xbf16>
    %c0_11 = arith.constant 0 : index
    %c0_12 = arith.constant 0 : index
    %25 = vector.load %arg4[%c0_11, %c0_12] : memref<32x268xf32, #tpu.memory_space<vmem>>, vector<8x264xf32>
    %26 = arith.truncf %25 : vector<8x264xf32> to vector<8x264xbf16>
    %cst_13 = arith.constant dense<0.000000e+00> : vector<16x264xf32>
    %27 = tpu.matmul %24, %26, %cst_13 {dimension_numbers = #tpu.dot_dimension_numbers<[1], [0], [0], [1], [0, 0, 1, 1], [], []>} : vector<16x8xbf16>, vector<8x264xbf16>, vector<16x264xf32> -> vector<16x264xf32>
    %c1_14 = arith.constant 1 : index
    %c0_15 = arith.constant 0 : index
    %c0_16 = arith.constant 0 : index
    %28 = vector.load %arg2[%c1_14, %c0_15, %c0_16] : memref<6x72x128xf32, #tpu.memory_space<vmem>>, vector<1x16x8xf32>
    %29 = vector.shape_cast %28 : vector<1x16x8xf32> to vector<16x8xf32>
    %30 = arith.truncf %29 : vector<16x8xf32> to vector<16x8xbf16>
    %c0_17 = arith.constant 0 : index
    %c1_18 = arith.constant 1 : index
    %31 = vector.load %arg4[%c0_17, %c1_18] : memref<32x268xf32, #tpu.memory_space<vmem>>, vector<8x264xf32>
    %32 = arith.truncf %31 : vector<8x264xf32> to vector<8x264xbf16>
    %cst_19 = arith.constant dense<0.000000e+00> : vector<16x264xf32>
    %33 = tpu.matmul %30, %32, %cst_19 {dimension_numbers = #tpu.dot_dimension_numbers<[1], [0], [0], [1], [0, 0, 1, 1], [], []>} : vector<16x8xbf16>, vector<8x264xbf16>, vector<16x264xf32> -> vector<16x264xf32>
    %34 = arith.addf %27, %33 : vector<16x264xf32>
    %c2 = arith.constant 2 : index
    %c0_20 = arith.constant 0 : index
    %c0_21 = arith.constant 0 : index
    %35 = vector.load %arg2[%c2, %c0_20, %c0_21] : memref<6x72x128xf32, #tpu.memory_space<vmem>>, vector<1x16x8xf32>
    %36 = vector.shape_cast %35 : vector<1x16x8xf32> to vector<16x8xf32>
    %37 = arith.truncf %36 : vector<16x8xf32> to vector<16x8xbf16>
    %c0_22 = arith.constant 0 : index
    %c2_23 = arith.constant 2 : index
    %38 = vector.load %arg4[%c0_22, %c2_23] : memref<32x268xf32, #tpu.memory_space<vmem>>, vector<8x264xf32>
    %39 = arith.truncf %38 : vector<8x264xf32> to vector<8x264xbf16>
    %cst_24 = arith.constant dense<0.000000e+00> : vector<16x264xf32>
    %40 = tpu.matmul %37, %39, %cst_24 {dimension_numbers = #tpu.dot_dimension_numbers<[1], [0], [0], [1], [0, 0, 1, 1], [], []>} : vector<16x8xbf16>, vector<8x264xbf16>, vector<16x264xf32> -> vector<16x264xf32>
    %41 = arith.addf %34, %40 : vector<16x264xf32>
    %c3 = arith.constant 3 : index
    %c0_25 = arith.constant 0 : index
    %c0_26 = arith.constant 0 : index
    %42 = vector.load %arg2[%c3, %c0_25, %c0_26] : memref<6x72x128xf32, #tpu.memory_space<vmem>>, vector<1x16x8xf32>
    %43 = vector.shape_cast %42 : vector<1x16x8xf32> to vector<16x8xf32>
    %44 = arith.truncf %43 : vector<16x8xf32> to vector<16x8xbf16>
    %c0_27 = arith.constant 0 : index
    %c3_28 = arith.constant 3 : index
    %45 = vector.load %arg4[%c0_27, %c3_28] : memref<32x268xf32, #tpu.memory_space<vmem>>, vector<8x264xf32>
    %46 = arith.truncf %45 : vector<8x264xf32> to vector<8x264xbf16>
    %cst_29 = arith.constant dense<0.000000e+00> : vector<16x264xf32>
    %47 = tpu.matmul %44, %46, %cst_29 {dimension_numbers = #tpu.dot_dimension_numbers<[1], [0], [0], [1], [0, 0, 1, 1], [], []>} : vector<16x8xbf16>, vector<8x264xbf16>, vector<16x264xf32> -> vector<16x264xf32>
    %48 = arith.addf %41, %47 : vector<16x264xf32>
    %c4_30 = arith.constant 4 : index
    %c0_31 = arith.constant 0 : index
    %c0_32 = arith.constant 0 : index
    %49 = vector.load %arg2[%c4_30, %c0_31, %c0_32] : memref<6x72x128xf32, #tpu.memory_space<vmem>>, vector<1x16x8xf32>
    %50 = vector.shape_cast %49 : vector<1x16x8xf32> to vector<16x8xf32>
    %51 = arith.truncf %50 : vector<16x8xf32> to vector<16x8xbf16>
    %c0_33 = arith.constant 0 : index
    %c4_34 = arith.constant 4 : index
    %52 = vector.load %arg4[%c0_33, %c4_34] : memref<32x268xf32, #tpu.memory_space<vmem>>, vector<8x264xf32>
    %53 = arith.truncf %52 : vector<8x264xf32> to vector<8x264xbf16>
    %cst_35 = arith.constant dense<0.000000e+00> : vector<16x264xf32>
    %54 = tpu.matmul %51, %53, %cst_35 {dimension_numbers = #tpu.dot_dimension_numbers<[1], [0], [0], [1], [0, 0, 1, 1], [], []>} : vector<16x8xbf16>, vector<8x264xbf16>, vector<16x264xf32> -> vector<16x264xf32>
    %55 = arith.addf %48, %54 : vector<16x264xf32>
    %c5 = arith.constant 5 : index
    %c0_36 = arith.constant 0 : index
    %c0_37 = arith.constant 0 : index
    %56 = vector.load %arg2[%c5, %c0_36, %c0_37] : memref<6x72x128xf32, #tpu.memory_space<vmem>>, vector<1x16x1xf32>
    %57 = vector.shape_cast %56 : vector<1x16x1xf32> to vector<16x1xf32>
    %58 = vector.broadcast %57 : vector<16x1xf32> to vector<16x264xf32>
    %59 = arith.addf %55, %58 : vector<16x264xf32>
    %cst_38 = arith.constant 0.000000e+00 : f32
    %60 = vector.broadcast %cst_38 : f32 to vector<16x264xf32>
    %61 = arith.maximumf %59, %60 : vector<16x264xf32>
    %62 = vector.broadcast %21 : vector<1x264xf32> to vector<16x264xf32>
    %63 = arith.mulf %61, %62 : vector<16x264xf32>
    %c0_39 = arith.constant 0 : index
    %c2_40 = arith.constant 2 : index
    %64 = vector.load %arg4[%c0_39, %c2_40] : memref<32x268xf32, #tpu.memory_space<vmem>>, vector<16x264xf32>
    tpu.vector_store %arg4[%c0_39, %c2_40], %63 {strides = array<i32>} : memref<32x268xf32, #tpu.memory_space<vmem>>, vector<16x264xf32>,
    %c0_41 = arith.constant 0 : index
    %c16 = arith.constant 16 : index
    %c0_42 = arith.constant 0 : index
    %65 = vector.load %arg2[%c0_41, %c16, %c0_42] : memref<6x72x128xf32, #tpu.memory_space<vmem>>, vector<1x32x16xf32>
    %66 = vector.shape_cast %65 : vector<1x32x16xf32> to vector<32x16xf32>
    %67 = arith.truncf %66 : vector<32x16xf32> to vector<32x16xbf16>
    %c0_43 = arith.constant 0 : index
    %c0_44 = arith.constant 0 : index
    %68 = vector.load %arg4[%c0_43, %c0_44] : memref<32x268xf32, #tpu.memory_space<vmem>>, vector<16x264xf32>
    %69 = arith.truncf %68 : vector<16x264xf32> to vector<16x264xbf16>
    %cst_45 = arith.constant dense<0.000000e+00> : vector<32x264xf32>
    %70 = tpu.matmul %67, %69, %cst_45 {dimension_numbers = #tpu.dot_dimension_numbers<[1], [0], [0], [1], [0, 0, 1, 1], [], []>} : vector<32x16xbf16>, vector<16x264xbf16>, vector<32x264xf32> -> vector<32x264xf32>
    %c1_46 = arith.constant 1 : index
    %c16_47 = arith.constant 16 : index
    %c0_48 = arith.constant 0 : index
    %71 = vector.load %arg2[%c1_46, %c16_47, %c0_48] : memref<6x72x128xf32, #tpu.memory_space<vmem>>, vector<1x32x16xf32>
    %72 = vector.shape_cast %71 : vector<1x32x16xf32> to vector<32x16xf32>
    %73 = arith.truncf %72 : vector<32x16xf32> to vector<32x16xbf16>
    %c0_49 = arith.constant 0 : index
    %c1_50 = arith.constant 1 : index
    %74 = vector.load %arg4[%c0_49, %c1_50] : memref<32x268xf32, #tpu.memory_space<vmem>>, vector<16x264xf32>
    %75 = arith.truncf %74 : vector<16x264xf32> to vector<16x264xbf16>
    %cst_51 = arith.constant dense<0.000000e+00> : vector<32x264xf32>
    %76 = tpu.matmul %73, %75, %cst_51 {dimension_numbers = #tpu.dot_dimension_numbers<[1], [0], [0], [1], [0, 0, 1, 1], [], []>} : vector<32x16xbf16>, vector<16x264xbf16>, vector<32x264xf32> -> vector<32x264xf32>
    %77 = arith.addf %70, %76 : vector<32x264xf32>
    %c2_52 = arith.constant 2 : index
    %c16_53 = arith.constant 16 : index
    %c0_54 = arith.constant 0 : index
    %78 = vector.load %arg2[%c2_52, %c16_53, %c0_54] : memref<6x72x128xf32, #tpu.memory_space<vmem>>, vector<1x32x16xf32>
    %79 = vector.shape_cast %78 : vector<1x32x16xf32> to vector<32x16xf32>
    %80 = arith.truncf %79 : vector<32x16xf32> to vector<32x16xbf16>
    %c0_55 = arith.constant 0 : index
    %c2_56 = arith.constant 2 : index
    %81 = vector.load %arg4[%c0_55, %c2_56] : memref<32x268xf32, #tpu.memory_space<vmem>>, vector<16x264xf32>
    %82 = arith.truncf %81 : vector<16x264xf32> to vector<16x264xbf16>
    %cst_57 = arith.constant dense<0.000000e+00> : vector<32x264xf32>
    %83 = tpu.matmul %80, %82, %cst_57 {dimension_numbers = #tpu.dot_dimension_numbers<[1], [0], [0], [1], [0, 0, 1, 1], [], []>} : vector<32x16xbf16>, vector<16x264xbf16>, vector<32x264xf32> -> vector<32x264xf32>
    %84 = arith.addf %77, %83 : vector<32x264xf32>
    %c3_58 = arith.constant 3 : index
    %c16_59 = arith.constant 16 : index
    %c0_60 = arith.constant 0 : index
    %85 = vector.load %arg2[%c3_58, %c16_59, %c0_60] : memref<6x72x128xf32, #tpu.memory_space<vmem>>, vector<1x32x16xf32>
    %86 = vector.shape_cast %85 : vector<1x32x16xf32> to vector<32x16xf32>
    %87 = arith.truncf %86 : vector<32x16xf32> to vector<32x16xbf16>
    %c0_61 = arith.constant 0 : index
    %c3_62 = arith.constant 3 : index
    %88 = vector.load %arg4[%c0_61, %c3_62] : memref<32x268xf32, #tpu.memory_space<vmem>>, vector<16x264xf32>
    %89 = arith.truncf %88 : vector<16x264xf32> to vector<16x264xbf16>
    %cst_63 = arith.constant dense<0.000000e+00> : vector<32x264xf32>
    %90 = tpu.matmul %87, %89, %cst_63 {dimension_numbers = #tpu.dot_dimension_numbers<[1], [0], [0], [1], [0, 0, 1, 1], [], []>} : vector<32x16xbf16>, vector<16x264xbf16>, vector<32x264xf32> -> vector<32x264xf32>
    %91 = arith.addf %84, %90 : vector<32x264xf32>
    %c4_64 = arith.constant 4 : index
    %c16_65 = arith.constant 16 : index
    %c0_66 = arith.constant 0 : index
    %92 = vector.load %arg2[%c4_64, %c16_65, %c0_66] : memref<6x72x128xf32, #tpu.memory_space<vmem>>, vector<1x32x16xf32>
    %93 = vector.shape_cast %92 : vector<1x32x16xf32> to vector<32x16xf32>
    %94 = arith.truncf %93 : vector<32x16xf32> to vector<32x16xbf16>
    %c0_67 = arith.constant 0 : index
    %c4_68 = arith.constant 4 : index
    %95 = vector.load %arg4[%c0_67, %c4_68] : memref<32x268xf32, #tpu.memory_space<vmem>>, vector<16x264xf32>
    %96 = arith.truncf %95 : vector<16x264xf32> to vector<16x264xbf16>
    %cst_69 = arith.constant dense<0.000000e+00> : vector<32x264xf32>
    %97 = tpu.matmul %94, %96, %cst_69 {dimension_numbers = #tpu.dot_dimension_numbers<[1], [0], [0], [1], [0, 0, 1, 1], [], []>} : vector<32x16xbf16>, vector<16x264xbf16>, vector<32x264xf32> -> vector<32x264xf32>
    %98 = arith.addf %91, %97 : vector<32x264xf32>
    %c5_70 = arith.constant 5 : index
    %c16_71 = arith.constant 16 : index
    %c0_72 = arith.constant 0 : index
    %99 = vector.load %arg2[%c5_70, %c16_71, %c0_72] : memref<6x72x128xf32, #tpu.memory_space<vmem>>, vector<1x32x1xf32>
    %100 = vector.shape_cast %99 : vector<1x32x1xf32> to vector<32x1xf32>
    %101 = vector.broadcast %100 : vector<32x1xf32> to vector<32x264xf32>
    %102 = arith.addf %98, %101 : vector<32x264xf32>
    %cst_73 = arith.constant 0.000000e+00 : f32
    %103 = vector.broadcast %cst_73 : f32 to vector<32x264xf32>
    %104 = arith.maximumf %102, %103 : vector<32x264xf32>
    %105 = vector.broadcast %21 : vector<1x264xf32> to vector<32x264xf32>
    %106 = arith.mulf %104, %105 : vector<32x264xf32>
    %c0_74 = arith.constant 0 : index
    %c2_75 = arith.constant 2 : index
    %107 = vector.load %arg4[%c0_74, %c2_75] : memref<32x268xf32, #tpu.memory_space<vmem>>, vector<32x264xf32>
    tpu.vector_store %arg4[%c0_74, %c2_75], %106 {strides = array<i32>} : memref<32x268xf32, #tpu.memory_space<vmem>>, vector<32x264xf32>,
    %c0_76 = arith.constant 0 : index
    %c48 = arith.constant 48 : index
    %c0_77 = arith.constant 0 : index
    %108 = vector.load %arg2[%c0_76, %c48, %c0_77] : memref<6x72x128xf32, #tpu.memory_space<vmem>>, vector<1x16x32xf32>
    %109 = vector.shape_cast %108 : vector<1x16x32xf32> to vector<16x32xf32>
    %110 = arith.truncf %109 : vector<16x32xf32> to vector<16x32xbf16>
    %c0_78 = arith.constant 0 : index
    %c0_79 = arith.constant 0 : index
    %111 = vector.load %arg4[%c0_78, %c0_79] : memref<32x268xf32, #tpu.memory_space<vmem>>, vector<32x264xf32>
    %112 = arith.truncf %111 : vector<32x264xf32> to vector<32x264xbf16>
    %cst_80 = arith.constant dense<0.000000e+00> : vector<16x264xf32>
    %113 = tpu.matmul %110, %112, %cst_80 {dimension_numbers = #tpu.dot_dimension_numbers<[1], [0], [0], [1], [0, 0, 1, 1], [], []>} : vector<16x32xbf16>, vector<32x264xbf16>, vector<16x264xf32> -> vector<16x264xf32>
    %c1_81 = arith.constant 1 : index
    %c48_82 = arith.constant 48 : index
    %c0_83 = arith.constant 0 : index
    %114 = vector.load %arg2[%c1_81, %c48_82, %c0_83] : memref<6x72x128xf32, #tpu.memory_space<vmem>>, vector<1x16x32xf32>
    %115 = vector.shape_cast %114 : vector<1x16x32xf32> to vector<16x32xf32>
    %116 = arith.truncf %115 : vector<16x32xf32> to vector<16x32xbf16>
    %c0_84 = arith.constant 0 : index
    %c1_85 = arith.constant 1 : index
    %117 = vector.load %arg4[%c0_84, %c1_85] : memref<32x268xf32, #tpu.memory_space<vmem>>, vector<32x264xf32>
    %118 = arith.truncf %117 : vector<32x264xf32> to vector<32x264xbf16>
    %cst_86 = arith.constant dense<0.000000e+00> : vector<16x264xf32>
    %119 = tpu.matmul %116, %118, %cst_86 {dimension_numbers = #tpu.dot_dimension_numbers<[1], [0], [0], [1], [0, 0, 1, 1], [], []>} : vector<16x32xbf16>, vector<32x264xbf16>, vector<16x264xf32> -> vector<16x264xf32>
    %120 = arith.addf %113, %119 : vector<16x264xf32>
    %c2_87 = arith.constant 2 : index
    %c48_88 = arith.constant 48 : index
    %c0_89 = arith.constant 0 : index
    %121 = vector.load %arg2[%c2_87, %c48_88, %c0_89] : memref<6x72x128xf32, #tpu.memory_space<vmem>>, vector<1x16x32xf32>
    %122 = vector.shape_cast %121 : vector<1x16x32xf32> to vector<16x32xf32>
    %123 = arith.truncf %122 : vector<16x32xf32> to vector<16x32xbf16>
    %c0_90 = arith.constant 0 : index
    %c2_91 = arith.constant 2 : index
    %124 = vector.load %arg4[%c0_90, %c2_91] : memref<32x268xf32, #tpu.memory_space<vmem>>, vector<32x264xf32>
    %125 = arith.truncf %124 : vector<32x264xf32> to vector<32x264xbf16>
    %cst_92 = arith.constant dense<0.000000e+00> : vector<16x264xf32>
    %126 = tpu.matmul %123, %125, %cst_92 {dimension_numbers = #tpu.dot_dimension_numbers<[1], [0], [0], [1], [0, 0, 1, 1], [], []>} : vector<16x32xbf16>, vector<32x264xbf16>, vector<16x264xf32> -> vector<16x264xf32>
    %127 = arith.addf %120, %126 : vector<16x264xf32>
    %c3_93 = arith.constant 3 : index
    %c48_94 = arith.constant 48 : index
    %c0_95 = arith.constant 0 : index
    %128 = vector.load %arg2[%c3_93, %c48_94, %c0_95] : memref<6x72x128xf32, #tpu.memory_space<vmem>>, vector<1x16x32xf32>
    %129 = vector.shape_cast %128 : vector<1x16x32xf32> to vector<16x32xf32>
    %130 = arith.truncf %129 : vector<16x32xf32> to vector<16x32xbf16>
    %c0_96 = arith.constant 0 : index
    %c3_97 = arith.constant 3 : index
    %131 = vector.load %arg4[%c0_96, %c3_97] : memref<32x268xf32, #tpu.memory_space<vmem>>, vector<32x264xf32>
    %132 = arith.truncf %131 : vector<32x264xf32> to vector<32x264xbf16>
    %cst_98 = arith.constant dense<0.000000e+00> : vector<16x264xf32>
    %133 = tpu.matmul %130, %132, %cst_98 {dimension_numbers = #tpu.dot_dimension_numbers<[1], [0], [0], [1], [0, 0, 1, 1], [], []>} : vector<16x32xbf16>, vector<32x264xbf16>, vector<16x264xf32> -> vector<16x264xf32>
    %134 = arith.addf %127, %133 : vector<16x264xf32>
    %c4_99 = arith.constant 4 : index
    %c48_100 = arith.constant 48 : index
    %c0_101 = arith.constant 0 : index
    %135 = vector.load %arg2[%c4_99, %c48_100, %c0_101] : memref<6x72x128xf32, #tpu.memory_space<vmem>>, vector<1x16x32xf32>
    %136 = vector.shape_cast %135 : vector<1x16x32xf32> to vector<16x32xf32>
    %137 = arith.truncf %136 : vector<16x32xf32> to vector<16x32xbf16>
    %c0_102 = arith.constant 0 : index
    %c4_103 = arith.constant 4 : index
    %138 = vector.load %arg4[%c0_102, %c4_103] : memref<32x268xf32, #tpu.memory_space<vmem>>, vector<32x264xf32>
    %139 = arith.truncf %138 : vector<32x264xf32> to vector<32x264xbf16>
    %cst_104 = arith.constant dense<0.000000e+00> : vector<16x264xf32>
    %140 = tpu.matmul %137, %139, %cst_104 {dimension_numbers = #tpu.dot_dimension_numbers<[1], [0], [0], [1], [0, 0, 1, 1], [], []>} : vector<16x32xbf16>, vector<32x264xbf16>, vector<16x264xf32> -> vector<16x264xf32>
    %141 = arith.addf %134, %140 : vector<16x264xf32>
    %c5_105 = arith.constant 5 : index
    %c48_106 = arith.constant 48 : index
    %c0_107 = arith.constant 0 : index
    %142 = vector.load %arg2[%c5_105, %c48_106, %c0_107] : memref<6x72x128xf32, #tpu.memory_space<vmem>>, vector<1x16x1xf32>
    %143 = vector.shape_cast %142 : vector<1x16x1xf32> to vector<16x1xf32>
    %144 = vector.broadcast %143 : vector<16x1xf32> to vector<16x264xf32>
    %145 = arith.addf %141, %144 : vector<16x264xf32>
    %cst_108 = arith.constant 0.000000e+00 : f32
    %146 = vector.broadcast %cst_108 : f32 to vector<16x264xf32>
    %147 = arith.maximumf %145, %146 : vector<16x264xf32>
    %148 = vector.broadcast %21 : vector<1x264xf32> to vector<16x264xf32>
    %149 = arith.mulf %147, %148 : vector<16x264xf32>
    %c0_109 = arith.constant 0 : index
    %c2_110 = arith.constant 2 : index
    %150 = vector.load %arg4[%c0_109, %c2_110] : memref<32x268xf32, #tpu.memory_space<vmem>>, vector<16x264xf32>
    tpu.vector_store %arg4[%c0_109, %c2_110], %149 {strides = array<i32>} : memref<32x268xf32, #tpu.memory_space<vmem>>, vector<16x264xf32>,
    %c0_111 = arith.constant 0 : index
    %c64 = arith.constant 64 : index
    %c0_112 = arith.constant 0 : index
    %151 = vector.load %arg2[%c0_111, %c64, %c0_112] : memref<6x72x128xf32, #tpu.memory_space<vmem>>, vector<1x8x16xf32>
    %152 = vector.shape_cast %151 : vector<1x8x16xf32> to vector<8x16xf32>
    %153 = arith.truncf %152 : vector<8x16xf32> to vector<8x16xbf16>
    %c0_113 = arith.constant 0 : index
    %c0_114 = arith.constant 0 : index
    %154 = vector.load %arg4[%c0_113, %c0_114] : memref<32x268xf32, #tpu.memory_space<vmem>>, vector<16x264xf32>
    %155 = arith.truncf %154 : vector<16x264xf32> to vector<16x264xbf16>
    %cst_115 = arith.constant dense<0.000000e+00> : vector<8x264xf32>
    %156 = tpu.matmul %153, %155, %cst_115 {dimension_numbers = #tpu.dot_dimension_numbers<[1], [0], [0], [1], [0, 0, 1, 1], [], []>} : vector<8x16xbf16>, vector<16x264xbf16>, vector<8x264xf32> -> vector<8x264xf32>
    %c1_116 = arith.constant 1 : index
    %c64_117 = arith.constant 64 : index
    %c0_118 = arith.constant 0 : index
    %157 = vector.load %arg2[%c1_116, %c64_117, %c0_118] : memref<6x72x128xf32, #tpu.memory_space<vmem>>, vector<1x8x16xf32>
    %158 = vector.shape_cast %157 : vector<1x8x16xf32> to vector<8x16xf32>
    %159 = arith.truncf %158 : vector<8x16xf32> to vector<8x16xbf16>
    %c0_119 = arith.constant 0 : index
    %c1_120 = arith.constant 1 : index
    %160 = vector.load %arg4[%c0_119, %c1_120] : memref<32x268xf32, #tpu.memory_space<vmem>>, vector<16x264xf32>
    %161 = arith.truncf %160 : vector<16x264xf32> to vector<16x264xbf16>
    %cst_121 = arith.constant dense<0.000000e+00> : vector<8x264xf32>
    %162 = tpu.matmul %159, %161, %cst_121 {dimension_numbers = #tpu.dot_dimension_numbers<[1], [0], [0], [1], [0, 0, 1, 1], [], []>} : vector<8x16xbf16>, vector<16x264xbf16>, vector<8x264xf32> -> vector<8x264xf32>
    %163 = arith.addf %156, %162 : vector<8x264xf32>
    %c2_122 = arith.constant 2 : index
    %c64_123 = arith.constant 64 : index
    %c0_124 = arith.constant 0 : index
    %164 = vector.load %arg2[%c2_122, %c64_123, %c0_124] : memref<6x72x128xf32, #tpu.memory_space<vmem>>, vector<1x8x16xf32>
    %165 = vector.shape_cast %164 : vector<1x8x16xf32> to vector<8x16xf32>
    %166 = arith.truncf %165 : vector<8x16xf32> to vector<8x16xbf16>
    %c0_125 = arith.constant 0 : index
    %c2_126 = arith.constant 2 : index
    %167 = vector.load %arg4[%c0_125, %c2_126] : memref<32x268xf32, #tpu.memory_space<vmem>>, vector<16x264xf32>
    %168 = arith.truncf %167 : vector<16x264xf32> to vector<16x264xbf16>
    %cst_127 = arith.constant dense<0.000000e+00> : vector<8x264xf32>
    %169 = tpu.matmul %166, %168, %cst_127 {dimension_numbers = #tpu.dot_dimension_numbers<[1], [0], [0], [1], [0, 0, 1, 1], [], []>} : vector<8x16xbf16>, vector<16x264xbf16>, vector<8x264xf32> -> vector<8x264xf32>
    %170 = arith.addf %163, %169 : vector<8x264xf32>
    %c3_128 = arith.constant 3 : index
    %c64_129 = arith.constant 64 : index
    %c0_130 = arith.constant 0 : index
    %171 = vector.load %arg2[%c3_128, %c64_129, %c0_130] : memref<6x72x128xf32, #tpu.memory_space<vmem>>, vector<1x8x16xf32>
    %172 = vector.shape_cast %171 : vector<1x8x16xf32> to vector<8x16xf32>
    %173 = arith.truncf %172 : vector<8x16xf32> to vector<8x16xbf16>
    %c0_131 = arith.constant 0 : index
    %c3_132 = arith.constant 3 : index
    %174 = vector.load %arg4[%c0_131, %c3_132] : memref<32x268xf32, #tpu.memory_space<vmem>>, vector<16x264xf32>
    %175 = arith.truncf %174 : vector<16x264xf32> to vector<16x264xbf16>
    %cst_133 = arith.constant dense<0.000000e+00> : vector<8x264xf32>
    %176 = tpu.matmul %173, %175, %cst_133 {dimension_numbers = #tpu.dot_dimension_numbers<[1], [0], [0], [1], [0, 0, 1, 1], [], []>} : vector<8x16xbf16>, vector<16x264xbf16>, vector<8x264xf32> -> vector<8x264xf32>
    %177 = arith.addf %170, %176 : vector<8x264xf32>
    %c4_134 = arith.constant 4 : index
    %c64_135 = arith.constant 64 : index
    %c0_136 = arith.constant 0 : index
    %178 = vector.load %arg2[%c4_134, %c64_135, %c0_136] : memref<6x72x128xf32, #tpu.memory_space<vmem>>, vector<1x8x16xf32>
    %179 = vector.shape_cast %178 : vector<1x8x16xf32> to vector<8x16xf32>
    %180 = arith.truncf %179 : vector<8x16xf32> to vector<8x16xbf16>
    %c0_137 = arith.constant 0 : index
    %c4_138 = arith.constant 4 : index
    %181 = vector.load %arg4[%c0_137, %c4_138] : memref<32x268xf32, #tpu.memory_space<vmem>>, vector<16x264xf32>
    %182 = arith.truncf %181 : vector<16x264xf32> to vector<16x264xbf16>
    %cst_139 = arith.constant dense<0.000000e+00> : vector<8x264xf32>
    %183 = tpu.matmul %180, %182, %cst_139 {dimension_numbers = #tpu.dot_dimension_numbers<[1], [0], [0], [1], [0, 0, 1, 1], [], []>} : vector<8x16xbf16>, vector<16x264xbf16>, vector<8x264xf32> -> vector<8x264xf32>
    %184 = arith.addf %177, %183 : vector<8x264xf32>
    %c5_140 = arith.constant 5 : index
    %c64_141 = arith.constant 64 : index
    %c0_142 = arith.constant 0 : index
    %185 = vector.load %arg2[%c5_140, %c64_141, %c0_142] : memref<6x72x128xf32, #tpu.memory_space<vmem>>, vector<1x8x1xf32>
    %186 = vector.shape_cast %185 : vector<1x8x1xf32> to vector<8x1xf32>
    %187 = vector.broadcast %186 : vector<8x1xf32> to vector<8x264xf32>
    %188 = arith.addf %184, %187 : vector<8x264xf32>
    %cst_143 = arith.constant 2.000000e+01 : f32
    %189 = vector.broadcast %cst_143 : f32 to vector<8x264xf32>
    %190 = arith.cmpf ogt, %188, %189 : vector<8x264xf32>
    %cst_144 = arith.constant 2.000000e+01 : f32
    %191 = vector.broadcast %cst_144 : f32 to vector<8x264xf32>
    %192 = arith.minimumf %188, %191 : vector<8x264xf32>
    %193 = math.exp %192 : vector<8x264xf32>
    %194 = math.log1p %193 : vector<8x264xf32>
    %195 = arith.select %190, %188, %194 : vector<8x264xi1>, vector<8x264xf32>
    %196 = tpu.iota {dimensions = array<i32: 0>} : vector<8x264xi32>
    %c1_i32 = arith.constant 1 : i32
    %197 = vector.broadcast %c1_i32 : i32 to vector<8x264xi32>
    %198 = arith.cmpi eq, %196, %197 : vector<8x264xi32>
    %199 = arith.select %198, %195, %188 : vector<8x264xi1>, vector<8x264xf32>
    %200 = vector.extract_strided_slice %199 {offsets = [0, 2], sizes = [8, 128], strides = [1, 1]} : vector<8x264xf32> to vector<8x128xf32>
    %c0_145 = arith.constant 0 : index
    %c0_146 = arith.constant 0 : index
    %c0_147 = arith.constant 0 : index
    %201 = vector.load %arg3[%c0_145, %c0_146, %c0_147] : memref<2x8x128xf32, #tpu.memory_space<vmem>>, vector<1x8x128xf32>
    %202 = vector.shape_cast %201 : vector<1x8x128xf32> to vector<8x128xf32>
    %203 = vector.shape_cast %200 : vector<8x128xf32> to vector<1x8x128xf32>
    tpu.vector_store %arg3[%c0_145, %c0_146, %c0_147], %203 {strides = array<i32>} : memref<2x8x128xf32, #tpu.memory_space<vmem>>, vector<1x8x128xf32>,
    %204 = vector.extract_strided_slice %199 {offsets = [0, 134], sizes = [8, 128], strides = [1, 1]} : vector<8x264xf32> to vector<8x128xf32>
    %c1_148 = arith.constant 1 : index
    %c0_149 = arith.constant 0 : index
    %c0_150 = arith.constant 0 : index
    %205 = vector.load %arg3[%c1_148, %c0_149, %c0_150] : memref<2x8x128xf32, #tpu.memory_space<vmem>>, vector<1x8x128xf32>
    %206 = vector.shape_cast %205 : vector<1x8x128xf32> to vector<8x128xf32>
    %207 = vector.shape_cast %204 : vector<8x128xf32> to vector<1x8x128xf32>
    tpu.vector_store %arg3[%c1_148, %c0_149, %c0_150], %207 {strides = array<i32>} : memref<2x8x128xf32, #tpu.memory_space<vmem>>, vector<1x8x128xf32>,
    return
  }
  func.func @transform_0(%arg0: i32) -> (i32, i32, i32) {
    %c0_i32 = arith.constant 0 : i32
    %c0_i32_0 = arith.constant 0 : i32
    %c0_i32_1 = arith.constant 0 : i32
    return %arg0, %c0_i32, %c0_i32_0 : i32, i32, i32
  }
  func.func @transform_1(%arg0: i32) -> (i32, i32, i32) {
    %c0_i32 = arith.constant 0 : i32
    %c0_i32_0 = arith.constant 0 : i32
    %c0_i32_1 = arith.constant 0 : i32
    %c0_i32_2 = arith.constant 0 : i32
    return %c0_i32, %c0_i32_0, %c0_i32_1 : i32, i32, i32
  }
  func.func @transform_2(%arg0: i32) -> (i32, i32, i32) {
    %c0_i32 = arith.constant 0 : i32
    %c0_i32_0 = arith.constant 0 : i32
    %c0_i32_1 = arith.constant 0 : i32
    return %arg0, %c0_i32, %c0_i32_0 : i32, i32, i32
  }
}

</mosaic_0001>

<llo_original>
// kernel: simple_cnn_forward.1
$region0: #{simple_cnn_forward.1}
  #allocation0 [shape = 'u32[]', space=smem, size = 0x4, offset = 0x4, fixed_abs, tag = 'smem constant byte address 0x4 - core index']
  #allocation1 [shape = 'u32[144,128]{1,0:T(1,128)}', space=vmem, size = 0x12000, scoped, tag = 'internal scratch']
  #allocation2 [shape = 'f32[32,268]{1,0:T(8,128)}', space=vmem, size = 0xc000, scoped, tag = 'scratch operand']
  %s0 = inlined_call_operand.hbm [shape: f32[4,4,128], index: 0, kind: input, shape index: {}]
  %s1 = inlined_call_operand.hbm [shape: f32[6,72,128], index: 1, kind: input, shape index: {}]
  %s2 = inlined_call_operand.vmem [shape: f32[4,8,128], index: 2, kind: output, shape index: {}]
  %s3 = sld [smem:[#allocation0]]
  $region49: #{simple_cnn_forward.1} parent=0
    _
  %s5 = ssub.s32 1, %s3
  %s6 = scalar_select 0, %s5, %s3
  $region1: #{simple_cnn_forward.1} parent=0
    #allocation3 [shape = 'u8[8192]{0}', space=vmem, size = 0x2000, scoped, tag = 'input window, operand 0']
    #allocation4 [shape = 's32[2]{0}', space=sflag, size = 0x8, scoped, tag = 'scoped memory for simple_cnn_forward.1']
    #allocation5 [shape = 'u8[221184]{0}', space=vmem, size = 0x36000, scoped, tag = 'input window, operand 1, single buffered']
    #allocation6 [shape = 's32[1]{0}', space=sflag, size = 0x4, scoped, tag = 'scoped memory for simple_cnn_forward.1']
    %7 = vsyncpa [#allocation4], 0
    %s8 = scalar_lea.sflag [#allocation4], 1
    %9 = vsyncpa %s8, 0
    %10 = vsyncpa [#allocation6], 0
    loop: start=0, step=1, limit=4
    $region2: #{simple_cnn_forward.1} parent=1 // loop_pre_header
      _
    $region3: #{simple_cnn_forward.1} parent=1 // loop_header
      %s12 = sphi 0, %s16
      %p13 = scmp.ge.s32.totalorder %s12, 4
      %s22 = sphi 0, %s24
      %s25 = sphi 0, %s22
      %s26 = sphi 0, %s25
      %s42 = sphi 0, %s26
      %s46 = sphi 0, %s46
      %s48 = sphi 0, %s46
      %s49 = sphi 0, %s48
      %s63 = sphi 0, %s49
      %s69 = sphi 0, %s71
      %s72 = sphi 0, %s69
      %s73 = sphi 0, %s72
      %s89 = sphi 0, %s73
    $region4: #{simple_cnn_forward.1} parent=1 // loop_header_branch
      %15 = sbr.rel (%p13) target = $region8
    $region5: #{simple_cnn_forward.1} parent=1 // loop_body
      %s17 = ssub.s32 %s12, 1
      %s18 = ssub.s32 %s12, 2
      %s19 = sadd.s32 %s12, 1
      %s20 = ssub.s32 %s12, %s19
      %p21 = scmp.eq.s32.totalorder %s20, 0
      %s23 = sadd.s32 %s22, 1
      %s24 = scalar_select %p21, %s22, %s23
      %p27 = pneg %p21
      %p28 = scmp.eq.s32.totalorder %s12, 1
      %p29 = por %p27, %p28
      %p30 = scmp.ne.s32.totalorder %s22, %s25
      %p31 = scmp.eq.s32.totalorder %s12, 0
      %p32 = por %p30, %p31
      %p33 = scmp.ne.s32.totalorder %s22, %s25
      %p34 = scmp.eq.s32.totalorder %s17, 1
      %p35 = por %p33, %p34
      %p36 = scmp.ne.s32.totalorder %s25, %s26
      %p37 = scmp.eq.s32.totalorder %s17, 0
      %p38 = por %p36, %p37
      %p39 = scmp.ne.s32.totalorder %s25, %s26
      %p40 = scmp.eq.s32.totalorder %s18, 1
      %p41 = por %p39, %p40
      %p43 = scmp.ne.s32.totalorder %s26, %s42
      %p44 = scmp.eq.s32.totalorder %s18, 0
      %p45 = por %p43, %p44
      %s47 = sadd.s32 %s46, 1
      %p50 = scmp.eq.s32.totalorder %s12, 1
      %p51 = scmp.ne.s32.totalorder %s46, %s48
      %p52 = scmp.eq.s32.totalorder %s12, 0
      %p53 = por %p51, %p52
      %p54 = scmp.ne.s32.totalorder %s46, %s48
      %p55 = scmp.eq.s32.totalorder %s17, 1
      %p56 = por %p54, %p55
      %p57 = scmp.ne.s32.totalorder %s48, %s49
      %p58 = scmp.eq.s32.totalorder %s17, 0
      %p59 = por %p57, %p58
      %p60 = scmp.ne.s32.totalorder %s48, %s49
      %p61 = scmp.eq.s32.totalorder %s18, 1
      %p62 = por %p60, %p61
      %p64 = scmp.ne.s32.totalorder %s49, %s63
      %p65 = scmp.eq.s32.totalorder %s18, 0
      %p66 = por %p64, %p65
      %s67 = ssub.s32 %s12, %s19
      %p68 = scmp.eq.s32.totalorder %s67, 0
      %s70 = sadd.s32 %s69, 1
      %s71 = scalar_select %p68, %s69, %s70
      %p74 = pneg %p68
      %p75 = scmp.eq.s32.totalorder %s12, 1
      %p76 = por %p74, %p75
      %p77 = scmp.ne.s32.totalorder %s69, %s72
      %p78 = scmp.eq.s32.totalorder %s12, 0
      %p79 = por %p77, %p78
      %p80 = scmp.ne.s32.totalorder %s69, %s72
      %p81 = scmp.eq.s32.totalorder %s17, 1
      %p82 = por %p80, %p81
      %p83 = scmp.ne.s32.totalorder %s72, %s73
      %p84 = scmp.eq.s32.totalorder %s17, 0
      %p85 = por %p83, %p84
      %p86 = scmp.ne.s32.totalorder %s72, %s73
      %p87 = scmp.eq.s32.totalorder %s18, 1
      %p88 = por %p86, %p87
      %p90 = scmp.ne.s32.totalorder %s73, %s89
      %p91 = scmp.eq.s32.totalorder %s18, 0
      %p92 = por %p90, %p91
      %p93 = scmp.le.s32.totalorder 1, %s12
      %p94 = scmp.lt.s32.totalorder %s12, 3
      %p95 = pnand %p93, %p94
      %p96 = pneg %p95
      // Predicated region
      $region9: #{simple_cnn_forward.1} parent=5 // pred_check
        _
      $region10: #{simple_cnn_forward.1} parent=5 // pred_check_branch
        %98 = sbr.rel (%p95) target = $region12
      $region11: #{simple_cnn_forward.1} parent=5 // pred_region
        %s99 = ssub.s32 %s12, 1
        // Predicated region
        $region13: #{simple_cnn_forward.1} parent=11 // pred_check
          %p100 = pneg %p59
        $region14: #{simple_cnn_forward.1} parent=11 // pred_check_branch
          %102 = sbr.rel (%p100) target = $region16
        $region15: #{simple_cnn_forward.1} parent=11 // pred_region
          %s104 = ssub.s32 6912, 6912
          %105 = vsyncadd [#allocation6], %s104
          %s106 = sshll.u32 [#allocation5], 4
          %s107 = int_to_ptr.vmem [resolvable:$true] %s106
          %112 = dma.hbm_to_vmem [thread:$0]  %s1, 6912, %s107, [#allocation6], 128, 128, 8
        $region16: #{simple_cnn_forward.1} parent=11 // pred_fallthru
          _
      $region12: #{simple_cnn_forward.1} parent=5 // pred_fallthru
        _
      %p113 = scmp.lt.s32.totalorder %s12, 2
      // Predicated region
      $region17: #{simple_cnn_forward.1} parent=5 // pred_check
        %p114 = pneg %p113
      $region18: #{simple_cnn_forward.1} parent=5 // pred_check_branch
        %116 = sbr.rel (%p114) target = $region20
      $region19: #{simple_cnn_forward.1} parent=5 // pred_region
        // Predicated region
        $region21: #{simple_cnn_forward.1} parent=19 // pred_check
          %p117 = pneg %p32
        $region22: #{simple_cnn_forward.1} parent=19 // pred_check_branch
          %119 = sbr.rel (%p117) target = $region24
        $region23: #{simple_cnn_forward.1} parent=19 // pred_region
          %s120 = sand.u32 %s22, 1
          %s121 = scalar_lea.sflag [#allocation4], %s120
          %s122 = sand.u32 %s22, 1
          %s123 = smul.addr %s122, 8
          %s124 = scalar_lea.vmem [#allocation3], %s123
          %s125 = smul.u32 2, %s12
          %s127 = ssub.s32 128, 128
          %128 = vsyncadd %s121, %s127
          %s129 = smul.addr %s125, 64
          %s130 = scalar_lea.hbm %s0, %s129
          %s131 = sshll.u32 %s124, 4
          %s132 = int_to_ptr.vmem [resolvable:$true] %s131
          %137 = dma.hbm_to_vmem [thread:$0]  %s130, 128, %s132, %s121, 64, 64, 4
        $region24: #{simple_cnn_forward.1} parent=19 // pred_fallthru
          _
      $region20: #{simple_cnn_forward.1} parent=5 // pred_fallthru
        _
      %p138 = scmp.le.s32.totalorder 1, %s12
      %p139 = scmp.lt.s32.totalorder %s12, 3
      %p140 = pnand %p138, %p139
      %p141 = pneg %p140
      // Predicated region
      $region25: #{simple_cnn_forward.1} parent=5 // pred_check
        _
      $region26: #{simple_cnn_forward.1} parent=5 // pred_check_branch
        %143 = sbr.rel (%p140) target = $region28
      $region27: #{simple_cnn_forward.1} parent=5 // pred_region
        %s144 = ssub.s32 %s12, 1
        %s145 = sand.u32 %s25, 1
        %s146 = scalar_lea.sflag [#allocation4], %s145
        %s147 = sand.u32 %s25, 1
        %s148 = smul.addr %s147, 8
        %s149 = scalar_lea.vmem [#allocation3], %s148
        // Predicated region
        $region29: #{simple_cnn_forward.1} parent=27 // pred_check
          %p150 = pneg %p38
        $region30: #{simple_cnn_forward.1} parent=27 // pred_check_branch
          %152 = sbr.rel (%p150) target = $region32
        $region31: #{simple_cnn_forward.1} parent=27 // pred_region
          %153 = dma.done %s146, 128
        $region32: #{simple_cnn_forward.1} parent=27 // pred_fallthru
          _
        // Predicated region
        $region33: #{simple_cnn_forward.1} parent=27 // pred_check
          %p154 = pneg %p59
        $region34: #{simple_cnn_forward.1} parent=27 // pred_check_branch
          %156 = sbr.rel (%p154) target = $region36
        $region35: #{simple_cnn_forward.1} parent=27 // pred_region
          %157 = dma.done [#allocation6], 6912
        $region36: #{simple_cnn_forward.1} parent=27 // pred_fallthru
          _
        %s158 = sand.u32 %s25, 1
        %s159 = scalar_lea.sflag [#allocation4], %s158
        %s160 = sand.u32 %s25, 1
        %s161 = smul.addr %s160, 8
        %s162 = scalar_lea.vmem [#allocation3], %s161
        %p163 = pneg %p38
        %p164 = pneg %p35
        %p165 = pneg %p59
        %p166 = pneg %p56
        %p167 = pneg %p85
        %p168 = pneg %p82
        %s169 = smul.u32 2, %s17
        %p170 = scmp.lt.s32.totalorder %s169, 3
        %s171 = scalar_select %p170, %s169, 3
        %s172 = smul.addr %s171, 8
        %s173 = scalar_lea.vmem %s2, %s172
        %s174 = smul.u32 2, %s17
        %s175 = smul.u32 2, %s17
        %p176 = scmp.lt.s32.totalorder %s175, 3
        %s177 = scalar_select %p176, %s175, 3
        %s178 = smul.addr %s177, 8
        %s179 = scalar_lea.vmem %s2, %s178
        %s180 = smul.u32 2, %s17
        %182 = vst [vmem:[#allocation2] sm:$0xff] 0.0
        %183 = vst [vmem:[#allocation2 + $0x8] sm:$0xff] 0.0
        %vm184 = vcmask 97280
        %185 = vst.msk [vmem:[#allocation2 + $0x10] sm:$0xff] %vm184, 0.0
        %186 = vst [vmem:[#allocation2 + $0x18] sm:$0xff] 0.0
        %187 = vst [vmem:[#allocation2 + $0x20] sm:$0xff] 0.0
        %188 = vst.msk [vmem:[#allocation2 + $0x28] sm:$0xff] %vm184, 0.0
        %189 = vst [vmem:[#allocation2 + $0x30] sm:$0xff] 0.0
        %190 = vst [vmem:[#allocation2 + $0x38] sm:$0xff] 0.0
        %191 = vst.msk [vmem:[#allocation2 + $0x40] sm:$0xff] %vm184, 0.0
        %192 = vst [vmem:[#allocation2 + $0x48] sm:$0xff] 0.0
        %193 = vst [vmem:[#allocation2 + $0x50] sm:$0xff] 0.0
        %194 = vst.msk [vmem:[#allocation2 + $0x58] sm:$0xff] %vm184, 0.0
        %v195 = vld [vmem:[%s149] sm:$0xf]
        %197 = vrot.lane.b32.xlu0 %v195, 4
        %v198 = vpop.permute.xlu0 %197
        %vm200 = vcmask 1043488
        %201 = vst.msk [vmem:[#allocation2] sm:$0xf] %vm200, %v198
        %vm202 = vcmask 27648
        %203 = vst.msk [vmem:[#allocation2 + $0x8] sm:$0xf] %vm202, %v198
        %s204 = scalar_lea.vmem %s149, 4 [#allocation3]
        %v205 = vld [vmem:[%s204] sm:$0xf]
        %207 = vrot.lane.b32.xlu0 %v205, 8
        %v208 = vpop.permute.xlu0 %207
        %vm210 = vcmask 1043520
        %211 = vst.msk [vmem:[#allocation2 + $0x8] sm:$0xf] %vm210, %v208
        %vm212 = vcmask 60416
        %213 = vst.msk [vmem:[#allocation2 + $0x10] sm:$0xf] %vm212, %v208
        %v214 = vlaneseq
        %v215 = vand.u32 %v214, 127
        %v216 = vadd.s32 %v215, 128
        %v217 = vadd.s32 %v215, 256
        %vm218 = vcmp.ge.s32.totalorder %v215, 2
        %vm219 = vcmp.ge.s32.totalorder %v216, 2
        %vm220 = vcmp.ge.s32.totalorder %v217, 2
        %vm221 = vcmp.lt.s32.totalorder %v215, 130
        %vm222 = vcmp.lt.s32.totalorder %v216, 130
        %vm223 = vcmp.lt.s32.totalorder %v217, 130
        %vm224 = vmand %vm218, %vm221
        %vm225 = vmand %vm219, %vm222
        %vm226 = vmand %vm220, %vm223
        %vm227 = vcmp.ge.s32.totalorder %v215, 134
        %vm228 = vcmp.ge.s32.totalorder %v216, 134
        %vm229 = vcmp.ge.s32.totalorder %v217, 134
        %vm230 = vcmp.lt.s32.totalorder %v215, 262
        %vm231 = vcmp.lt.s32.totalorder %v216, 262
        %vm232 = vcmp.lt.s32.totalorder %v217, 262
        %vm233 = vmand %vm227, %vm230
        %vm234 = vmand %vm228, %vm231
        %vm235 = vmand %vm229, %vm232
        %vm236 = vmor %vm224, %vm233
        %vm237 = vmor %vm225, %vm234
        %vm238 = vmor %vm226, %vm235
        %v239 = vsel %vm236, 1, 0
        %v240 = vsel %vm237, 1, 0
        %v241 = vsel %vm238, 1, 0
        %v242 = vcvt.s32.f32 %v239
        %v243 = vcvt.s32.f32 %v240
        %v244 = vcvt.s32.f32 %v241
        %v245 = vld [vmem:[#allocation5] sm:$0xff]
        %v246 = vld [vmem:[#allocation5 + $0x8] sm:$0xff]
        %v247 = vpack.c.bf16 %v246, %v245
        %v248 = vld [vmem:[#allocation2] sm:$0xff]
        %v249 = vld [vmem:[#allocation2 + $0x8] sm:$0xff]
        %v250 = vld [vmem:[#allocation2 + $0x10] sm:$0xff]
        %v251 = vpack.c.bf16 %v248, %v248
        %v252 = vpack.c.bf16 %v249, %v249
        %v253 = vpack.c.bf16 %v250, %v250
        %s254 = scalar_lea.vmem [#allocation5], 72
        %v255 = vld [vmem:[%s254] sm:$0xff]
        %v256 = vld [vmem:[%s254 + $0x8] sm:$0xff]
        %v257 = vpack.c.bf16 %v256, %v255
        %261 = vrot.lane.b32.xlu0 %v251, 127
        %v262 = vpop.permute.xlu0 %261
        %263 = vrot.lane.b32.xlu0 %v252, 127
        %v264 = vpop.permute.xlu0 %263
        %265 = vrot.lane.b32.xlu0 %v253, 127
        %v266 = vpop.permute.xlu0 %265
        %vm267 = vcmask 1039360
        %v268 = vsel %vm267, %v262, %v264
        %v269 = vsel %vm267, %v264, %v266
        %vm270 = vcmask 64512
        %v272 = vsel %vm270, %v257, 0
        %vm274 = vcmask 1043456
        %v276 = vsel %vm274, %v268, 0
        %v279 = vsel %vm274, %v269, 0
        %v282 = vsel %vm274, %v266, 0
        %284 = vmatprep.subr.bf16.mxu0 %v279
        %285 = vmatpush1.bf16.msra.mxu0 %v276
        %286 = vmatprep.subr.bf16.mxu0 0
        %287 = vmatpush1.bf16.msra.mxu0 0
        %288 = vmatprep.subr.bf16.mxu0 0
        %289 = vmatpush1.bf16.msra.mxu0 0
        %290 = vmatprep.subr.bf16.mxu0 0
        %291 = vmatpush1.bf16.msra.mxu0 0
        %292 = vmatprep.subr.bf16.mxu0 0
        %293 = vmatpush1.bf16.msra.mxu0 0
        %294 = vmatprep.subr.bf16.mxu0 0
        %295 = vmatpush1.bf16.msra.mxu0 0
        %296 = vmatprep.subr.bf16.mxu0 0
        %297 = vmatpush1.bf16.msra.mxu0 0
        %298 = vmatprep.subr.bf16.mxu0 0
        %299 = vmatpush1.bf16.msra.mxu0 0
        %300 = vmatprep.subr.bf16.mxu0 0
        %301 = vmatpush1.bf16.msra.mxu0 0
        %302 = vmatprep.subr.bf16.mxu0 0
        %303 = vmatpush1.bf16.msra.mxu0 0
        %304 = vmatprep.subr.bf16.mxu0 0
        %305 = vmatpush1.bf16.msra.mxu0 0
        %306 = vmatprep.subr.bf16.mxu0 0
        %307 = vmatpush1.bf16.msra.mxu0 0
        %308 = vmatprep.subr.bf16.mxu0 0
        %309 = vmatpush1.bf16.msra.mxu0 0
        %310 = vmatprep.subr.bf16.mxu0 0
        %311 = vmatpush1.bf16.msra.mxu0 0
        %312 = vmatprep.subr.bf16.mxu0 0
        %313 = vmatpush1.bf16.msra.mxu0 0
        %314 = vmatprep.subr.bf16.mxu0 0
        %315 = vmatpush1.bf16.msra.mxu0 0
        %316 = vmatprep.mubr.bf16.mxu0 0
        %317 = vmatmul.mubr.bf16.gmra.mrb[0].mxu0 %v272
        %v318 = vpop.f32.mrb[0].mxu0
        %v319 = vadd.f32 0.0, %v318
        %v320 = vpop.f32.mrb[0].mxu0
        %v321 = vadd.f32 0.0, %v320
        %v322 = vpop.f32.mrb[0].mxu0
        %v323 = vadd.f32 0.0, %v322
        %v324 = vpop.f32.mrb[0].mxu0
        %v325 = vadd.f32 0.0, %v324
        %326 = vdwg.mxu0
        %327 = vmatprep.subr.bf16.mxu0 0
        %328 = vmatpush1.bf16.msra.mxu0 %v282
        %329 = vmatprep.subr.bf16.mxu0 0
        %330 = vmatpush1.bf16.msra.mxu0 0
        %331 = vmatprep.subr.bf16.mxu0 0
        %332 = vmatpush1.bf16.msra.mxu0 0
        %333 = vmatprep.subr.bf16.mxu0 0
        %334 = vmatpush1.bf16.msra.mxu0 0
        %335 = vmatprep.subr.bf16.mxu0 0
        %336 = vmatpush1.bf16.msra.mxu0 0
        %337 = vmatprep.subr.bf16.mxu0 0
        %338 = vmatpush1.bf16.msra.mxu0 0
        %339 = vmatprep.subr.bf16.mxu0 0
        %340 = vmatpush1.bf16.msra.mxu0 0
        %341 = vmatprep.subr.bf16.mxu0 0
        %342 = vmatpush1.bf16.msra.mxu0 0
        %343 = vmatprep.subr.bf16.mxu0 0
        %344 = vmatpush1.bf16.msra.mxu0 0
        %345 = vmatprep.subr.bf16.mxu0 0
        %346 = vmatpush1.bf16.msra.mxu0 0
        %347 = vmatprep.subr.bf16.mxu0 0
        %348 = vmatpush1.bf16.msra.mxu0 0
        %349 = vmatprep.subr.bf16.mxu0 0
        %350 = vmatpush1.bf16.msra.mxu0 0
        %351 = vmatprep.subr.bf16.mxu0 0
        %352 = vmatpush1.bf16.msra.mxu0 0
        %353 = vmatprep.subr.bf16.mxu0 0
        %354 = vmatpush1.bf16.msra.mxu0 0
        %355 = vmatprep.subr.bf16.mxu0 0
        %356 = vmatpush1.bf16.msra.mxu0 0
        %357 = vmatprep.subr.bf16.mxu0 0
        %358 = vmatpush1.bf16.msra.mxu0 0
        %359 = vmatprep.mubr.bf16.mxu0 0
        %360 = vmatmul.mubr.bf16.gmra.mrb[0].mxu0 %v272
        %v361 = vpop.f32.mrb[0].mxu0
        %v362 = vadd.f32 0.0, %v361
        %v363 = vpop.f32.mrb[0].mxu0
        %v364 = vpop.f32.mrb[0].mxu0
        %v365 = vadd.f32 0.0, %v364
        %v366 = vpop.f32.mrb[0].mxu0
        %367 = vdwg.mxu0
        %v369 = vsel %vm270, %v247, 0
        %v372 = vsel %vm274, %v251, 0
        %v375 = vsel %vm274, %v252, 0
        %v378 = vsel %vm274, %v253, 0
        %380 = vmatprep.subr.bf16.mxu0 %v375
        %381 = vmatpush1.bf16.msra.mxu0 %v372
        %382 = vmatprep.subr.bf16.mxu0 0
        %383 = vmatpush1.bf16.msra.mxu0 0
        %384 = vmatprep.subr.bf16.mxu0 0
        %385 = vmatpush1.bf16.msra.mxu0 0
        %386 = vmatprep.subr.bf16.mxu0 0
        %387 = vmatpush1.bf16.msra.mxu0 0
        %388 = vmatprep.subr.bf16.mxu0 0
        %389 = vmatpush1.bf16.msra.mxu0 0
        %390 = vmatprep.subr.bf16.mxu0 0
        %391 = vmatpush1.bf16.msra.mxu0 0
        %392 = vmatprep.subr.bf16.mxu0 0
        %393 = vmatpush1.bf16.msra.mxu0 0
        %394 = vmatprep.subr.bf16.mxu0 0
        %395 = vmatpush1.bf16.msra.mxu0 0
        %396 = vmatprep.subr.bf16.mxu0 0
        %397 = vmatpush1.bf16.msra.mxu0 0
        %398 = vmatprep.subr.bf16.mxu0 0
        %399 = vmatpush1.bf16.msra.mxu0 0
        %400 = vmatprep.subr.bf16.mxu0 0
        %401 = vmatpush1.bf16.msra.mxu0 0
        %402 = vmatprep.subr.bf16.mxu0 0
        %403 = vmatpush1.bf16.msra.mxu0 0
        %404 = vmatprep.subr.bf16.mxu0 0
        %405 = vmatpush1.bf16.msra.mxu0 0
        %406 = vmatprep.subr.bf16.mxu0 0
        %407 = vmatpush1.bf16.msra.mxu0 0
        %408 = vmatprep.subr.bf16.mxu0 0
        %409 = vmatpush1.bf16.msra.mxu0 0
        %410 = vmatprep.subr.bf16.mxu0 0
        %411 = vmatpush1.bf16.msra.mxu0 0
        %412 = vmatprep.mubr.bf16.mxu0 0
        %413 = vmatmul.mubr.bf16.gmra.mrb[0].mxu0 %v369
        %v414 = vpop.f32.mrb[0].mxu0
        %v415 = vadd.f32 %v319, %v414
        %v416 = vpop.f32.mrb[0].mxu0
        %v417 = vadd.f32 %v321, %v416
        %v418 = vpop.f32.mrb[0].mxu0
        %v419 = vadd.f32 %v323, %v418
        %v420 = vpop.f32.mrb[0].mxu0
        %v421 = vadd.f32 %v325, %v420
        %422 = vdwg.mxu0
        %423 = vmatprep.subr.bf16.mxu0 0
        %424 = vmatpush1.bf16.msra.mxu0 %v378
        %425 = vmatprep.subr.bf16.mxu0 0
        %426 = vmatpush1.bf16.msra.mxu0 0
        %427 = vmatprep.subr.bf16.mxu0 0
        %428 = vmatpush1.bf16.msra.mxu0 0
        %429 = vmatprep.subr.bf16.mxu0 0
        %430 = vmatpush1.bf16.msra.mxu0 0
        %431 = vmatprep.subr.bf16.mxu0 0
        %432 = vmatpush1.bf16.msra.mxu0 0
        %433 = vmatprep.subr.bf16.mxu0 0
        %434 = vmatpush1.bf16.msra.mxu0 0
        %435 = vmatprep.subr.bf16.mxu0 0
        %436 = vmatpush1.bf16.msra.mxu0 0
        %437 = vmatprep.subr.bf16.mxu0 0
        %438 = vmatpush1.bf16.msra.mxu0 0
        %439 = vmatprep.subr.bf16.mxu0 0
        %440 = vmatpush1.bf16.msra.mxu0 0
        %441 = vmatprep.subr.bf16.mxu0 0
        %442 = vmatpush1.bf16.msra.mxu0 0
        %443 = vmatprep.subr.bf16.mxu0 0
        %444 = vmatpush1.bf16.msra.mxu0 0
        %445 = vmatprep.subr.bf16.mxu0 0
        %446 = vmatpush1.bf16.msra.mxu0 0
        %447 = vmatprep.subr.bf16.mxu0 0
        %448 = vmatpush1.bf16.msra.mxu0 0
        %449 = vmatprep.subr.bf16.mxu0 0
        %450 = vmatpush1.bf16.msra.mxu0 0
        %451 = vmatprep.subr.bf16.mxu0 0
        %452 = vmatpush1.bf16.msra.mxu0 0
        %453 = vmatprep.subr.bf16.mxu0 0
        %454 = vmatpush1.bf16.msra.mxu0 0
        %455 = vmatprep.mubr.bf16.mxu0 0
        %456 = vmatmul.mubr.bf16.gmra.mrb[0].mxu0 %v369
        %v457 = vpop.f32.mrb[0].mxu0
        %v458 = vadd.f32 %v362, %v457
        %v459 = vpop.f32.mrb[0].mxu0
        %v460 = vpop.f32.mrb[0].mxu0
        %v461 = vadd.f32 %v365, %v460
        %v462 = vpop.f32.mrb[0].mxu0
        %463 = vdwg.mxu0
        %s464 = scalar_lea.vmem [#allocation5], 144
        %v465 = vld [vmem:[%s464] sm:$0xff]
        %v466 = vld [vmem:[%s464 + $0x8] sm:$0xff]
        %v467 = vpack.c.bf16 %v466, %v465
        %468 = vrot.lane.b32.xlu0 %v251, 126
        %v469 = vpop.permute.xlu0 %468
        %470 = vrot.lane.b32.xlu0 %v252, 126
        %v471 = vpop.permute.xlu0 %470
        %472 = vrot.lane.b32.xlu0 %v253, 126
        %v473 = vpop.permute.xlu0 %472
        %vm474 = vcmask 1031168
        %v475 = vsel %vm474, %v469, %v471
        %v476 = vsel %vm474, %v471, %v473
        %v478 = vsel %vm270, %v467, 0
        %v481 = vsel %vm274, %v475, 0
        %v484 = vsel %vm274, %v476, 0
        %v487 = vsel %vm274, %v473, 0
        %489 = vmatprep.subr.bf16.mxu0 %v484
        %490 = vmatpush1.bf16.msra.mxu0 %v481
        %491 = vmatprep.subr.bf16.mxu0 0
        %492 = vmatpush1.bf16.msra.mxu0 0
        %493 = vmatprep.subr.bf16.mxu0 0
        %494 = vmatpush1.bf16.msra.mxu0 0
        %495 = vmatprep.subr.bf16.mxu0 0
        %496 = vmatpush1.bf16.msra.mxu0 0
        %497 = vmatprep.subr.bf16.mxu0 0
        %498 = vmatpush1.bf16.msra.mxu0 0
        %499 = vmatprep.subr.bf16.mxu0 0
        %500 = vmatpush1.bf16.msra.mxu0 0
        %501 = vmatprep.subr.bf16.mxu0 0
        %502 = vmatpush1.bf16.msra.mxu0 0
        %503 = vmatprep.subr.bf16.mxu0 0
        %504 = vmatpush1.bf16.msra.mxu0 0
        %505 = vmatprep.subr.bf16.mxu0 0
        %506 = vmatpush1.bf16.msra.mxu0 0
        %507 = vmatprep.subr.bf16.mxu0 0
        %508 = vmatpush1.bf16.msra.mxu0 0
        %509 = vmatprep.subr.bf16.mxu0 0
        %510 = vmatpush1.bf16.msra.mxu0 0
        %511 = vmatprep.subr.bf16.mxu0 0
        %512 = vmatpush1.bf16.msra.mxu0 0
        %513 = vmatprep.subr.bf16.mxu0 0
        %514 = vmatpush1.bf16.msra.mxu0 0
        %515 = vmatprep.subr.bf16.mxu0 0
        %516 = vmatpush1.bf16.msra.mxu0 0
        %517 = vmatprep.subr.bf16.mxu0 0
        %518 = vmatpush1.bf16.msra.mxu0 0
        %519 = vmatprep.subr.bf16.mxu0 0
        %520 = vmatpush1.bf16.msra.mxu0 0
        %521 = vmatprep.mubr.bf16.mxu0 0
        %522 = vmatmul.mubr.bf16.gmra.mrb[0].mxu0 %v478
        %v523 = vpop.f32.mrb[0].mxu0
        %v524 = vadd.f32 0.0, %v523
        %v525 = vpop.f32.mrb[0].mxu0
        %v526 = vadd.f32 0.0, %v525
        %v527 = vpop.f32.mrb[0].mxu0
        %v528 = vadd.f32 0.0, %v527
        %v529 = vpop.f32.mrb[0].mxu0
        %v530 = vadd.f32 0.0, %v529
        %531 = vdwg.mxu0
        %532 = vmatprep.subr.bf16.mxu0 0
        %533 = vmatpush1.bf16.msra.mxu0 %v487
        %534 = vmatprep.subr.bf16.mxu0 0
        %535 = vmatpush1.bf16.msra.mxu0 0
        %536 = vmatprep.subr.bf16.mxu0 0
        %537 = vmatpush1.bf16.msra.mxu0 0
        %538 = vmatprep.subr.bf16.mxu0 0
        %539 = vmatpush1.bf16.msra.mxu0 0
        %540 = vmatprep.subr.bf16.mxu0 0
        %541 = vmatpush1.bf16.msra.mxu0 0
        %542 = vmatprep.subr.bf16.mxu0 0
        %543 = vmatpush1.bf16.msra.mxu0 0
        %544 = vmatprep.subr.bf16.mxu0 0
        %545 = vmatpush1.bf16.msra.mxu0 0
        %546 = vmatprep.subr.bf16.mxu0 0
        %547 = vmatpush1.bf16.msra.mxu0 0
        %548 = vmatprep.subr.bf16.mxu0 0
        %549 = vmatpush1.bf16.msra.mxu0 0
        %550 = vmatprep.subr.bf16.mxu0 0
        %551 = vmatpush1.bf16.msra.mxu0 0
        %552 = vmatprep.subr.bf16.mxu0 0
        %553 = vmatpush1.bf16.msra.mxu0 0
        %554 = vmatprep.subr.bf16.mxu0 0
        %555 = vmatpush1.bf16.msra.mxu0 0
        %556 = vmatprep.subr.bf16.mxu0 0
        %557 = vmatpush1.bf16.msra.mxu0 0
        %558 = vmatprep.subr.bf16.mxu0 0
        %559 = vmatpush1.bf16.msra.mxu0 0
        %560 = vmatprep.subr.bf16.mxu0 0
        %561 = vmatpush1.bf16.msra.mxu0 0
        %562 = vmatprep.subr.bf16.mxu0 0
        %563 = vmatpush1.bf16.msra.mxu0 0
        %564 = vmatprep.mubr.bf16.mxu0 0
        %565 = vmatmul.mubr.bf16.gmra.mrb[0].mxu0 %v478
        %v566 = vpop.f32.mrb[0].mxu0
        %v567 = vadd.f32 0.0, %v566
        %v568 = vpop.f32.mrb[0].mxu0
        %v569 = vpop.f32.mrb[0].mxu0
        %v570 = vadd.f32 0.0, %v569
        %v571 = vpop.f32.mrb[0].mxu0
        %572 = vdwg.mxu0
        %v573 = vadd.f32 %v415, %v524
        %v574 = vadd.f32 %v417, %v526
        %v575 = vadd.f32 %v458, %v567
        %v576 = vadd.f32 %v419, %v528
        %v577 = vadd.f32 %v421, %v530
        %v578 = vadd.f32 %v461, %v570
        %s579 = scalar_lea.vmem [#allocation5], 216
        %v580 = vld [vmem:[%s579] sm:$0xff]
        %v581 = vld [vmem:[%s579 + $0x8] sm:$0xff]
        %v582 = vpack.c.bf16 %v581, %v580
        %583 = vrot.lane.b32.xlu0 %v251, 125
        %v584 = vpop.permute.xlu0 %583
        %585 = vrot.lane.b32.xlu0 %v252, 125
        %v586 = vpop.permute.xlu0 %585
        %587 = vrot.lane.b32.xlu0 %v253, 125
        %v588 = vpop.permute.xlu0 %587
        %vm589 = vcmask 1022976
        %v590 = vsel %vm589, %v584, %v586
        %v591 = vsel %vm589, %v586, %v588
        %v593 = vsel %vm270, %v582, 0
        %v596 = vsel %vm274, %v590, 0
        %v599 = vsel %vm274, %v591, 0
        %v602 = vsel %vm274, %v588, 0
        %604 = vmatprep.subr.bf16.mxu0 %v599
        %605 = vmatpush1.bf16.msra.mxu0 %v596
        %606 = vmatprep.subr.bf16.mxu0 0
        %607 = vmatpush1.bf16.msra.mxu0 0
        %608 = vmatprep.subr.bf16.mxu0 0
        %609 = vmatpush1.bf16.msra.mxu0 0
        %610 = vmatprep.subr.bf16.mxu0 0
        %611 = vmatpush1.bf16.msra.mxu0 0
        %612 = vmatprep.subr.bf16.mxu0 0
        %613 = vmatpush1.bf16.msra.mxu0 0
        %614 = vmatprep.subr.bf16.mxu0 0
        %615 = vmatpush1.bf16.msra.mxu0 0
        %616 = vmatprep.subr.bf16.mxu0 0
        %617 = vmatpush1.bf16.msra.mxu0 0
        %618 = vmatprep.subr.bf16.mxu0 0
        %619 = vmatpush1.bf16.msra.mxu0 0
        %620 = vmatprep.subr.bf16.mxu0 0
        %621 = vmatpush1.bf16.msra.mxu0 0
        %622 = vmatprep.subr.bf16.mxu0 0
        %623 = vmatpush1.bf16.msra.mxu0 0
        %624 = vmatprep.subr.bf16.mxu0 0
        %625 = vmatpush1.bf16.msra.mxu0 0
        %626 = vmatprep.subr.bf16.mxu0 0
        %627 = vmatpush1.bf16.msra.mxu0 0
        %628 = vmatprep.subr.bf16.mxu0 0
        %629 = vmatpush1.bf16.msra.mxu0 0
        %630 = vmatprep.subr.bf16.mxu0 0
        %631 = vmatpush1.bf16.msra.mxu0 0
        %632 = vmatprep.subr.bf16.mxu0 0
        %633 = vmatpush1.bf16.msra.mxu0 0
        %634 = vmatprep.subr.bf16.mxu0 0
        %635 = vmatpush1.bf16.msra.mxu0 0
        %636 = vmatprep.mubr.bf16.mxu0 0
        %637 = vmatmul.mubr.bf16.gmra.mrb[0].mxu0 %v593
        %v638 = vpop.f32.mrb[0].mxu0
        %v639 = vadd.f32 0.0, %v638
        %v640 = vpop.f32.mrb[0].mxu0
        %v641 = vadd.f32 0.0, %v640
        %v642 = vpop.f32.mrb[0].mxu0
        %v643 = vadd.f32 0.0, %v642
        %v644 = vpop.f32.mrb[0].mxu0
        %v645 = vadd.f32 0.0, %v644
        %646 = vdwg.mxu0
        %647 = vmatprep.subr.bf16.mxu0 0
        %648 = vmatpush1.bf16.msra.mxu0 %v602
        %649 = vmatprep.subr.bf16.mxu0 0
        %650 = vmatpush1.bf16.msra.mxu0 0
        %651 = vmatprep.subr.bf16.mxu0 0
        %652 = vmatpush1.bf16.msra.mxu0 0
        %653 = vmatprep.subr.bf16.mxu0 0
        %654 = vmatpush1.bf16.msra.mxu0 0
        %655 = vmatprep.subr.bf16.mxu0 0
        %656 = vmatpush1.bf16.msra.mxu0 0
        %657 = vmatprep.subr.bf16.mxu0 0
        %658 = vmatpush1.bf16.msra.mxu0 0
        %659 = vmatprep.subr.bf16.mxu0 0
        %660 = vmatpush1.bf16.msra.mxu0 0
        %661 = vmatprep.subr.bf16.mxu0 0
        %662 = vmatpush1.bf16.msra.mxu0 0
        %663 = vmatprep.subr.bf16.mxu0 0
        %664 = vmatpush1.bf16.msra.mxu0 0
        %665 = vmatprep.subr.bf16.mxu0 0
        %666 = vmatpush1.bf16.msra.mxu0 0
        %667 = vmatprep.subr.bf16.mxu0 0
        %668 = vmatpush1.bf16.msra.mxu0 0
        %669 = vmatprep.subr.bf16.mxu0 0
        %670 = vmatpush1.bf16.msra.mxu0 0
        %671 = vmatprep.subr.bf16.mxu0 0
        %672 = vmatpush1.bf16.msra.mxu0 0
        %673 = vmatprep.subr.bf16.mxu0 0
        %674 = vmatpush1.bf16.msra.mxu0 0
        %675 = vmatprep.subr.bf16.mxu0 0
        %676 = vmatpush1.bf16.msra.mxu0 0
        %677 = vmatprep.subr.bf16.mxu0 0
        %678 = vmatpush1.bf16.msra.mxu0 0
        %679 = vmatprep.mubr.bf16.mxu0 0
        %680 = vmatmul.mubr.bf16.gmra.mrb[0].mxu0 %v593
        %v681 = vpop.f32.mrb[0].mxu0
        %v682 = vadd.f32 0.0, %v681
        %v683 = vpop.f32.mrb[0].mxu0
        %v684 = vpop.f32.mrb[0].mxu0
        %v685 = vadd.f32 0.0, %v684
        %v686 = vpop.f32.mrb[0].mxu0
        %687 = vdwg.mxu0
        %v688 = vadd.f32 %v573, %v639
        %v689 = vadd.f32 %v574, %v641
        %v690 = vadd.f32 %v575, %v682
        %v691 = vadd.f32 %v576, %v643
        %v692 = vadd.f32 %v577, %v645
        %v693 = vadd.f32 %v578, %v685
        %s694 = scalar_lea.vmem [#allocation5], 288
        %v695 = vld [vmem:[%s694] sm:$0xff]
        %v696 = vld [vmem:[%s694 + $0x8] sm:$0xff]
        %v697 = vpack.c.bf16 %v696, %v695
        %698 = vrot.lane.b32.xlu0 %v251, 124
        %v699 = vpop.permute.xlu0 %698
        %700 = vrot.lane.b32.xlu0 %v252, 124
        %v701 = vpop.permute.xlu0 %700
        %702 = vrot.lane.b32.xlu0 %v253, 124
        %v703 = vpop.permute.xlu0 %702
        %vm704 = vcmask 1014784
        %v705 = vsel %vm704, %v699, %v701
        %v706 = vsel %vm704, %v701, %v703
        %v708 = vsel %vm270, %v697, 0
        %v711 = vsel %vm274, %v705, 0
        %v714 = vsel %vm274, %v706, 0
        %v717 = vsel %vm274, %v703, 0
        %719 = vmatprep.subr.bf16.mxu0 %v714
        %720 = vmatpush1.bf16.msra.mxu0 %v711
        %721 = vmatprep.subr.bf16.mxu0 0
        %722 = vmatpush1.bf16.msra.mxu0 0
        %723 = vmatprep.subr.bf16.mxu0 0
        %724 = vmatpush1.bf16.msra.mxu0 0
        %725 = vmatprep.subr.bf16.mxu0 0
        %726 = vmatpush1.bf16.msra.mxu0 0
        %727 = vmatprep.subr.bf16.mxu0 0
        %728 = vmatpush1.bf16.msra.mxu0 0
        %729 = vmatprep.subr.bf16.mxu0 0
        %730 = vmatpush1.bf16.msra.mxu0 0
        %731 = vmatprep.subr.bf16.mxu0 0
        %732 = vmatpush1.bf16.msra.mxu0 0
        %733 = vmatprep.subr.bf16.mxu0 0
        %734 = vmatpush1.bf16.msra.mxu0 0
        %735 = vmatprep.subr.bf16.mxu0 0
        %736 = vmatpush1.bf16.msra.mxu0 0
        %737 = vmatprep.subr.bf16.mxu0 0
        %738 = vmatpush1.bf16.msra.mxu0 0
        %739 = vmatprep.subr.bf16.mxu0 0
        %740 = vmatpush1.bf16.msra.mxu0 0
        %741 = vmatprep.subr.bf16.mxu0 0
        %742 = vmatpush1.bf16.msra.mxu0 0
        %743 = vmatprep.subr.bf16.mxu0 0
        %744 = vmatpush1.bf16.msra.mxu0 0
        %745 = vmatprep.subr.bf16.mxu0 0
        %746 = vmatpush1.bf16.msra.mxu0 0
        %747 = vmatprep.subr.bf16.mxu0 0
        %748 = vmatpush1.bf16.msra.mxu0 0
        %749 = vmatprep.subr.bf16.mxu0 0
        %750 = vmatpush1.bf16.msra.mxu0 0
        %751 = vmatprep.mubr.bf16.mxu0 0
        %752 = vmatmul.mubr.bf16.gmra.mrb[0].mxu0 %v708
        %v753 = vpop.f32.mrb[0].mxu0
        %v754 = vadd.f32 0.0, %v753
        %v755 = vpop.f32.mrb[0].mxu0
        %v756 = vadd.f32 0.0, %v755
        %v757 = vpop.f32.mrb[0].mxu0
        %v758 = vadd.f32 0.0, %v757
        %v759 = vpop.f32.mrb[0].mxu0
        %v760 = vadd.f32 0.0, %v759
        %761 = vdwg.mxu0
        %762 = vmatprep.subr.bf16.mxu0 0
        %763 = vmatpush1.bf16.msra.mxu0 %v717
        %764 = vmatprep.subr.bf16.mxu0 0
        %765 = vmatpush1.bf16.msra.mxu0 0
        %766 = vmatprep.subr.bf16.mxu0 0
        %767 = vmatpush1.bf16.msra.mxu0 0
        %768 = vmatprep.subr.bf16.mxu0 0
        %769 = vmatpush1.bf16.msra.mxu0 0
        %770 = vmatprep.subr.bf16.mxu0 0
        %771 = vmatpush1.bf16.msra.mxu0 0
        %772 = vmatprep.subr.bf16.mxu0 0
        %773 = vmatpush1.bf16.msra.mxu0 0
        %774 = vmatprep.subr.bf16.mxu0 0
        %775 = vmatpush1.bf16.msra.mxu0 0
        %776 = vmatprep.subr.bf16.mxu0 0
        %777 = vmatpush1.bf16.msra.mxu0 0
        %778 = vmatprep.subr.bf16.mxu0 0
        %779 = vmatpush1.bf16.msra.mxu0 0
        %780 = vmatprep.subr.bf16.mxu0 0
        %781 = vmatpush1.bf16.msra.mxu0 0
        %782 = vmatprep.subr.bf16.mxu0 0
        %783 = vmatpush1.bf16.msra.mxu0 0
        %784 = vmatprep.subr.bf16.mxu0 0
        %785 = vmatpush1.bf16.msra.mxu0 0
        %786 = vmatprep.subr.bf16.mxu0 0
        %787 = vmatpush1.bf16.msra.mxu0 0
        %788 = vmatprep.subr.bf16.mxu0 0
        %789 = vmatpush1.bf16.msra.mxu0 0
        %790 = vmatprep.subr.bf16.mxu0 0
        %791 = vmatpush1.bf16.msra.mxu0 0
        %792 = vmatprep.subr.bf16.mxu0 0
        %793 = vmatpush1.bf16.msra.mxu0 0
        %794 = vmatprep.mubr.bf16.mxu0 0
        %795 = vmatmul.mubr.bf16.gmra.mrb[0].mxu0 %v708
        %v796 = vpop.f32.mrb[0].mxu0
        %v797 = vadd.f32 0.0, %v796
        %v798 = vpop.f32.mrb[0].mxu0
        %v799 = vpop.f32.mrb[0].mxu0
        %v800 = vadd.f32 0.0, %v799
        %v801 = vpop.f32.mrb[0].mxu0
        %802 = vdwg.mxu0
        %v803 = vadd.f32 %v688, %v754
        %v804 = vadd.f32 %v689, %v756
        %v805 = vadd.f32 %v690, %v797
        %v806 = vadd.f32 %v691, %v758
        %v807 = vadd.f32 %v692, %v760
        %v808 = vadd.f32 %v693, %v800
        %s809 = scalar_lea.vmem [#allocation5], 360
        %v810 = vld [vmem:[%s809] sm:$0xff]
        %v811 = vld [vmem:[%s809 + $0x8] sm:$0xff]
        %813 = vset.pattern.permute.xlu0 0
        %814 = vperm.xlu0 %813, %v810
        %v815 = vpop.permute.xlu0 %814
        %818 = vset.pattern.permute.xlu0 0
        %819 = vperm.xlu0 %818, %v811
        %v820 = vpop.permute.xlu0 %819
        %v822 = vadd.f32 %v803, %v815
        %v823 = vadd.f32 %v804, %v815
        %v824 = vadd.f32 %v805, %v815
        %v825 = vadd.f32 %v806, %v820
        %v826 = vadd.f32 %v807, %v820
        %v827 = vadd.f32 %v808, %v820
        %v828 = vmax.f32 %v822, 0.0
        %v829 = vmax.f32 %v823, 0.0
        %v830 = vmax.f32 %v824, 0.0
        %v831 = vmax.f32 %v825, 0.0
        %v832 = vmax.f32 %v826, 0.0
        %v833 = vmax.f32 %v827, 0.0
        %v834 = vmul.f32 %v828, %v242
        %v835 = vmul.f32 %v829, %v243
        %v836 = vmul.f32 %v830, %v244
        %v837 = vmul.f32 %v831, %v242
        %v838 = vmul.f32 %v832, %v243
        %v839 = vmul.f32 %v833, %v244
        %846 = vrot.lane.b32.xlu0 %v834, 2
        %v847 = vpop.permute.xlu0 %846
        %848 = vrot.lane.b32.xlu0 %v835, 2
        %v849 = vpop.permute.xlu0 %848
        %850 = vrot.lane.b32.xlu0 %v836, 2
        %v851 = vpop.permute.xlu0 %850
        %852 = vrot.lane.b32.xlu0 %v837, 2
        %v853 = vpop.permute.xlu0 %852
        %854 = vrot.lane.b32.xlu0 %v838, 2
        %v855 = vpop.permute.xlu0 %854
        %856 = vrot.lane.b32.xlu0 %v839, 2
        %v857 = vpop.permute.xlu0 %856
        %vm858 = vcmask 15360
        %v859 = vsel %vm858, %v847, %v849
        %v860 = vsel %vm858, %v849, %v851
        %v861 = vsel %vm858, %v853, %v855
        %v862 = vsel %vm858, %v855, %v857
        %vm869 = vcmask 1047568
        %870 = vst.msk [vmem:[#allocation2] sm:$0xff] %vm869, %v847
        %871 = vst [vmem:[#allocation2 + $0x8] sm:$0xff] %v859
        %vm872 = vcmask 80896
        %873 = vst.msk [vmem:[#allocation2 + $0x10] sm:$0xff] %vm872, %v860
        %874 = vst.msk [vmem:[#allocation2 + $0x18] sm:$0xff] %vm869, %v853
        %875 = vst [vmem:[#allocation2 + $0x20] sm:$0xff] %v861
        %876 = vst.msk [vmem:[#allocation2 + $0x28] sm:$0xff] %vm872, %v862
        %v877 = vld [vmem:[#allocation5 + $0x10] sm:$0xff]
        %v878 = vld [vmem:[#allocation5 + $0x18] sm:$0xff]
        %v879 = vld [vmem:[#allocation5 + $0x20] sm:$0xff]
        %v880 = vld [vmem:[#allocation5 + $0x28] sm:$0xff]
        %v881 = vpack.c.bf16 %v878, %v877
        %v882 = vpack.c.bf16 %v880, %v879
        %v883 = vld [vmem:[#allocation2] sm:$0xff]
        %v884 = vld [vmem:[#allocation2 + $0x8] sm:$0xff]
        %v885 = vld [vmem:[#allocation2 + $0x10] sm:$0xff]
        %v886 = vld [vmem:[#allocation2 + $0x18] sm:$0xff]
        %v887 = vld [vmem:[#allocation2 + $0x20] sm:$0xff]
        %v888 = vld [vmem:[#allocation2 + $0x28] sm:$0xff]
        %v889 = vpack.c.bf16 %v886, %v883
        %v890 = vpack.c.bf16 %v887, %v884
        %v891 = vpack.c.bf16 %v888, %v885
        %v892 = vld [vmem:[%s254 + $0x10] sm:$0xff]
        %v893 = vld [vmem:[%s254 + $0x18] sm:$0xff]
        %v894 = vld [vmem:[%s254 + $0x20] sm:$0xff]
        %v895 = vld [vmem:[%s254 + $0x28] sm:$0xff]
        %v896 = vpack.c.bf16 %v893, %v892
        %v897 = vpack.c.bf16 %v895, %v894
        %901 = vrot.lane.b32.xlu0 %v889, 127
        %v902 = vpop.permute.xlu0 %901
        %903 = vrot.lane.b32.xlu0 %v890, 127
        %v904 = vpop.permute.xlu0 %903
        %905 = vrot.lane.b32.xlu0 %v891, 127
        %v906 = vpop.permute.xlu0 %905
        %v907 = vsel %vm267, %v902, %v904
        %v908 = vsel %vm267, %v904, %v906
        %vm912 = vcmask 130048
        %v914 = vsel %vm912, %v896, 0
        %v917 = vsel %vm912, %v897, 0
        %919 = vmatprep.subr.bf16.mxu0 %v908
        %920 = vmatpush1.bf16.msra.mxu0 %v907
        %921 = vmatprep.subr.bf16.mxu0 0
        %922 = vmatpush1.bf16.msra.mxu0 0
        %923 = vmatprep.subr.bf16.mxu0 0
        %924 = vmatpush1.bf16.msra.mxu0 0
        %925 = vmatprep.subr.bf16.mxu0 0
        %926 = vmatpush1.bf16.msra.mxu0 0
        %927 = vmatprep.subr.bf16.mxu0 0
        %928 = vmatpush1.bf16.msra.mxu0 0
        %929 = vmatprep.subr.bf16.mxu0 0
        %930 = vmatpush1.bf16.msra.mxu0 0
        %931 = vmatprep.subr.bf16.mxu0 0
        %932 = vmatpush1.bf16.msra.mxu0 0
        %933 = vmatprep.subr.bf16.mxu0 0
        %934 = vmatpush1.bf16.msra.mxu0 0
        %935 = vmatprep.subr.bf16.mxu0 0
        %936 = vmatpush1.bf16.msra.mxu0 0
        %937 = vmatprep.subr.bf16.mxu0 0
        %938 = vmatpush1.bf16.msra.mxu0 0
        %939 = vmatprep.subr.bf16.mxu0 0
        %940 = vmatpush1.bf16.msra.mxu0 0
        %941 = vmatprep.subr.bf16.mxu0 0
        %942 = vmatpush1.bf16.msra.mxu0 0
        %943 = vmatprep.subr.bf16.mxu0 0
        %944 = vmatpush1.bf16.msra.mxu0 0
        %945 = vmatprep.subr.bf16.mxu0 0
        %946 = vmatpush1.bf16.msra.mxu0 0
        %947 = vmatprep.subr.bf16.mxu0 0
        %948 = vmatpush1.bf16.msra.mxu0 0
        %949 = vmatprep.subr.bf16.mxu0 0
        %950 = vmatpush1.bf16.msra.mxu0 0
        %951 = vmatprep.mubr.bf16.mxu0 0
        %952 = vmatmul.mubr.bf16.gmra.mrb[0].mxu0 %v914
        %v953 = vpop.f32.mrb[0].mxu0
        %v954 = vadd.f32 0.0, %v953
        %v955 = vpop.f32.mrb[0].mxu0
        %v956 = vadd.f32 0.0, %v955
        %v957 = vpop.f32.mrb[0].mxu0
        %v958 = vadd.f32 0.0, %v957
        %v959 = vpop.f32.mrb[0].mxu0
        %v960 = vadd.f32 0.0, %v959
        %961 = vmatprep.mubr.bf16.mxu0 0
        %962 = vmatmul.mubr.bf16.gmra.mrb[0].mxu0 %v917
        %v963 = vpop.f32.mrb[0].mxu0
        %v964 = vadd.f32 0.0, %v963
        %v965 = vpop.f32.mrb[0].mxu0
        %v966 = vadd.f32 0.0, %v965
        %v967 = vpop.f32.mrb[0].mxu0
        %v968 = vadd.f32 0.0, %v967
        %v969 = vpop.f32.mrb[0].mxu0
        %v970 = vadd.f32 0.0, %v969
        %971 = vdwg.mxu0
        %972 = vmatprep.subr.bf16.mxu0 0
        %973 = vmatpush1.bf16.msra.mxu0 %v906
        %974 = vmatprep.subr.bf16.mxu0 0
        %975 = vmatpush1.bf16.msra.mxu0 0
        %976 = vmatprep.subr.bf16.mxu0 0
        %977 = vmatpush1.bf16.msra.mxu0 0
        %978 = vmatprep.subr.bf16.mxu0 0
        %979 = vmatpush1.bf16.msra.mxu0 0
        %980 = vmatprep.subr.bf16.mxu0 0
        %981 = vmatpush1.bf16.msra.mxu0 0
        %982 = vmatprep.subr.bf16.mxu0 0
        %983 = vmatpush1.bf16.msra.mxu0 0
        %984 = vmatprep.subr.bf16.mxu0 0
        %985 = vmatpush1.bf16.msra.mxu0 0
        %986 = vmatprep.subr.bf16.mxu0 0
        %987 = vmatpush1.bf16.msra.mxu0 0
        %988 = vmatprep.subr.bf16.mxu0 0
        %989 = vmatpush1.bf16.msra.mxu0 0
        %990 = vmatprep.subr.bf16.mxu0 0
        %991 = vmatpush1.bf16.msra.mxu0 0
        %992 = vmatprep.subr.bf16.mxu0 0
        %993 = vmatpush1.bf16.msra.mxu0 0
        %994 = vmatprep.subr.bf16.mxu0 0
        %995 = vmatpush1.bf16.msra.mxu0 0
        %996 = vmatprep.subr.bf16.mxu0 0
        %997 = vmatpush1.bf16.msra.mxu0 0
        %998 = vmatprep.subr.bf16.mxu0 0
        %999 = vmatpush1.bf16.msra.mxu0 0
        %1000 = vmatprep.subr.bf16.mxu0 0
        %1001 = vmatpush1.bf16.msra.mxu0 0
        %1002 = vmatprep.subr.bf16.mxu0 0
        %1003 = vmatpush1.bf16.msra.mxu0 0
        %1004 = vmatprep.mubr.bf16.mxu0 0
        %1005 = vmatmul.mubr.bf16.gmra.mrb[0].mxu0 %v914
        %v1006 = vpop.f32.mrb[0].mxu0
        %v1007 = vadd.f32 0.0, %v1006
        %v1008 = vpop.f32.mrb[0].mxu0
        %v1009 = vpop.f32.mrb[0].mxu0
        %v1010 = vadd.f32 0.0, %v1009
        %v1011 = vpop.f32.mrb[0].mxu0
        %1012 = vmatprep.mubr.bf16.mxu0 0
        %1013 = vmatmul.mubr.bf16.gmra.mrb[0].mxu0 %v917
        %v1014 = vpop.f32.mrb[0].mxu0
        %v1015 = vadd.f32 0.0, %v1014
        %v1016 = vpop.f32.mrb[0].mxu0
        %v1017 = vpop.f32.mrb[0].mxu0
        %v1018 = vadd.f32 0.0, %v1017
        %v1019 = vpop.f32.mrb[0].mxu0
        %1020 = vdwg.mxu0
        %v1022 = vsel %vm912, %v881, 0
        %v1025 = vsel %vm912, %v882, 0
        %1027 = vmatprep.subr.bf16.mxu0 %v890
        %1028 = vmatpush1.bf16.msra.mxu0 %v889
        %1029 = vmatprep.subr.bf16.mxu0 0
        %1030 = vmatpush1.bf16.msra.mxu0 0
        %1031 = vmatprep.subr.bf16.mxu0 0
        %1032 = vmatpush1.bf16.msra.mxu0 0
        %1033 = vmatprep.subr.bf16.mxu0 0
        %1034 = vmatpush1.bf16.msra.mxu0 0
        %1035 = vmatprep.subr.bf16.mxu0 0
        %1036 = vmatpush1.bf16.msra.mxu0 0
        %1037 = vmatprep.subr.bf16.mxu0 0
        %1038 = vmatpush1.bf16.msra.mxu0 0
        %1039 = vmatprep.subr.bf16.mxu0 0
        %1040 = vmatpush1.bf16.msra.mxu0 0
        %1041 = vmatprep.subr.bf16.mxu0 0
        %1042 = vmatpush1.bf16.msra.mxu0 0
        %1043 = vmatprep.subr.bf16.mxu0 0
        %1044 = vmatpush1.bf16.msra.mxu0 0
        %1045 = vmatprep.subr.bf16.mxu0 0
        %1046 = vmatpush1.bf16.msra.mxu0 0
        %1047 = vmatprep.subr.bf16.mxu0 0
        %1048 = vmatpush1.bf16.msra.mxu0 0
        %1049 = vmatprep.subr.bf16.mxu0 0
        %1050 = vmatpush1.bf16.msra.mxu0 0
        %1051 = vmatprep.subr.bf16.mxu0 0
        %1052 = vmatpush1.bf16.msra.mxu0 0
        %1053 = vmatprep.subr.bf16.mxu0 0
        %1054 = vmatpush1.bf16.msra.mxu0 0
        %1055 = vmatprep.subr.bf16.mxu0 0
        %1056 = vmatpush1.bf16.msra.mxu0 0
        %1057 = vmatprep.subr.bf16.mxu0 0
        %1058 = vmatpush1.bf16.msra.mxu0 0
        %1059 = vmatprep.mubr.bf16.mxu0 0
        %1060 = vmatmul.mubr.bf16.gmra.mrb[0].mxu0 %v1022
        %v1061 = vpop.f32.mrb[0].mxu0
        %v1062 = vadd.f32 %v954, %v1061
        %v1063 = vpop.f32.mrb[0].mxu0
        %v1064 = vadd.f32 %v956, %v1063
        %v1065 = vpop.f32.mrb[0].mxu0
        %v1066 = vadd.f32 %v958, %v1065
        %v1067 = vpop.f32.mrb[0].mxu0
        %v1068 = vadd.f32 %v960, %v1067
        %1069 = vmatprep.mubr.bf16.mxu0 0
        %1070 = vmatmul.mubr.bf16.gmra.mrb[0].mxu0 %v1025
        %v1071 = vpop.f32.mrb[0].mxu0
        %v1072 = vadd.f32 %v964, %v1071
        %v1073 = vpop.f32.mrb[0].mxu0
        %v1074 = vadd.f32 %v966, %v1073
        %v1075 = vpop.f32.mrb[0].mxu0
        %v1076 = vadd.f32 %v968, %v1075
        %v1077 = vpop.f32.mrb[0].mxu0
        %v1078 = vadd.f32 %v970, %v1077
        %1079 = vdwg.mxu0
        %1080 = vmatprep.subr.bf16.mxu0 0
        %1081 = vmatpush1.bf16.msra.mxu0 %v891
        %1082 = vmatprep.subr.bf16.mxu0 0
        %1083 = vmatpush1.bf16.msra.mxu0 0
        %1084 = vmatprep.subr.bf16.mxu0 0
        %1085 = vmatpush1.bf16.msra.mxu0 0
        %1086 = vmatprep.subr.bf16.mxu0 0
        %1087 = vmatpush1.bf16.msra.mxu0 0
        %1088 = vmatprep.subr.bf16.mxu0 0
        %1089 = vmatpush1.bf16.msra.mxu0 0
        %1090 = vmatprep.subr.bf16.mxu0 0
        %1091 = vmatpush1.bf16.msra.mxu0 0
        %1092 = vmatprep.subr.bf16.mxu0 0
        %1093 = vmatpush1.bf16.msra.mxu0 0
        %1094 = vmatprep.subr.bf16.mxu0 0
        %1095 = vmatpush1.bf16.msra.mxu0 0
        %1096 = vmatprep.subr.bf16.mxu0 0
        %1097 = vmatpush1.bf16.msra.mxu0 0
        %1098 = vmatprep.subr.bf16.mxu0 0
        %1099 = vmatpush1.bf16.msra.mxu0 0
        %1100 = vmatprep.subr.bf16.mxu0 0
        %1101 = vmatpush1.bf16.msra.mxu0 0
        %1102 = vmatprep.subr.bf16.mxu0 0
        %1103 = vmatpush1.bf16.msra.mxu0 0
        %1104 = vmatprep.subr.bf16.mxu0 0
        %1105 = vmatpush1.bf16.msra.mxu0 0
        %1106 = vmatprep.subr.bf16.mxu0 0
        %1107 = vmatpush1.bf16.msra.mxu0 0
        %1108 = vmatprep.subr.bf16.mxu0 0
        %1109 = vmatpush1.bf16.msra.mxu0 0
        %1110 = vmatprep.subr.bf16.mxu0 0
        %1111 = vmatpush1.bf16.msra.mxu0 0
        %1112 = vmatprep.mubr.bf16.mxu0 0
        %1113 = vmatmul.mubr.bf16.gmra.mrb[0].mxu0 %v1022
        %v1114 = vpop.f32.mrb[0].mxu0
        %v1115 = vadd.f32 %v1007, %v1114
        %v1116 = vpop.f32.mrb[0].mxu0
        %v1117 = vpop.f32.mrb[0].mxu0
        %v1118 = vadd.f32 %v1010, %v1117
        %v1119 = vpop.f32.mrb[0].mxu0
        %1120 = vmatprep.mubr.bf16.mxu0 0
        %1121 = vmatmul.mubr.bf16.gmra.mrb[0].mxu0 %v1025
        %v1122 = vpop.f32.mrb[0].mxu0
        %v1123 = vadd.f32 %v1015, %v1122
        %v1124 = vpop.f32.mrb[0].mxu0
        %v1125 = vpop.f32.mrb[0].mxu0
        %v1126 = vadd.f32 %v1018, %v1125
        %v1127 = vpop.f32.mrb[0].mxu0
        %1128 = vdwg.mxu0
        %v1129 = vld [vmem:[%s464 + $0x10] sm:$0xff]
        %v1130 = vld [vmem:[%s464 + $0x18] sm:$0xff]
        %v1131 = vld [vmem:[%s464 + $0x20] sm:$0xff]
        %v1132 = vld [vmem:[%s464 + $0x28] sm:$0xff]
        %v1133 = vpack.c.bf16 %v1130, %v1129
        %v1134 = vpack.c.bf16 %v1132, %v1131
        %1135 = vrot.lane.b32.xlu0 %v889, 126
        %v1136 = vpop.permute.xlu0 %1135
        %1137 = vrot.lane.b32.xlu0 %v890, 126
        %v1138 = vpop.permute.xlu0 %1137
        %1139 = vrot.lane.b32.xlu0 %v891, 126
        %v1140 = vpop.permute.xlu0 %1139
        %v1141 = vsel %vm474, %v1136, %v1138
        %v1142 = vsel %vm474, %v1138, %v1140
        %v1147 = vsel %vm912, %v1133, 0
        %v1150 = vsel %vm912, %v1134, 0
        %1152 = vmatprep.subr.bf16.mxu0 %v1142
        %1153 = vmatpush1.bf16.msra.mxu0 %v1141
        %1154 = vmatprep.subr.bf16.mxu0 0
        %1155 = vmatpush1.bf16.msra.mxu0 0
        %1156 = vmatprep.subr.bf16.mxu0 0
        %1157 = vmatpush1.bf16.msra.mxu0 0
        %1158 = vmatprep.subr.bf16.mxu0 0
        %1159 = vmatpush1.bf16.msra.mxu0 0
        %1160 = vmatprep.subr.bf16.mxu0 0
        %1161 = vmatpush1.bf16.msra.mxu0 0
        %1162 = vmatprep.subr.bf16.mxu0 0
        %1163 = vmatpush1.bf16.msra.mxu0 0
        %1164 = vmatprep.subr.bf16.mxu0 0
        %1165 = vmatpush1.bf16.msra.mxu0 0
        %1166 = vmatprep.subr.bf16.mxu0 0
        %1167 = vmatpush1.bf16.msra.mxu0 0
        %1168 = vmatprep.subr.bf16.mxu0 0
        %1169 = vmatpush1.bf16.msra.mxu0 0
        %1170 = vmatprep.subr.bf16.mxu0 0
        %1171 = vmatpush1.bf16.msra.mxu0 0
        %1172 = vmatprep.subr.bf16.mxu0 0
        %1173 = vmatpush1.bf16.msra.mxu0 0
        %1174 = vmatprep.subr.bf16.mxu0 0
        %1175 = vmatpush1.bf16.msra.mxu0 0
        %1176 = vmatprep.subr.bf16.mxu0 0
        %1177 = vmatpush1.bf16.msra.mxu0 0
        %1178 = vmatprep.subr.bf16.mxu0 0
        %1179 = vmatpush1.bf16.msra.mxu0 0
        %1180 = vmatprep.subr.bf16.mxu0 0
        %1181 = vmatpush1.bf16.msra.mxu0 0
        %1182 = vmatprep.subr.bf16.mxu0 0
        %1183 = vmatpush1.bf16.msra.mxu0 0
        %1184 = vmatprep.mubr.bf16.mxu0 0
        %1185 = vmatmul.mubr.bf16.gmra.mrb[0].mxu0 %v1147
        %v1186 = vpop.f32.mrb[0].mxu0
        %v1187 = vadd.f32 0.0, %v1186
        %v1188 = vpop.f32.mrb[0].mxu0
        %v1189 = vadd.f32 0.0, %v1188
        %v1190 = vpop.f32.mrb[0].mxu0
        %v1191 = vadd.f32 0.0, %v1190
        %v1192 = vpop.f32.mrb[0].mxu0
        %v1193 = vadd.f32 0.0, %v1192
        %1194 = vmatprep.mubr.bf16.mxu0 0
        %1195 = vmatmul.mubr.bf16.gmra.mrb[0].mxu0 %v1150
        %v1196 = vpop.f32.mrb[0].mxu0
        %v1197 = vadd.f32 0.0, %v1196
        %v1198 = vpop.f32.mrb[0].mxu0
        %v1199 = vadd.f32 0.0, %v1198
        %v1200 = vpop.f32.mrb[0].mxu0
        %v1201 = vadd.f32 0.0, %v1200
        %v1202 = vpop.f32.mrb[0].mxu0
        %v1203 = vadd.f32 0.0, %v1202
        %1204 = vdwg.mxu0
        %1205 = vmatprep.subr.bf16.mxu0 0
        %1206 = vmatpush1.bf16.msra.mxu0 %v1140
        %1207 = vmatprep.subr.bf16.mxu0 0
        %1208 = vmatpush1.bf16.msra.mxu0 0
        %1209 = vmatprep.subr.bf16.mxu0 0
        %1210 = vmatpush1.bf16.msra.mxu0 0
        %1211 = vmatprep.subr.bf16.mxu0 0
        %1212 = vmatpush1.bf16.msra.mxu0 0
        %1213 = vmatprep.subr.bf16.mxu0 0
        %1214 = vmatpush1.bf16.msra.mxu0 0
        %1215 = vmatprep.subr.bf16.mxu0 0
        %1216 = vmatpush1.bf16.msra.mxu0 0
        %1217 = vmatprep.subr.bf16.mxu0 0
        %1218 = vmatpush1.bf16.msra.mxu0 0
        %1219 = vmatprep.subr.bf16.mxu0 0
        %1220 = vmatpush1.bf16.msra.mxu0 0
        %1221 = vmatprep.subr.bf16.mxu0 0
        %1222 = vmatpush1.bf16.msra.mxu0 0
        %1223 = vmatprep.subr.bf16.mxu0 0
        %1224 = vmatpush1.bf16.msra.mxu0 0
        %1225 = vmatprep.subr.bf16.mxu0 0
        %1226 = vmatpush1.bf16.msra.mxu0 0
        %1227 = vmatprep.subr.bf16.mxu0 0
        %1228 = vmatpush1.bf16.msra.mxu0 0
        %1229 = vmatprep.subr.bf16.mxu0 0
        %1230 = vmatpush1.bf16.msra.mxu0 0
        %1231 = vmatprep.subr.bf16.mxu0 0
        %1232 = vmatpush1.bf16.msra.mxu0 0
        %1233 = vmatprep.subr.bf16.mxu0 0
        %1234 = vmatpush1.bf16.msra.mxu0 0
        %1235 = vmatprep.subr.bf16.mxu0 0
        %1236 = vmatpush1.bf16.msra.mxu0 0
        %1237 = vmatprep.mubr.bf16.mxu0 0
        %1238 = vmatmul.mubr.bf16.gmra.mrb[0].mxu0 %v1147
        %v1239 = vpop.f32.mrb[0].mxu0
        %v1240 = vadd.f32 0.0, %v1239
        %v1241 = vpop.f32.mrb[0].mxu0
        %v1242 = vpop.f32.mrb[0].mxu0
        %v1243 = vadd.f32 0.0, %v1242
        %v1244 = vpop.f32.mrb[0].mxu0
        %1245 = vmatprep.mubr.bf16.mxu0 0
        %1246 = vmatmul.mubr.bf16.gmra.mrb[0].mxu0 %v1150
        %v1247 = vpop.f32.mrb[0].mxu0
        %v1248 = vadd.f32 0.0, %v1247
        %v1249 = vpop.f32.mrb[0].mxu0
        %v1250 = vpop.f32.mrb[0].mxu0
        %v1251 = vadd.f32 0.0, %v1250
        %v1252 = vpop.f32.mrb[0].mxu0
        %1253 = vdwg.mxu0
        %v1254 = vadd.f32 %v1062, %v1187
        %v1255 = vadd.f32 %v1064, %v1189
        %v1256 = vadd.f32 %v1115, %v1240
        %v1257 = vadd.f32 %v1066, %v1191
        %v1258 = vadd.f32 %v1068, %v1193
        %v1259 = vadd.f32 %v1118, %v1243
        %v1260 = vadd.f32 %v1072, %v1197
        %v1261 = vadd.f32 %v1074, %v1199
        %v1262 = vadd.f32 %v1123, %v1248
        %v1263 = vadd.f32 %v1076, %v1201
        %v1264 = vadd.f32 %v1078, %v1203
        %v1265 = vadd.f32 %v1126, %v1251
        %v1266 = vld [vmem:[%s579 + $0x10] sm:$0xff]
        %v1267 = vld [vmem:[%s579 + $0x18] sm:$0xff]
        %v1268 = vld [vmem:[%s579 + $0x20] sm:$0xff]
        %v1269 = vld [vmem:[%s579 + $0x28] sm:$0xff]
        %v1270 = vpack.c.bf16 %v1267, %v1266
        %v1271 = vpack.c.bf16 %v1269, %v1268
        %1272 = vrot.lane.b32.xlu0 %v889, 125
        %v1273 = vpop.permute.xlu0 %1272
        %1274 = vrot.lane.b32.xlu0 %v890, 125
        %v1275 = vpop.permute.xlu0 %1274
        %1276 = vrot.lane.b32.xlu0 %v891, 125
        %v1277 = vpop.permute.xlu0 %1276
        %v1278 = vsel %vm589, %v1273, %v1275
        %v1279 = vsel %vm589, %v1275, %v1277
        %v1284 = vsel %vm912, %v1270, 0
        %v1287 = vsel %vm912, %v1271, 0
        %1289 = vmatprep.subr.bf16.mxu0 %v1279
        %1290 = vmatpush1.bf16.msra.mxu0 %v1278
        %1291 = vmatprep.subr.bf16.mxu0 0
        %1292 = vmatpush1.bf16.msra.mxu0 0
        %1293 = vmatprep.subr.bf16.mxu0 0
        %1294 = vmatpush1.bf16.msra.mxu0 0
        %1295 = vmatprep.subr.bf16.mxu0 0
        %1296 = vmatpush1.bf16.msra.mxu0 0
        %1297 = vmatprep.subr.bf16.mxu0 0
        %1298 = vmatpush1.bf16.msra.mxu0 0
        %1299 = vmatprep.subr.bf16.mxu0 0
        %1300 = vmatpush1.bf16.msra.mxu0 0
        %1301 = vmatprep.subr.bf16.mxu0 0
        %1302 = vmatpush1.bf16.msra.mxu0 0
        %1303 = vmatprep.subr.bf16.mxu0 0
        %1304 = vmatpush1.bf16.msra.mxu0 0
        %1305 = vmatprep.subr.bf16.mxu0 0
        %1306 = vmatpush1.bf16.msra.mxu0 0
        %1307 = vmatprep.subr.bf16.mxu0 0
        %1308 = vmatpush1.bf16.msra.mxu0 0
        %1309 = vmatprep.subr.bf16.mxu0 0
        %1310 = vmatpush1.bf16.msra.mxu0 0
        %1311 = vmatprep.subr.bf16.mxu0 0
        %1312 = vmatpush1.bf16.msra.mxu0 0
        %1313 = vmatprep.subr.bf16.mxu0 0
        %1314 = vmatpush1.bf16.msra.mxu0 0
        %1315 = vmatprep.subr.bf16.mxu0 0
        %1316 = vmatpush1.bf16.msra.mxu0 0
        %1317 = vmatprep.subr.bf16.mxu0 0
        %1318 = vmatpush1.bf16.msra.mxu0 0
        %1319 = vmatprep.subr.bf16.mxu0 0
        %1320 = vmatpush1.bf16.msra.mxu0 0
        %1321 = vmatprep.mubr.bf16.mxu0 0
        %1322 = vmatmul.mubr.bf16.gmra.mrb[0].mxu0 %v1284
        %v1323 = vpop.f32.mrb[0].mxu0
        %v1324 = vadd.f32 0.0, %v1323
        %v1325 = vpop.f32.mrb[0].mxu0
        %v1326 = vadd.f32 0.0, %v1325
        %v1327 = vpop.f32.mrb[0].mxu0
        %v1328 = vadd.f32 0.0, %v1327
        %v1329 = vpop.f32.mrb[0].mxu0
        %v1330 = vadd.f32 0.0, %v1329
        %1331 = vmatprep.mubr.bf16.mxu0 0
        %1332 = vmatmul.mubr.bf16.gmra.mrb[0].mxu0 %v1287
        %v1333 = vpop.f32.mrb[0].mxu0
        %v1334 = vadd.f32 0.0, %v1333
        %v1335 = vpop.f32.mrb[0].mxu0
        %v1336 = vadd.f32 0.0, %v1335
        %v1337 = vpop.f32.mrb[0].mxu0
        %v1338 = vadd.f32 0.0, %v1337
        %v1339 = vpop.f32.mrb[0].mxu0
        %v1340 = vadd.f32 0.0, %v1339
        %1341 = vdwg.mxu0
        %1342 = vmatprep.subr.bf16.mxu0 0
        %1343 = vmatpush1.bf16.msra.mxu0 %v1277
        %1344 = vmatprep.subr.bf16.mxu0 0
        %1345 = vmatpush1.bf16.msra.mxu0 0
        %1346 = vmatprep.subr.bf16.mxu0 0
        %1347 = vmatpush1.bf16.msra.mxu0 0
        %1348 = vmatprep.subr.bf16.mxu0 0
        %1349 = vmatpush1.bf16.msra.mxu0 0
        %1350 = vmatprep.subr.bf16.mxu0 0
        %1351 = vmatpush1.bf16.msra.mxu0 0
        %1352 = vmatprep.subr.bf16.mxu0 0
        %1353 = vmatpush1.bf16.msra.mxu0 0
        %1354 = vmatprep.subr.bf16.mxu0 0
        %1355 = vmatpush1.bf16.msra.mxu0 0
        %1356 = vmatprep.subr.bf16.mxu0 0
        %1357 = vmatpush1.bf16.msra.mxu0 0
        %1358 = vmatprep.subr.bf16.mxu0 0
        %1359 = vmatpush1.bf16.msra.mxu0 0
        %1360 = vmatprep.subr.bf16.mxu0 0
        %1361 = vmatpush1.bf16.msra.mxu0 0
        %1362 = vmatprep.subr.bf16.mxu0 0
        %1363 = vmatpush1.bf16.msra.mxu0 0
        %1364 = vmatprep.subr.bf16.mxu0 0
        %1365 = vmatpush1.bf16.msra.mxu0 0
        %1366 = vmatprep.subr.bf16.mxu0 0
        %1367 = vmatpush1.bf16.msra.mxu0 0
        %1368 = vmatprep.subr.bf16.mxu0 0
        %1369 = vmatpush1.bf16.msra.mxu0 0
        %1370 = vmatprep.subr.bf16.mxu0 0
        %1371 = vmatpush1.bf16.msra.mxu0 0
        %1372 = vmatprep.subr.bf16.mxu0 0
        %1373 = vmatpush1.bf16.msra.mxu0 0
        %1374 = vmatprep.mubr.bf16.mxu0 0
        %1375 = vmatmul.mubr.bf16.gmra.mrb[0].mxu0 %v1284
        %v1376 = vpop.f32.mrb[0].mxu0
        %v1377 = vadd.f32 0.0, %v1376
        %v1378 = vpop.f32.mrb[0].mxu0
        %v1379 = vpop.f32.mrb[0].mxu0
        %v1380 = vadd.f32 0.0, %v1379
        %v1381 = vpop.f32.mrb[0].mxu0
        %1382 = vmatprep.mubr.bf16.mxu0 0
        %1383 = vmatmul.mubr.bf16.gmra.mrb[0].mxu0 %v1287
        %v1384 = vpop.f32.mrb[0].mxu0
        %v1385 = vadd.f32 0.0, %v1384
        %v1386 = vpop.f32.mrb[0].mxu0
        %v1387 = vpop.f32.mrb[0].mxu0
        %v1388 = vadd.f32 0.0, %v1387
        %v1389 = vpop.f32.mrb[0].mxu0
        %1390 = vdwg.mxu0
        %v1391 = vadd.f32 %v1254, %v1324
        %v1392 = vadd.f32 %v1255, %v1326
        %v1393 = vadd.f32 %v1256, %v1377
        %v1394 = vadd.f32 %v1257, %v1328
        %v1395 = vadd.f32 %v1258, %v1330
        %v1396 = vadd.f32 %v1259, %v1380
        %v1397 = vadd.f32 %v1260, %v1334
        %v1398 = vadd.f32 %v1261, %v1336
        %v1399 = vadd.f32 %v1262, %v1385
        %v1400 = vadd.f32 %v1263, %v1338
        %v1401 = vadd.f32 %v1264, %v1340
        %v1402 = vadd.f32 %v1265, %v1388
        %v1403 = vld [vmem:[%s694 + $0x10] sm:$0xff]
        %v1404 = vld [vmem:[%s694 + $0x18] sm:$0xff]
        %v1405 = vld [vmem:[%s694 + $0x20] sm:$0xff]
        %v1406 = vld [vmem:[%s694 + $0x28] sm:$0xff]
        %v1407 = vpack.c.bf16 %v1404, %v1403
        %v1408 = vpack.c.bf16 %v1406, %v1405
        %1409 = vrot.lane.b32.xlu0 %v889, 124
        %v1410 = vpop.permute.xlu0 %1409
        %1411 = vrot.lane.b32.xlu0 %v890, 124
        %v1412 = vpop.permute.xlu0 %1411
        %1413 = vrot.lane.b32.xlu0 %v891, 124
        %v1414 = vpop.permute.xlu0 %1413
        %v1415 = vsel %vm704, %v1410, %v1412
        %v1416 = vsel %vm704, %v1412, %v1414
        %v1421 = vsel %vm912, %v1407, 0
        %v1424 = vsel %vm912, %v1408, 0
        %1426 = vmatprep.subr.bf16.mxu0 %v1416
        %1427 = vmatpush1.bf16.msra.mxu0 %v1415
        %1428 = vmatprep.subr.bf16.mxu0 0
        %1429 = vmatpush1.bf16.msra.mxu0 0
        %1430 = vmatprep.subr.bf16.mxu0 0
        %1431 = vmatpush1.bf16.msra.mxu0 0
        %1432 = vmatprep.subr.bf16.mxu0 0
        %1433 = vmatpush1.bf16.msra.mxu0 0
        %1434 = vmatprep.subr.bf16.mxu0 0
        %1435 = vmatpush1.bf16.msra.mxu0 0
        %1436 = vmatprep.subr.bf16.mxu0 0
        %1437 = vmatpush1.bf16.msra.mxu0 0
        %1438 = vmatprep.subr.bf16.mxu0 0
        %1439 = vmatpush1.bf16.msra.mxu0 0
        %1440 = vmatprep.subr.bf16.mxu0 0
        %1441 = vmatpush1.bf16.msra.mxu0 0
        %1442 = vmatprep.subr.bf16.mxu0 0
        %1443 = vmatpush1.bf16.msra.mxu0 0
        %1444 = vmatprep.subr.bf16.mxu0 0
        %1445 = vmatpush1.bf16.msra.mxu0 0
        %1446 = vmatprep.subr.bf16.mxu0 0
        %1447 = vmatpush1.bf16.msra.mxu0 0
        %1448 = vmatprep.subr.bf16.mxu0 0
        %1449 = vmatpush1.bf16.msra.mxu0 0
        %1450 = vmatprep.subr.bf16.mxu0 0
        %1451 = vmatpush1.bf16.msra.mxu0 0
        %1452 = vmatprep.subr.bf16.mxu0 0
        %1453 = vmatpush1.bf16.msra.mxu0 0
        %1454 = vmatprep.subr.bf16.mxu0 0
        %1455 = vmatpush1.bf16.msra.mxu0 0
        %1456 = vmatprep.subr.bf16.mxu0 0
        %1457 = vmatpush1.bf16.msra.mxu0 0
        %1458 = vmatprep.mubr.bf16.mxu0 0
        %1459 = vmatmul.mubr.bf16.gmra.mrb[0].mxu0 %v1421
        %v1460 = vpop.f32.mrb[0].mxu0
        %v1461 = vadd.f32 0.0, %v1460
        %v1462 = vpop.f32.mrb[0].mxu0
        %v1463 = vadd.f32 0.0, %v1462
        %v1464 = vpop.f32.mrb[0].mxu0
        %v1465 = vadd.f32 0.0, %v1464
        %v1466 = vpop.f32.mrb[0].mxu0
        %v1467 = vadd.f32 0.0, %v1466
        %1468 = vmatprep.mubr.bf16.mxu0 0
        %1469 = vmatmul.mubr.bf16.gmra.mrb[0].mxu0 %v1424
        %v1470 = vpop.f32.mrb[0].mxu0
        %v1471 = vadd.f32 0.0, %v1470
        %v1472 = vpop.f32.mrb[0].mxu0
        %v1473 = vadd.f32 0.0, %v1472
        %v1474 = vpop.f32.mrb[0].mxu0
        %v1475 = vadd.f32 0.0, %v1474
        %v1476 = vpop.f32.mrb[0].mxu0
        %v1477 = vadd.f32 0.0, %v1476
        %1478 = vdwg.mxu0
        %1479 = vmatprep.subr.bf16.mxu0 0
        %1480 = vmatpush1.bf16.msra.mxu0 %v1414
        %1481 = vmatprep.subr.bf16.mxu0 0
        %1482 = vmatpush1.bf16.msra.mxu0 0
        %1483 = vmatprep.subr.bf16.mxu0 0
        %1484 = vmatpush1.bf16.msra.mxu0 0
        %1485 = vmatprep.subr.bf16.mxu0 0
        %1486 = vmatpush1.bf16.msra.mxu0 0
        %1487 = vmatprep.subr.bf16.mxu0 0
        %1488 = vmatpush1.bf16.msra.mxu0 0
        %1489 = vmatprep.subr.bf16.mxu0 0
        %1490 = vmatpush1.bf16.msra.mxu0 0
        %1491 = vmatprep.subr.bf16.mxu0 0
        %1492 = vmatpush1.bf16.msra.mxu0 0
        %1493 = vmatprep.subr.bf16.mxu0 0
        %1494 = vmatpush1.bf16.msra.mxu0 0
        %1495 = vmatprep.subr.bf16.mxu0 0
        %1496 = vmatpush1.bf16.msra.mxu0 0
        %1497 = vmatprep.subr.bf16.mxu0 0
        %1498 = vmatpush1.bf16.msra.mxu0 0
        %1499 = vmatprep.subr.bf16.mxu0 0
        %1500 = vmatpush1.bf16.msra.mxu0 0
        %1501 = vmatprep.subr.bf16.mxu0 0
        %1502 = vmatpush1.bf16.msra.mxu0 0
        %1503 = vmatprep.subr.bf16.mxu0 0
        %1504 = vmatpush1.bf16.msra.mxu0 0
        %1505 = vmatprep.subr.bf16.mxu0 0
        %1506 = vmatpush1.bf16.msra.mxu0 0
        %1507 = vmatprep.subr.bf16.mxu0 0
        %1508 = vmatpush1.bf16.msra.mxu0 0
        %1509 = vmatprep.subr.bf16.mxu0 0
        %1510 = vmatpush1.bf16.msra.mxu0 0
        %1511 = vmatprep.mubr.bf16.mxu0 0
        %1512 = vmatmul.mubr.bf16.gmra.mrb[0].mxu0 %v1421
        %v1513 = vpop.f32.mrb[0].mxu0
        %v1514 = vadd.f32 0.0, %v1513
        %v1515 = vpop.f32.mrb[0].mxu0
        %v1516 = vpop.f32.mrb[0].mxu0
        %v1517 = vadd.f32 0.0, %v1516
        %v1518 = vpop.f32.mrb[0].mxu0
        %1519 = vmatprep.mubr.bf16.mxu0 0
        %1520 = vmatmul.mubr.bf16.gmra.mrb[0].mxu0 %v1424
        %v1521 = vpop.f32.mrb[0].mxu0
        %v1522 = vadd.f32 0.0, %v1521
        %v1523 = vpop.f32.mrb[0].mxu0
        %v1524 = vpop.f32.mrb[0].mxu0
        %v1525 = vadd.f32 0.0, %v1524
        %v1526 = vpop.f32.mrb[0].mxu0
        %1527 = vdwg.mxu0
        %v1528 = vadd.f32 %v1391, %v1461
        %v1529 = vadd.f32 %v1392, %v1463
        %v1530 = vadd.f32 %v1393, %v1514
        %v1531 = vadd.f32 %v1394, %v1465
        %v1532 = vadd.f32 %v1395, %v1467
        %v1533 = vadd.f32 %v1396, %v1517
        %v1534 = vadd.f32 %v1397, %v1471
        %v1535 = vadd.f32 %v1398, %v1473
        %v1536 = vadd.f32 %v1399, %v1522
        %v1537 = vadd.f32 %v1400, %v1475
        %v1538 = vadd.f32 %v1401, %v1477
        %v1539 = vadd.f32 %v1402, %v1525
        %v1540 = vld [vmem:[%s809 + $0x10] sm:$0xff]
        %v1541 = vld [vmem:[%s809 + $0x18] sm:$0xff]
        %v1542 = vld [vmem:[%s809 + $0x20] sm:$0xff]
        %v1543 = vld [vmem:[%s809 + $0x28] sm:$0xff]
        %1545 = vset.pattern.permute.xlu0 0
        %1546 = vperm.xlu0 %1545, %v1540
        %v1547 = vpop.permute.xlu0 %1546
        %1550 = vset.pattern.permute.xlu0 0
        %1551 = vperm.xlu0 %1550, %v1541
        %v1552 = vpop.permute.xlu0 %1551
        %1555 = vset.pattern.permute.xlu0 0
        %1556 = vperm.xlu0 %1555, %v1542
        %v1557 = vpop.permute.xlu0 %1556
        %1560 = vset.pattern.permute.xlu0 0
        %1561 = vperm.xlu0 %1560, %v1543
        %v1562 = vpop.permute.xlu0 %1561
        %v1564 = vadd.f32 %v1528, %v1547
        %v1565 = vadd.f32 %v1529, %v1547
        %v1566 = vadd.f32 %v1530, %v1547
        %v1567 = vadd.f32 %v1531, %v1552
        %v1568 = vadd.f32 %v1532, %v1552
        %v1569 = vadd.f32 %v1533, %v1552
        %v1570 = vadd.f32 %v1534, %v1557
        %v1571 = vadd.f32 %v1535, %v1557
        %v1572 = vadd.f32 %v1536, %v1557
        %v1573 = vadd.f32 %v1537, %v1562
        %v1574 = vadd.f32 %v1538, %v1562
        %v1575 = vadd.f32 %v1539, %v1562
        %v1576 = vmax.f32 %v1564, 0.0
        %v1577 = vmax.f32 %v1565, 0.0
        %v1578 = vmax.f32 %v1566, 0.0
        %v1579 = vmax.f32 %v1567, 0.0
        %v1580 = vmax.f32 %v1568, 0.0
        %v1581 = vmax.f32 %v1569, 0.0
        %v1582 = vmax.f32 %v1570, 0.0
        %v1583 = vmax.f32 %v1571, 0.0
        %v1584 = vmax.f32 %v1572, 0.0
        %v1585 = vmax.f32 %v1573, 0.0
        %v1586 = vmax.f32 %v1574, 0.0
        %v1587 = vmax.f32 %v1575, 0.0
        %v1588 = vmul.f32 %v1576, %v242
        %v1589 = vmul.f32 %v1577, %v243
        %v1590 = vmul.f32 %v1578, %v244
        %v1591 = vmul.f32 %v1579, %v242
        %v1592 = vmul.f32 %v1580, %v243
        %v1593 = vmul.f32 %v1581, %v244
        %v1594 = vmul.f32 %v1582, %v242
        %v1595 = vmul.f32 %v1583, %v243
        %v1596 = vmul.f32 %v1584, %v244
        %v1597 = vmul.f32 %v1585, %v242
        %v1598 = vmul.f32 %v1586, %v243
        %v1599 = vmul.f32 %v1587, %v244
        %1612 = vrot.lane.b32.xlu0 %v1588, 2
        %v1613 = vpop.permute.xlu0 %1612
        %1614 = vrot.lane.b32.xlu0 %v1589, 2
        %v1615 = vpop.permute.xlu0 %1614
        %1616 = vrot.lane.b32.xlu0 %v1590, 2
        %v1617 = vpop.permute.xlu0 %1616
        %1618 = vrot.lane.b32.xlu0 %v1591, 2
        %v1619 = vpop.permute.xlu0 %1618
        %1620 = vrot.lane.b32.xlu0 %v1592, 2
        %v1621 = vpop.permute.xlu0 %1620
        %1622 = vrot.lane.b32.xlu0 %v1593, 2
        %v1623 = vpop.permute.xlu0 %1622
        %1624 = vrot.lane.b32.xlu0 %v1594, 2
        %v1625 = vpop.permute.xlu0 %1624
        %1626 = vrot.lane.b32.xlu0 %v1595, 2
        %v1627 = vpop.permute.xlu0 %1626
        %1628 = vrot.lane.b32.xlu0 %v1596, 2
        %v1629 = vpop.permute.xlu0 %1628
        %1630 = vrot.lane.b32.xlu0 %v1597, 2
        %v1631 = vpop.permute.xlu0 %1630
        %1632 = vrot.lane.b32.xlu0 %v1598, 2
        %v1633 = vpop.permute.xlu0 %1632
        %1634 = vrot.lane.b32.xlu0 %v1599, 2
        %v1635 = vpop.permute.xlu0 %1634
        %v1636 = vsel %vm858, %v1613, %v1615
        %v1637 = vsel %vm858, %v1615, %v1617
        %v1638 = vsel %vm858, %v1619, %v1621
        %v1639 = vsel %vm858, %v1621, %v1623
        %v1640 = vsel %vm858, %v1625, %v1627
        %v1641 = vsel %vm858, %v1627, %v1629
        %v1642 = vsel %vm858, %v1631, %v1633
        %v1643 = vsel %vm858, %v1633, %v1635
        %1656 = vst.msk [vmem:[#allocation2] sm:$0xff] %vm869, %v1613
        %1657 = vst [vmem:[#allocation2 + $0x8] sm:$0xff] %v1636
        %1658 = vst.msk [vmem:[#allocation2 + $0x10] sm:$0xff] %vm872, %v1637
        %1659 = vst.msk [vmem:[#allocation2 + $0x18] sm:$0xff] %vm869, %v1619
        %1660 = vst [vmem:[#allocation2 + $0x20] sm:$0xff] %v1638
        %1661 = vst.msk [vmem:[#allocation2 + $0x28] sm:$0xff] %vm872, %v1639
        %1662 = vst.msk [vmem:[#allocation2 + $0x30] sm:$0xff] %vm869, %v1625
        %1663 = vst [vmem:[#allocation2 + $0x38] sm:$0xff] %v1640
        %1664 = vst.msk [vmem:[#allocation2 + $0x40] sm:$0xff] %vm872, %v1641
        %1665 = vst.msk [vmem:[#allocation2 + $0x48] sm:$0xff] %vm869, %v1631
        %1666 = vst [vmem:[#allocation2 + $0x50] sm:$0xff] %v1642
        %1667 = vst.msk [vmem:[#allocation2 + $0x58] sm:$0xff] %vm872, %v1643
        %v1668 = vld [vmem:[#allocation5 + $0x30] sm:$0xff]
        %v1669 = vld [vmem:[#allocation5 + $0x38] sm:$0xff]
        %v1670 = vpack.c.bf16 %v1669, %v1668
        %v1671 = vld [vmem:[#allocation2] sm:$0xff]
        %v1672 = vld [vmem:[#allocation2 + $0x8] sm:$0xff]
        %v1673 = vld [vmem:[#allocation2 + $0x10] sm:$0xff]
        %v1674 = vld [vmem:[#allocation2 + $0x18] sm:$0xff]
        %v1675 = vld [vmem:[#allocation2 + $0x20] sm:$0xff]
        %v1676 = vld [vmem:[#allocation2 + $0x28] sm:$0xff]
        %v1677 = vld [vmem:[#allocation2 + $0x30] sm:$0xff]
        %v1678 = vld [vmem:[#allocation2 + $0x38] sm:$0xff]
        %v1679 = vld [vmem:[#allocation2 + $0x40] sm:$0xff]
        %v1680 = vld [vmem:[#allocation2 + $0x48] sm:$0xff]
        %v1681 = vld [vmem:[#allocation2 + $0x50] sm:$0xff]
        %v1682 = vld [vmem:[#allocation2 + $0x58] sm:$0xff]
        %v1683 = vpack.c.bf16 %v1674, %v1671
        %v1684 = vpack.c.bf16 %v1675, %v1672
        %v1685 = vpack.c.bf16 %v1676, %v1673
        %v1686 = vpack.c.bf16 %v1680, %v1677
        %v1687 = vpack.c.bf16 %v1681, %v1678
        %v1688 = vpack.c.bf16 %v1682, %v1679
        %v1689 = vld [vmem:[%s254 + $0x30] sm:$0xff]
        %v1690 = vld [vmem:[%s254 + $0x38] sm:$0xff]
        %v1691 = vpack.c.bf16 %v1690, %v1689
        %1698 = vrot.lane.b32.xlu0 %v1683, 127
        %v1699 = vpop.permute.xlu0 %1698
        %1700 = vrot.lane.b32.xlu0 %v1684, 127
        %v1701 = vpop.permute.xlu0 %1700
        %1702 = vrot.lane.b32.xlu0 %v1685, 127
        %v1703 = vpop.permute.xlu0 %1702
        %1704 = vrot.lane.b32.xlu0 %v1686, 127
        %v1705 = vpop.permute.xlu0 %1704
        %1706 = vrot.lane.b32.xlu0 %v1687, 127
        %v1707 = vpop.permute.xlu0 %1706
        %1708 = vrot.lane.b32.xlu0 %v1688, 127
        %v1709 = vpop.permute.xlu0 %1708
        %v1710 = vsel %vm267, %v1699, %v1701
        %v1711 = vsel %vm267, %v1701, %v1703
        %v1712 = vsel %vm267, %v1705, %v1707
        %v1713 = vsel %vm267, %v1707, %v1709
        %vm1720 = vcmask 261120
        %v1722 = vsel %vm1720, %v1691, 0
        %1724 = vmatprep.subr.bf16.mxu0 %v1711
        %1725 = vmatpush1.bf16.msra.mxu0 %v1710
        %1726 = vmatprep.subr.bf16.mxu0 %v1713
        %1727 = vmatpush1.bf16.msra.mxu0 %v1712
        %1728 = vmatprep.subr.bf16.mxu0 0
        %1729 = vmatpush1.bf16.msra.mxu0 0
        %1730 = vmatprep.subr.bf16.mxu0 0
        %1731 = vmatpush1.bf16.msra.mxu0 0
        %1732 = vmatprep.subr.bf16.mxu0 0
        %1733 = vmatpush1.bf16.msra.mxu0 0
        %1734 = vmatprep.subr.bf16.mxu0 0
        %1735 = vmatpush1.bf16.msra.mxu0 0
        %1736 = vmatprep.subr.bf16.mxu0 0
        %1737 = vmatpush1.bf16.msra.mxu0 0
        %1738 = vmatprep.subr.bf16.mxu0 0
        %1739 = vmatpush1.bf16.msra.mxu0 0
        %1740 = vmatprep.subr.bf16.mxu0 0
        %1741 = vmatpush1.bf16.msra.mxu0 0
        %1742 = vmatprep.subr.bf16.mxu0 0
        %1743 = vmatpush1.bf16.msra.mxu0 0
        %1744 = vmatprep.subr.bf16.mxu0 0
        %1745 = vmatpush1.bf16.msra.mxu0 0
        %1746 = vmatprep.subr.bf16.mxu0 0
        %1747 = vmatpush1.bf16.msra.mxu0 0
        %1748 = vmatprep.subr.bf16.mxu0 0
        %1749 = vmatpush1.bf16.msra.mxu0 0
        %1750 = vmatprep.subr.bf16.mxu0 0
        %1751 = vmatpush1.bf16.msra.mxu0 0
        %1752 = vmatprep.subr.bf16.mxu0 0
        %1753 = vmatpush1.bf16.msra.mxu0 0
        %1754 = vmatprep.subr.bf16.mxu0 0
        %1755 = vmatpush1.bf16.msra.mxu0 0
        %1756 = vmatprep.mubr.bf16.mxu0 0
        %1757 = vmatmul.mubr.bf16.gmra.mrb[0].mxu0 %v1722
        %v1758 = vpop.f32.mrb[0].mxu0
        %v1759 = vadd.f32 0.0, %v1758
        %v1760 = vpop.f32.mrb[0].mxu0
        %v1761 = vadd.f32 0.0, %v1760
        %v1762 = vpop.f32.mrb[0].mxu0
        %v1763 = vadd.f32 0.0, %v1762
        %v1764 = vpop.f32.mrb[0].mxu0
        %v1765 = vadd.f32 0.0, %v1764
        %1766 = vdwg.mxu0
        %1767 = vmatprep.subr.bf16.mxu0 0
        %1768 = vmatpush1.bf16.msra.mxu0 %v1703
        %1769 = vmatprep.subr.bf16.mxu0 0
        %1770 = vmatpush1.bf16.msra.mxu0 %v1709
        %1771 = vmatprep.subr.bf16.mxu0 0
        %1772 = vmatpush1.bf16.msra.mxu0 0
        %1773 = vmatprep.subr.bf16.mxu0 0
        %1774 = vmatpush1.bf16.msra.mxu0 0
        %1775 = vmatprep.subr.bf16.mxu0 0
        %1776 = vmatpush1.bf16.msra.mxu0 0
        %1777 = vmatprep.subr.bf16.mxu0 0
        %1778 = vmatpush1.bf16.msra.mxu0 0
        %1779 = vmatprep.subr.bf16.mxu0 0
        %1780 = vmatpush1.bf16.msra.mxu0 0
        %1781 = vmatprep.subr.bf16.mxu0 0
        %1782 = vmatpush1.bf16.msra.mxu0 0
        %1783 = vmatprep.subr.bf16.mxu0 0
        %1784 = vmatpush1.bf16.msra.mxu0 0
        %1785 = vmatprep.subr.bf16.mxu0 0
        %1786 = vmatpush1.bf16.msra.mxu0 0
        %1787 = vmatprep.subr.bf16.mxu0 0
        %1788 = vmatpush1.bf16.msra.mxu0 0
        %1789 = vmatprep.subr.bf16.mxu0 0
        %1790 = vmatpush1.bf16.msra.mxu0 0
        %1791 = vmatprep.subr.bf16.mxu0 0
        %1792 = vmatpush1.bf16.msra.mxu0 0
        %1793 = vmatprep.subr.bf16.mxu0 0
        %1794 = vmatpush1.bf16.msra.mxu0 0
        %1795 = vmatprep.subr.bf16.mxu0 0
        %1796 = vmatpush1.bf16.msra.mxu0 0
        %1797 = vmatprep.subr.bf16.mxu0 0
        %1798 = vmatpush1.bf16.msra.mxu0 0
        %1799 = vmatprep.mubr.bf16.mxu0 0
        %1800 = vmatmul.mubr.bf16.gmra.mrb[0].mxu0 %v1722
        %v1801 = vpop.f32.mrb[0].mxu0
        %v1802 = vadd.f32 0.0, %v1801
        %v1803 = vpop.f32.mrb[0].mxu0
        %v1804 = vpop.f32.mrb[0].mxu0
        %v1805 = vadd.f32 0.0, %v1804
        %v1806 = vpop.f32.mrb[0].mxu0
        %1807 = vdwg.mxu0
        %v1809 = vsel %vm1720, %v1670, 0
        %1811 = vmatprep.subr.bf16.mxu0 %v1684
        %1812 = vmatpush1.bf16.msra.mxu0 %v1683
        %1813 = vmatprep.subr.bf16.mxu0 %v1687
        %1814 = vmatpush1.bf16.msra.mxu0 %v1686
        %1815 = vmatprep.subr.bf16.mxu0 0
        %1816 = vmatpush1.bf16.msra.mxu0 0
        %1817 = vmatprep.subr.bf16.mxu0 0
        %1818 = vmatpush1.bf16.msra.mxu0 0
        %1819 = vmatprep.subr.bf16.mxu0 0
        %1820 = vmatpush1.bf16.msra.mxu0 0
        %1821 = vmatprep.subr.bf16.mxu0 0
        %1822 = vmatpush1.bf16.msra.mxu0 0
        %1823 = vmatprep.subr.bf16.mxu0 0
        %1824 = vmatpush1.bf16.msra.mxu0 0
        %1825 = vmatprep.subr.bf16.mxu0 0
        %1826 = vmatpush1.bf16.msra.mxu0 0
        %1827 = vmatprep.subr.bf16.mxu0 0
        %1828 = vmatpush1.bf16.msra.mxu0 0
        %1829 = vmatprep.subr.bf16.mxu0 0
        %1830 = vmatpush1.bf16.msra.mxu0 0
        %1831 = vmatprep.subr.bf16.mxu0 0
        %1832 = vmatpush1.bf16.msra.mxu0 0
        %1833 = vmatprep.subr.bf16.mxu0 0
        %1834 = vmatpush1.bf16.msra.mxu0 0
        %1835 = vmatprep.subr.bf16.mxu0 0
        %1836 = vmatpush1.bf16.msra.mxu0 0
        %1837 = vmatprep.subr.bf16.mxu0 0
        %1838 = vmatpush1.bf16.msra.mxu0 0
        %1839 = vmatprep.subr.bf16.mxu0 0
        %1840 = vmatpush1.bf16.msra.mxu0 0
        %1841 = vmatprep.subr.bf16.mxu0 0
        %1842 = vmatpush1.bf16.msra.mxu0 0
        %1843 = vmatprep.mubr.bf16.mxu0 0
        %1844 = vmatmul.mubr.bf16.gmra.mrb[0].mxu0 %v1809
        %v1845 = vpop.f32.mrb[0].mxu0
        %v1846 = vadd.f32 %v1759, %v1845
        %v1847 = vpop.f32.mrb[0].mxu0
        %v1848 = vadd.f32 %v1761, %v1847
        %v1849 = vpop.f32.mrb[0].mxu0
        %v1850 = vadd.f32 %v1763, %v1849
        %v1851 = vpop.f32.mrb[0].mxu0
        %v1852 = vadd.f32 %v1765, %v1851
        %1853 = vdwg.mxu0
        %1854 = vmatprep.subr.bf16.mxu0 0
        %1855 = vmatpush1.bf16.msra.mxu0 %v1685
        %1856 = vmatprep.subr.bf16.mxu0 0
        %1857 = vmatpush1.bf16.msra.mxu0 %v1688
        %1858 = vmatprep.subr.bf16.mxu0 0
        %1859 = vmatpush1.bf16.msra.mxu0 0
        %1860 = vmatprep.subr.bf16.mxu0 0
        %1861 = vmatpush1.bf16.msra.mxu0 0
        %1862 = vmatprep.subr.bf16.mxu0 0
        %1863 = vmatpush1.bf16.msra.mxu0 0
        %1864 = vmatprep.subr.bf16.mxu0 0
        %1865 = vmatpush1.bf16.msra.mxu0 0
        %1866 = vmatprep.subr.bf16.mxu0 0
        %1867 = vmatpush1.bf16.msra.mxu0 0
        %1868 = vmatprep.subr.bf16.mxu0 0
        %1869 = vmatpush1.bf16.msra.mxu0 0
        %1870 = vmatprep.subr.bf16.mxu0 0
        %1871 = vmatpush1.bf16.msra.mxu0 0
        %1872 = vmatprep.subr.bf16.mxu0 0
        %1873 = vmatpush1.bf16.msra.mxu0 0
        %1874 = vmatprep.subr.bf16.mxu0 0
        %1875 = vmatpush1.bf16.msra.mxu0 0
        %1876 = vmatprep.subr.bf16.mxu0 0
        %1877 = vmatpush1.bf16.msra.mxu0 0
        %1878 = vmatprep.subr.bf16.mxu0 0
        %1879 = vmatpush1.bf16.msra.mxu0 0
        %1880 = vmatprep.subr.bf16.mxu0 0
        %1881 = vmatpush1.bf16.msra.mxu0 0
        %1882 = vmatprep.subr.bf16.mxu0 0
        %1883 = vmatpush1.bf16.msra.mxu0 0
        %1884 = vmatprep.subr.bf16.mxu0 0
        %1885 = vmatpush1.bf16.msra.mxu0 0
        %1886 = vmatprep.mubr.bf16.mxu0 0
        %1887 = vmatmul.mubr.bf16.gmra.mrb[0].mxu0 %v1809
        %v1888 = vpop.f32.mrb[0].mxu0
        %v1889 = vadd.f32 %v1802, %v1888
        %v1890 = vpop.f32.mrb[0].mxu0
        %v1891 = vpop.f32.mrb[0].mxu0
        %v1892 = vadd.f32 %v1805, %v1891
        %v1893 = vpop.f32.mrb[0].mxu0
        %1894 = vdwg.mxu0
        %v1895 = vld [vmem:[%s464 + $0x30] sm:$0xff]
        %v1896 = vld [vmem:[%s464 + $0x38] sm:$0xff]
        %v1897 = vpack.c.bf16 %v1896, %v1895
        %1898 = vrot.lane.b32.xlu0 %v1683, 126
        %v1899 = vpop.permute.xlu0 %1898
        %1900 = vrot.lane.b32.xlu0 %v1684, 126
        %v1901 = vpop.permute.xlu0 %1900
        %1902 = vrot.lane.b32.xlu0 %v1685, 126
        %v1903 = vpop.permute.xlu0 %1902
        %1904 = vrot.lane.b32.xlu0 %v1686, 126
        %v1905 = vpop.permute.xlu0 %1904
        %1906 = vrot.lane.b32.xlu0 %v1687, 126
        %v1907 = vpop.permute.xlu0 %1906
        %1908 = vrot.lane.b32.xlu0 %v1688, 126
        %v1909 = vpop.permute.xlu0 %1908
        %v1910 = vsel %vm474, %v1899, %v1901
        %v1911 = vsel %vm474, %v1901, %v1903
        %v1912 = vsel %vm474, %v1905, %v1907
        %v1913 = vsel %vm474, %v1907, %v1909
        %v1921 = vsel %vm1720, %v1897, 0
        %1923 = vmatprep.subr.bf16.mxu0 %v1911
        %1924 = vmatpush1.bf16.msra.mxu0 %v1910
        %1925 = vmatprep.subr.bf16.mxu0 %v1913
        %1926 = vmatpush1.bf16.msra.mxu0 %v1912
        %1927 = vmatprep.subr.bf16.mxu0 0
        %1928 = vmatpush1.bf16.msra.mxu0 0
        %1929 = vmatprep.subr.bf16.mxu0 0
        %1930 = vmatpush1.bf16.msra.mxu0 0
        %1931 = vmatprep.subr.bf16.mxu0 0
        %1932 = vmatpush1.bf16.msra.mxu0 0
        %1933 = vmatprep.subr.bf16.mxu0 0
        %1934 = vmatpush1.bf16.msra.mxu0 0
        %1935 = vmatprep.subr.bf16.mxu0 0
        %1936 = vmatpush1.bf16.msra.mxu0 0
        %1937 = vmatprep.subr.bf16.mxu0 0
        %1938 = vmatpush1.bf16.msra.mxu0 0
        %1939 = vmatprep.subr.bf16.mxu0 0
        %1940 = vmatpush1.bf16.msra.mxu0 0
        %1941 = vmatprep.subr.bf16.mxu0 0
        %1942 = vmatpush1.bf16.msra.mxu0 0
        %1943 = vmatprep.subr.bf16.mxu0 0
        %1944 = vmatpush1.bf16.msra.mxu0 0
        %1945 = vmatprep.subr.bf16.mxu0 0
        %1946 = vmatpush1.bf16.msra.mxu0 0
        %1947 = vmatprep.subr.bf16.mxu0 0
        %1948 = vmatpush1.bf16.msra.mxu0 0
        %1949 = vmatprep.subr.bf16.mxu0 0
        %1950 = vmatpush1.bf16.msra.mxu0 0
        %1951 = vmatprep.subr.bf16.mxu0 0
        %1952 = vmatpush1.bf16.msra.mxu0 0
        %1953 = vmatprep.subr.bf16.mxu0 0
        %1954 = vmatpush1.bf16.msra.mxu0 0
        %1955 = vmatprep.mubr.bf16.mxu0 0
        %1956 = vmatmul.mubr.bf16.gmra.mrb[0].mxu0 %v1921
        %v1957 = vpop.f32.mrb[0].mxu0
        %v1958 = vadd.f32 0.0, %v1957
        %v1959 = vpop.f32.mrb[0].mxu0
        %v1960 = vadd.f32 0.0, %v1959
        %v1961 = vpop.f32.mrb[0].mxu0
        %v1962 = vadd.f32 0.0, %v1961
        %v1963 = vpop.f32.mrb[0].mxu0
        %v1964 = vadd.f32 0.0, %v1963
        %1965 = vdwg.mxu0
        %1966 = vmatprep.subr.bf16.mxu0 0
        %1967 = vmatpush1.bf16.msra.mxu0 %v1903
        %1968 = vmatprep.subr.bf16.mxu0 0
        %1969 = vmatpush1.bf16.msra.mxu0 %v1909
        %1970 = vmatprep.subr.bf16.mxu0 0
        %1971 = vmatpush1.bf16.msra.mxu0 0
        %1972 = vmatprep.subr.bf16.mxu0 0
        %1973 = vmatpush1.bf16.msra.mxu0 0
        %1974 = vmatprep.subr.bf16.mxu0 0
        %1975 = vmatpush1.bf16.msra.mxu0 0
        %1976 = vmatprep.subr.bf16.mxu0 0
        %1977 = vmatpush1.bf16.msra.mxu0 0
        %1978 = vmatprep.subr.bf16.mxu0 0
        %1979 = vmatpush1.bf16.msra.mxu0 0
        %1980 = vmatprep.subr.bf16.mxu0 0
        %1981 = vmatpush1.bf16.msra.mxu0 0
        %1982 = vmatprep.subr.bf16.mxu0 0
        %1983 = vmatpush1.bf16.msra.mxu0 0
        %1984 = vmatprep.subr.bf16.mxu0 0
        %1985 = vmatpush1.bf16.msra.mxu0 0
        %1986 = vmatprep.subr.bf16.mxu0 0
        %1987 = vmatpush1.bf16.msra.mxu0 0
        %1988 = vmatprep.subr.bf16.mxu0 0
        %1989 = vmatpush1.bf16.msra.mxu0 0
        %1990 = vmatprep.subr.bf16.mxu0 0
        %1991 = vmatpush1.bf16.msra.mxu0 0
        %1992 = vmatprep.subr.bf16.mxu0 0
        %1993 = vmatpush1.bf16.msra.mxu0 0
        %1994 = vmatprep.subr.bf16.mxu0 0
        %1995 = vmatpush1.bf16.msra.mxu0 0
        %1996 = vmatprep.subr.bf16.mxu0 0
        %1997 = vmatpush1.bf16.msra.mxu0 0
        %1998 = vmatprep.mubr.bf16.mxu0 0
        %1999 = vmatmul.mubr.bf16.gmra.mrb[0].mxu0 %v1921
        %v2000 = vpop.f32.mrb[0].mxu0
        %v2001 = vadd.f32 0.0, %v2000
        %v2002 = vpop.f32.mrb[0].mxu0
        %v2003 = vpop.f32.mrb[0].mxu0
        %v2004 = vadd.f32 0.0, %v2003
        %v2005 = vpop.f32.mrb[0].mxu0
        %2006 = vdwg.mxu0
        %v2007 = vadd.f32 %v1846, %v1958
        %v2008 = vadd.f32 %v1848, %v1960
        %v2009 = vadd.f32 %v1889, %v2001
        %v2010 = vadd.f32 %v1850, %v1962
        %v2011 = vadd.f32 %v1852, %v1964
        %v2012 = vadd.f32 %v1892, %v2004
        %v2013 = vld [vmem:[%s579 + $0x30] sm:$0xff]
        %v2014 = vld [vmem:[%s579 + $0x38] sm:$0xff]
        %v2015 = vpack.c.bf16 %v2014, %v2013
        %2016 = vrot.lane.b32.xlu0 %v1683, 125
        %v2017 = vpop.permute.xlu0 %2016
        %2018 = vrot.lane.b32.xlu0 %v1684, 125
        %v2019 = vpop.permute.xlu0 %2018
        %2020 = vrot.lane.b32.xlu0 %v1685, 125
        %v2021 = vpop.permute.xlu0 %2020
        %2022 = vrot.lane.b32.xlu0 %v1686, 125
        %v2023 = vpop.permute.xlu0 %2022
        %2024 = vrot.lane.b32.xlu0 %v1687, 125
        %v2025 = vpop.permute.xlu0 %2024
        %2026 = vrot.lane.b32.xlu0 %v1688, 125
        %v2027 = vpop.permute.xlu0 %2026
        %v2028 = vsel %vm589, %v2017, %v2019
        %v2029 = vsel %vm589, %v2019, %v2021
        %v2030 = vsel %vm589, %v2023, %v2025
        %v2031 = vsel %vm589, %v2025, %v2027
        %v2039 = vsel %vm1720, %v2015, 0
        %2041 = vmatprep.subr.bf16.mxu0 %v2029
        %2042 = vmatpush1.bf16.msra.mxu0 %v2028
        %2043 = vmatprep.subr.bf16.mxu0 %v2031
        %2044 = vmatpush1.bf16.msra.mxu0 %v2030
        %2045 = vmatprep.subr.bf16.mxu0 0
        %2046 = vmatpush1.bf16.msra.mxu0 0
        %2047 = vmatprep.subr.bf16.mxu0 0
        %2048 = vmatpush1.bf16.msra.mxu0 0
        %2049 = vmatprep.subr.bf16.mxu0 0
        %2050 = vmatpush1.bf16.msra.mxu0 0
        %2051 = vmatprep.subr.bf16.mxu0 0
        %2052 = vmatpush1.bf16.msra.mxu0 0
        %2053 = vmatprep.subr.bf16.mxu0 0
        %2054 = vmatpush1.bf16.msra.mxu0 0
        %2055 = vmatprep.subr.bf16.mxu0 0
        %2056 = vmatpush1.bf16.msra.mxu0 0
        %2057 = vmatprep.subr.bf16.mxu0 0
        %2058 = vmatpush1.bf16.msra.mxu0 0
        %2059 = vmatprep.subr.bf16.mxu0 0
        %2060 = vmatpush1.bf16.msra.mxu0 0
        %2061 = vmatprep.subr.bf16.mxu0 0
        %2062 = vmatpush1.bf16.msra.mxu0 0
        %2063 = vmatprep.subr.bf16.mxu0 0
        %2064 = vmatpush1.bf16.msra.mxu0 0
        %2065 = vmatprep.subr.bf16.mxu0 0
        %2066 = vmatpush1.bf16.msra.mxu0 0
        %2067 = vmatprep.subr.bf16.mxu0 0
        %2068 = vmatpush1.bf16.msra.mxu0 0
        %2069 = vmatprep.subr.bf16.mxu0 0
        %2070 = vmatpush1.bf16.msra.mxu0 0
        %2071 = vmatprep.subr.bf16.mxu0 0
        %2072 = vmatpush1.bf16.msra.mxu0 0
        %2073 = vmatprep.mubr.bf16.mxu0 0
        %2074 = vmatmul.mubr.bf16.gmra.mrb[0].mxu0 %v2039
        %v2075 = vpop.f32.mrb[0].mxu0
        %v2076 = vadd.f32 0.0, %v2075
        %v2077 = vpop.f32.mrb[0].mxu0
        %v2078 = vadd.f32 0.0, %v2077
        %v2079 = vpop.f32.mrb[0].mxu0
        %v2080 = vadd.f32 0.0, %v2079
        %v2081 = vpop.f32.mrb[0].mxu0
        %v2082 = vadd.f32 0.0, %v2081
        %2083 = vdwg.mxu0
        %2084 = vmatprep.subr.bf16.mxu0 0
        %2085 = vmatpush1.bf16.msra.mxu0 %v2021
        %2086 = vmatprep.subr.bf16.mxu0 0
        %2087 = vmatpush1.bf16.msra.mxu0 %v2027
        %2088 = vmatprep.subr.bf16.mxu0 0
        %2089 = vmatpush1.bf16.msra.mxu0 0
        %2090 = vmatprep.subr.bf16.mxu0 0
        %2091 = vmatpush1.bf16.msra.mxu0 0
        %2092 = vmatprep.subr.bf16.mxu0 0
        %2093 = vmatpush1.bf16.msra.mxu0 0
        %2094 = vmatprep.subr.bf16.mxu0 0
        %2095 = vmatpush1.bf16.msra.mxu0 0
        %2096 = vmatprep.subr.bf16.mxu0 0
        %2097 = vmatpush1.bf16.msra.mxu0 0
        %2098 = vmatprep.subr.bf16.mxu0 0
        %2099 = vmatpush1.bf16.msra.mxu0 0
        %2100 = vmatprep.subr.bf16.mxu0 0
        %2101 = vmatpush1.bf16.msra.mxu0 0
        %2102 = vmatprep.subr.bf16.mxu0 0
        %2103 = vmatpush1.bf16.msra.mxu0 0
        %2104 = vmatprep.subr.bf16.mxu0 0
        %2105 = vmatpush1.bf16.msra.mxu0 0
        %2106 = vmatprep.subr.bf16.mxu0 0
        %2107 = vmatpush1.bf16.msra.mxu0 0
        %2108 = vmatprep.subr.bf16.mxu0 0
        %2109 = vmatpush1.bf16.msra.mxu0 0
        %2110 = vmatprep.subr.bf16.mxu0 0
        %2111 = vmatpush1.bf16.msra.mxu0 0
        %2112 = vmatprep.subr.bf16.mxu0 0
        %2113 = vmatpush1.bf16.msra.mxu0 0
        %2114 = vmatprep.subr.bf16.mxu0 0
        %2115 = vmatpush1.bf16.msra.mxu0 0
        %2116 = vmatprep.mubr.bf16.mxu0 0
        %2117 = vmatmul.mubr.bf16.gmra.mrb[0].mxu0 %v2039
        %v2118 = vpop.f32.mrb[0].mxu0
        %v2119 = vadd.f32 0.0, %v2118
        %v2120 = vpop.f32.mrb[0].mxu0
        %v2121 = vpop.f32.mrb[0].mxu0
        %v2122 = vadd.f32 0.0, %v2121
        %v2123 = vpop.f32.mrb[0].mxu0
        %2124 = vdwg.mxu0
        %v2125 = vadd.f32 %v2007, %v2076
        %v2126 = vadd.f32 %v2008, %v2078
        %v2127 = vadd.f32 %v2009, %v2119
        %v2128 = vadd.f32 %v2010, %v2080
        %v2129 = vadd.f32 %v2011, %v2082
        %v2130 = vadd.f32 %v2012, %v2122
        %v2131 = vld [vmem:[%s694 + $0x30] sm:$0xff]
        %v2132 = vld [vmem:[%s694 + $0x38] sm:$0xff]
        %v2133 = vpack.c.bf16 %v2132, %v2131
        %2134 = vrot.lane.b32.xlu0 %v1683, 124
        %v2135 = vpop.permute.xlu0 %2134
        %2136 = vrot.lane.b32.xlu0 %v1684, 124
        %v2137 = vpop.permute.xlu0 %2136
        %2138 = vrot.lane.b32.xlu0 %v1685, 124
        %v2139 = vpop.permute.xlu0 %2138
        %2140 = vrot.lane.b32.xlu0 %v1686, 124
        %v2141 = vpop.permute.xlu0 %2140
        %2142 = vrot.lane.b32.xlu0 %v1687, 124
        %v2143 = vpop.permute.xlu0 %2142
        %2144 = vrot.lane.b32.xlu0 %v1688, 124
        %v2145 = vpop.permute.xlu0 %2144
        %v2146 = vsel %vm704, %v2135, %v2137
        %v2147 = vsel %vm704, %v2137, %v2139
        %v2148 = vsel %vm704, %v2141, %v2143
        %v2149 = vsel %vm704, %v2143, %v2145
        %v2157 = vsel %vm1720, %v2133, 0
        %2159 = vmatprep.subr.bf16.mxu0 %v2147
        %2160 = vmatpush1.bf16.msra.mxu0 %v2146
        %2161 = vmatprep.subr.bf16.mxu0 %v2149
        %2162 = vmatpush1.bf16.msra.mxu0 %v2148
        %2163 = vmatprep.subr.bf16.mxu0 0
        %2164 = vmatpush1.bf16.msra.mxu0 0
        %2165 = vmatprep.subr.bf16.mxu0 0
        %2166 = vmatpush1.bf16.msra.mxu0 0
        %2167 = vmatprep.subr.bf16.mxu0 0
        %2168 = vmatpush1.bf16.msra.mxu0 0
        %2169 = vmatprep.subr.bf16.mxu0 0
        %2170 = vmatpush1.bf16.msra.mxu0 0
        %2171 = vmatprep.subr.bf16.mxu0 0
        %2172 = vmatpush1.bf16.msra.mxu0 0
        %2173 = vmatprep.subr.bf16.mxu0 0
        %2174 = vmatpush1.bf16.msra.mxu0 0
        %2175 = vmatprep.subr.bf16.mxu0 0
        %2176 = vmatpush1.bf16.msra.mxu0 0
        %2177 = vmatprep.subr.bf16.mxu0 0
        %2178 = vmatpush1.bf16.msra.mxu0 0
        %2179 = vmatprep.subr.bf16.mxu0 0
        %2180 = vmatpush1.bf16.msra.mxu0 0
        %2181 = vmatprep.subr.bf16.mxu0 0
        %2182 = vmatpush1.bf16.msra.mxu0 0
        %2183 = vmatprep.subr.bf16.mxu0 0
        %2184 = vmatpush1.bf16.msra.mxu0 0
        %2185 = vmatprep.subr.bf16.mxu0 0
        %2186 = vmatpush1.bf16.msra.mxu0 0
        %2187 = vmatprep.subr.bf16.mxu0 0
        %2188 = vmatpush1.bf16.msra.mxu0 0
        %2189 = vmatprep.subr.bf16.mxu0 0
        %2190 = vmatpush1.bf16.msra.mxu0 0
        %2191 = vmatprep.mubr.bf16.mxu0 0
        %2192 = vmatmul.mubr.bf16.gmra.mrb[0].mxu0 %v2157
        %v2193 = vpop.f32.mrb[0].mxu0
        %v2194 = vadd.f32 0.0, %v2193
        %v2195 = vpop.f32.mrb[0].mxu0
        %v2196 = vadd.f32 0.0, %v2195
        %v2197 = vpop.f32.mrb[0].mxu0
        %v2198 = vadd.f32 0.0, %v2197
        %v2199 = vpop.f32.mrb[0].mxu0
        %v2200 = vadd.f32 0.0, %v2199
        %2201 = vdwg.mxu0
        %2202 = vmatprep.subr.bf16.mxu0 0
        %2203 = vmatpush1.bf16.msra.mxu0 %v2139
        %2204 = vmatprep.subr.bf16.mxu0 0
        %2205 = vmatpush1.bf16.msra.mxu0 %v2145
        %2206 = vmatprep.subr.bf16.mxu0 0
        %2207 = vmatpush1.bf16.msra.mxu0 0
        %2208 = vmatprep.subr.bf16.mxu0 0
        %2209 = vmatpush1.bf16.msra.mxu0 0
        %2210 = vmatprep.subr.bf16.mxu0 0
        %2211 = vmatpush1.bf16.msra.mxu0 0
        %2212 = vmatprep.subr.bf16.mxu0 0
        %2213 = vmatpush1.bf16.msra.mxu0 0
        %2214 = vmatprep.subr.bf16.mxu0 0
        %2215 = vmatpush1.bf16.msra.mxu0 0
        %2216 = vmatprep.subr.bf16.mxu0 0
        %2217 = vmatpush1.bf16.msra.mxu0 0
        %2218 = vmatprep.subr.bf16.mxu0 0
        %2219 = vmatpush1.bf16.msra.mxu0 0
        %2220 = vmatprep.subr.bf16.mxu0 0
        %2221 = vmatpush1.bf16.msra.mxu0 0
        %2222 = vmatprep.subr.bf16.mxu0 0
        %2223 = vmatpush1.bf16.msra.mxu0 0
        %2224 = vmatprep.subr.bf16.mxu0 0
        %2225 = vmatpush1.bf16.msra.mxu0 0
        %2226 = vmatprep.subr.bf16.mxu0 0
        %2227 = vmatpush1.bf16.msra.mxu0 0
        %2228 = vmatprep.subr.bf16.mxu0 0
        %2229 = vmatpush1.bf16.msra.mxu0 0
        %2230 = vmatprep.subr.bf16.mxu0 0
        %2231 = vmatpush1.bf16.msra.mxu0 0
        %2232 = vmatprep.subr.bf16.mxu0 0
        %2233 = vmatpush1.bf16.msra.mxu0 0
        %2234 = vmatprep.mubr.bf16.mxu0 0
        %2235 = vmatmul.mubr.bf16.gmra.mrb[0].mxu0 %v2157
        %v2236 = vpop.f32.mrb[0].mxu0
        %v2237 = vadd.f32 0.0, %v2236
        %v2238 = vpop.f32.mrb[0].mxu0
        %v2239 = vpop.f32.mrb[0].mxu0
        %v2240 = vadd.f32 0.0, %v2239
        %v2241 = vpop.f32.mrb[0].mxu0
        %2242 = vdwg.mxu0
        %v2243 = vadd.f32 %v2125, %v2194
        %v2244 = vadd.f32 %v2126, %v2196
        %v2245 = vadd.f32 %v2127, %v2237
        %v2246 = vadd.f32 %v2128, %v2198
        %v2247 = vadd.f32 %v2129, %v2200
        %v2248 = vadd.f32 %v2130, %v2240
        %v2249 = vld [vmem:[%s809 + $0x30] sm:$0xff]
        %v2250 = vld [vmem:[%s809 + $0x38] sm:$0xff]
        %2252 = vset.pattern.permute.xlu0 0
        %2253 = vperm.xlu0 %2252, %v2249
        %v2254 = vpop.permute.xlu0 %2253
        %2257 = vset.pattern.permute.xlu0 0
        %2258 = vperm.xlu0 %2257, %v2250
        %v2259 = vpop.permute.xlu0 %2258
        %v2261 = vadd.f32 %v2243, %v2254
        %v2262 = vadd.f32 %v2244, %v2254
        %v2263 = vadd.f32 %v2245, %v2254
        %v2264 = vadd.f32 %v2246, %v2259
        %v2265 = vadd.f32 %v2247, %v2259
        %v2266 = vadd.f32 %v2248, %v2259
        %v2267 = vmax.f32 %v2261, 0.0
        %v2268 = vmax.f32 %v2262, 0.0
        %v2269 = vmax.f32 %v2263, 0.0
        %v2270 = vmax.f32 %v2264, 0.0
        %v2271 = vmax.f32 %v2265, 0.0
        %v2272 = vmax.f32 %v2266, 0.0
        %v2273 = vmul.f32 %v2267, %v242
        %v2274 = vmul.f32 %v2268, %v243
        %v2275 = vmul.f32 %v2269, %v244
        %v2276 = vmul.f32 %v2270, %v242
        %v2277 = vmul.f32 %v2271, %v243
        %v2278 = vmul.f32 %v2272, %v244
        %2285 = vrot.lane.b32.xlu0 %v2273, 2
        %v2286 = vpop.permute.xlu0 %2285
        %2287 = vrot.lane.b32.xlu0 %v2274, 2
        %v2288 = vpop.permute.xlu0 %2287
        %2289 = vrot.lane.b32.xlu0 %v2275, 2
        %v2290 = vpop.permute.xlu0 %2289
        %2291 = vrot.lane.b32.xlu0 %v2276, 2
        %v2292 = vpop.permute.xlu0 %2291
        %2293 = vrot.lane.b32.xlu0 %v2277, 2
        %v2294 = vpop.permute.xlu0 %2293
        %2295 = vrot.lane.b32.xlu0 %v2278, 2
        %v2296 = vpop.permute.xlu0 %2295
        %v2297 = vsel %vm858, %v2286, %v2288
        %v2298 = vsel %vm858, %v2288, %v2290
        %v2299 = vsel %vm858, %v2292, %v2294
        %v2300 = vsel %vm858, %v2294, %v2296
        %2307 = vst.msk [vmem:[#allocation2] sm:$0xff] %vm869, %v2286
        %2308 = vst [vmem:[#allocation2 + $0x8] sm:$0xff] %v2297
        %2309 = vst.msk [vmem:[#allocation2 + $0x10] sm:$0xff] %vm872, %v2298
        %2310 = vst.msk [vmem:[#allocation2 + $0x18] sm:$0xff] %vm869, %v2292
        %2311 = vst [vmem:[#allocation2 + $0x20] sm:$0xff] %v2299
        %2312 = vst.msk [vmem:[#allocation2 + $0x28] sm:$0xff] %vm872, %v2300
        %v2313 = vld [vmem:[#allocation5 + $0x40] sm:$0xff]
        %v2314 = vpack.c.bf16 %v2313, %v2313
        %v2315 = vld [vmem:[#allocation2] sm:$0xff]
        %v2316 = vld [vmem:[#allocation2 + $0x8] sm:$0xff]
        %v2317 = vld [vmem:[#allocation2 + $0x10] sm:$0xff]
        %v2318 = vld [vmem:[#allocation2 + $0x18] sm:$0xff]
        %v2319 = vld [vmem:[#allocation2 + $0x20] sm:$0xff]
        %v2320 = vld [vmem:[#allocation2 + $0x28] sm:$0xff]
        %v2321 = vpack.c.bf16 %v2318, %v2315
        %v2322 = vpack.c.bf16 %v2319, %v2316
        %v2323 = vpack.c.bf16 %v2320, %v2317
        %v2324 = vld [vmem:[%s254 + $0x40] sm:$0xff]
        %v2325 = vpack.c.bf16 %v2324, %v2324
        %2329 = vrot.lane.b32.xlu0 %v2321, 127
        %v2330 = vpop.permute.xlu0 %2329
        %2331 = vrot.lane.b32.xlu0 %v2322, 127
        %v2332 = vpop.permute.xlu0 %2331
        %2333 = vrot.lane.b32.xlu0 %v2323, 127
        %v2334 = vpop.permute.xlu0 %2333
        %v2335 = vsel %vm267, %v2330, %v2332
        %v2336 = vsel %vm267, %v2332, %v2334
        %v2341 = vsel %vm912, %v2325, 0
        %2343 = vmatprep.subr.bf16.mxu0 %v2336
        %2344 = vmatpush1.bf16.msra.mxu0 %v2335
        %2345 = vmatprep.subr.bf16.mxu0 0
        %2346 = vmatpush1.bf16.msra.mxu0 0
        %2347 = vmatprep.subr.bf16.mxu0 0
        %2348 = vmatpush1.bf16.msra.mxu0 0
        %2349 = vmatprep.subr.bf16.mxu0 0
        %2350 = vmatpush1.bf16.msra.mxu0 0
        %2351 = vmatprep.subr.bf16.mxu0 0
        %2352 = vmatpush1.bf16.msra.mxu0 0
        %2353 = vmatprep.subr.bf16.mxu0 0
        %2354 = vmatpush1.bf16.msra.mxu0 0
        %2355 = vmatprep.subr.bf16.mxu0 0
        %2356 = vmatpush1.bf16.msra.mxu0 0
        %2357 = vmatprep.subr.bf16.mxu0 0
        %2358 = vmatpush1.bf16.msra.mxu0 0
        %2359 = vmatprep.subr.bf16.mxu0 0
        %2360 = vmatpush1.bf16.msra.mxu0 0
        %2361 = vmatprep.subr.bf16.mxu0 0
        %2362 = vmatpush1.bf16.msra.mxu0 0
        %2363 = vmatprep.subr.bf16.mxu0 0
        %2364 = vmatpush1.bf16.msra.mxu0 0
        %2365 = vmatprep.subr.bf16.mxu0 0
        %2366 = vmatpush1.bf16.msra.mxu0 0
        %2367 = vmatprep.subr.bf16.mxu0 0
        %2368 = vmatpush1.bf16.msra.mxu0 0
        %2369 = vmatprep.subr.bf16.mxu0 0
        %2370 = vmatpush1.bf16.msra.mxu0 0
        %2371 = vmatprep.subr.bf16.mxu0 0
        %2372 = vmatpush1.bf16.msra.mxu0 0
        %2373 = vmatprep.subr.bf16.mxu0 0
        %2374 = vmatpush1.bf16.msra.mxu0 0
        %2375 = vmatprep.mubr.bf16.mxu0 0
        %2376 = vmatmul.mubr.bf16.gmra.mrb[0].mxu0 %v2341
        %v2377 = vpop.f32.mrb[0].mxu0
        %v2378 = vadd.f32 0.0, %v2377
        %v2379 = vpop.f32.mrb[0].mxu0
        %v2380 = vadd.f32 0.0, %v2379
        %v2381 = vpop.f32.mrb[0].mxu0
        %v2382 = vpop.f32.mrb[0].mxu0
        %2383 = vdwg.mxu0
        %2384 = vmatprep.subr.bf16.mxu0 0
        %2385 = vmatpush1.bf16.msra.mxu0 %v2334
        %2386 = vmatprep.subr.bf16.mxu0 0
        %2387 = vmatpush1.bf16.msra.mxu0 0
        %2388 = vmatprep.subr.bf16.mxu0 0
        %2389 = vmatpush1.bf16.msra.mxu0 0
        %2390 = vmatprep.subr.bf16.mxu0 0
        %2391 = vmatpush1.bf16.msra.mxu0 0
        %2392 = vmatprep.subr.bf16.mxu0 0
        %2393 = vmatpush1.bf16.msra.mxu0 0
        %2394 = vmatprep.subr.bf16.mxu0 0
        %2395 = vmatpush1.bf16.msra.mxu0 0
        %2396 = vmatprep.subr.bf16.mxu0 0
        %2397 = vmatpush1.bf16.msra.mxu0 0
        %2398 = vmatprep.subr.bf16.mxu0 0
        %2399 = vmatpush1.bf16.msra.mxu0 0
        %2400 = vmatprep.subr.bf16.mxu0 0
        %2401 = vmatpush1.bf16.msra.mxu0 0
        %2402 = vmatprep.subr.bf16.mxu0 0
        %2403 = vmatpush1.bf16.msra.mxu0 0
        %2404 = vmatprep.subr.bf16.mxu0 0
        %2405 = vmatpush1.bf16.msra.mxu0 0
        %2406 = vmatprep.subr.bf16.mxu0 0
        %2407 = vmatpush1.bf16.msra.mxu0 0
        %2408 = vmatprep.subr.bf16.mxu0 0
        %2409 = vmatpush1.bf16.msra.mxu0 0
        %2410 = vmatprep.subr.bf16.mxu0 0
        %2411 = vmatpush1.bf16.msra.mxu0 0
        %2412 = vmatprep.subr.bf16.mxu0 0
        %2413 = vmatpush1.bf16.msra.mxu0 0
        %2414 = vmatprep.subr.bf16.mxu0 0
        %2415 = vmatpush1.bf16.msra.mxu0 0
        %2416 = vmatprep.mubr.bf16.mxu0 0
        %2417 = vmatmul.mubr.bf16.gmra.mrb[0].mxu0 %v2341
        %v2418 = vpop.f32.mrb[0].mxu0
        %v2419 = vadd.f32 0.0, %v2418
        %v2420 = vpop.f32.mrb[0].mxu0
        %v2421 = vpop.f32.mrb[0].mxu0
        %v2422 = vpop.f32.mrb[0].mxu0
        %2423 = vdwg.mxu0
        %v2425 = vsel %vm912, %v2314, 0
        %2427 = vmatprep.subr.bf16.mxu0 %v2322
        %2428 = vmatpush1.bf16.msra.mxu0 %v2321
        %2429 = vmatprep.subr.bf16.mxu0 0
        %2430 = vmatpush1.bf16.msra.mxu0 0
        %2431 = vmatprep.subr.bf16.mxu0 0
        %2432 = vmatpush1.bf16.msra.mxu0 0
        %2433 = vmatprep.subr.bf16.mxu0 0
        %2434 = vmatpush1.bf16.msra.mxu0 0
        %2435 = vmatprep.subr.bf16.mxu0 0
        %2436 = vmatpush1.bf16.msra.mxu0 0
        %2437 = vmatprep.subr.bf16.mxu0 0
        %2438 = vmatpush1.bf16.msra.mxu0 0
        %2439 = vmatprep.subr.bf16.mxu0 0
        %2440 = vmatpush1.bf16.msra.mxu0 0
        %2441 = vmatprep.subr.bf16.mxu0 0
        %2442 = vmatpush1.bf16.msra.mxu0 0
        %2443 = vmatprep.subr.bf16.mxu0 0
        %2444 = vmatpush1.bf16.msra.mxu0 0
        %2445 = vmatprep.subr.bf16.mxu0 0
        %2446 = vmatpush1.bf16.msra.mxu0 0
        %2447 = vmatprep.subr.bf16.mxu0 0
        %2448 = vmatpush1.bf16.msra.mxu0 0
        %2449 = vmatprep.subr.bf16.mxu0 0
        %2450 = vmatpush1.bf16.msra.mxu0 0
        %2451 = vmatprep.subr.bf16.mxu0 0
        %2452 = vmatpush1.bf16.msra.mxu0 0
        %2453 = vmatprep.subr.bf16.mxu0 0
        %2454 = vmatpush1.bf16.msra.mxu0 0
        %2455 = vmatprep.subr.bf16.mxu0 0
        %2456 = vmatpush1.bf16.msra.mxu0 0
        %2457 = vmatprep.subr.bf16.mxu0 0
        %2458 = vmatpush1.bf16.msra.mxu0 0
        %2459 = vmatprep.mubr.bf16.mxu0 0
        %2460 = vmatmul.mubr.bf16.gmra.mrb[0].mxu0 %v2425
        %v2461 = vpop.f32.mrb[0].mxu0
        %v2462 = vadd.f32 %v2378, %v2461
        %v2463 = vpop.f32.mrb[0].mxu0
        %v2464 = vadd.f32 %v2380, %v2463
        %v2465 = vpop.f32.mrb[0].mxu0
        %v2466 = vpop.f32.mrb[0].mxu0
        %2467 = vdwg.mxu0
        %2468 = vmatprep.subr.bf16.mxu0 0
        %2469 = vmatpush1.bf16.msra.mxu0 %v2323
        %2470 = vmatprep.subr.bf16.mxu0 0
        %2471 = vmatpush1.bf16.msra.mxu0 0
        %2472 = vmatprep.subr.bf16.mxu0 0
        %2473 = vmatpush1.bf16.msra.mxu0 0
        %2474 = vmatprep.subr.bf16.mxu0 0
        %2475 = vmatpush1.bf16.msra.mxu0 0
        %2476 = vmatprep.subr.bf16.mxu0 0
        %2477 = vmatpush1.bf16.msra.mxu0 0
        %2478 = vmatprep.subr.bf16.mxu0 0
        %2479 = vmatpush1.bf16.msra.mxu0 0
        %2480 = vmatprep.subr.bf16.mxu0 0
        %2481 = vmatpush1.bf16.msra.mxu0 0
        %2482 = vmatprep.subr.bf16.mxu0 0
        %2483 = vmatpush1.bf16.msra.mxu0 0
        %2484 = vmatprep.subr.bf16.mxu0 0
        %2485 = vmatpush1.bf16.msra.mxu0 0
        %2486 = vmatprep.subr.bf16.mxu0 0
        %2487 = vmatpush1.bf16.msra.mxu0 0
        %2488 = vmatprep.subr.bf16.mxu0 0
        %2489 = vmatpush1.bf16.msra.mxu0 0
        %2490 = vmatprep.subr.bf16.mxu0 0
        %2491 = vmatpush1.bf16.msra.mxu0 0
        %2492 = vmatprep.subr.bf16.mxu0 0
        %2493 = vmatpush1.bf16.msra.mxu0 0
        %2494 = vmatprep.subr.bf16.mxu0 0
        %2495 = vmatpush1.bf16.msra.mxu0 0
        %2496 = vmatprep.subr.bf16.mxu0 0
        %2497 = vmatpush1.bf16.msra.mxu0 0
        %2498 = vmatprep.subr.bf16.mxu0 0
        %2499 = vmatpush1.bf16.msra.mxu0 0
        %2500 = vmatprep.mubr.bf16.mxu0 0
        %2501 = vmatmul.mubr.bf16.gmra.mrb[0].mxu0 %v2425
        %v2502 = vpop.f32.mrb[0].mxu0
        %v2503 = vadd.f32 %v2419, %v2502
        %v2504 = vpop.f32.mrb[0].mxu0
        %v2505 = vpop.f32.mrb[0].mxu0
        %v2506 = vpop.f32.mrb[0].mxu0
        %2507 = vdwg.mxu0
        %v2508 = vld [vmem:[%s464 + $0x40] sm:$0xff]
        %v2509 = vpack.c.bf16 %v2508, %v2508
        %2510 = vrot.lane.b32.xlu0 %v2321, 126
        %v2511 = vpop.permute.xlu0 %2510
        %2512 = vrot.lane.b32.xlu0 %v2322, 126
        %v2513 = vpop.permute.xlu0 %2512
        %2514 = vrot.lane.b32.xlu0 %v2323, 126
        %v2515 = vpop.permute.xlu0 %2514
        %v2516 = vsel %vm474, %v2511, %v2513
        %v2517 = vsel %vm474, %v2513, %v2515
        %v2522 = vsel %vm912, %v2509, 0
        %2524 = vmatprep.subr.bf16.mxu0 %v2517
        %2525 = vmatpush1.bf16.msra.mxu0 %v2516
        %2526 = vmatprep.subr.bf16.mxu0 0
        %2527 = vmatpush1.bf16.msra.mxu0 0
        %2528 = vmatprep.subr.bf16.mxu0 0
        %2529 = vmatpush1.bf16.msra.mxu0 0
        %2530 = vmatprep.subr.bf16.mxu0 0
        %2531 = vmatpush1.bf16.msra.mxu0 0
        %2532 = vmatprep.subr.bf16.mxu0 0
        %2533 = vmatpush1.bf16.msra.mxu0 0
        %2534 = vmatprep.subr.bf16.mxu0 0
        %2535 = vmatpush1.bf16.msra.mxu0 0
        %2536 = vmatprep.subr.bf16.mxu0 0
        %2537 = vmatpush1.bf16.msra.mxu0 0
        %2538 = vmatprep.subr.bf16.mxu0 0
        %2539 = vmatpush1.bf16.msra.mxu0 0
        %2540 = vmatprep.subr.bf16.mxu0 0
        %2541 = vmatpush1.bf16.msra.mxu0 0
        %2542 = vmatprep.subr.bf16.mxu0 0
        %2543 = vmatpush1.bf16.msra.mxu0 0
        %2544 = vmatprep.subr.bf16.mxu0 0
        %2545 = vmatpush1.bf16.msra.mxu0 0
        %2546 = vmatprep.subr.bf16.mxu0 0
        %2547 = vmatpush1.bf16.msra.mxu0 0
        %2548 = vmatprep.subr.bf16.mxu0 0
        %2549 = vmatpush1.bf16.msra.mxu0 0
        %2550 = vmatprep.subr.bf16.mxu0 0
        %2551 = vmatpush1.bf16.msra.mxu0 0
        %2552 = vmatprep.subr.bf16.mxu0 0
        %2553 = vmatpush1.bf16.msra.mxu0 0
        %2554 = vmatprep.subr.bf16.mxu0 0
        %2555 = vmatpush1.bf16.msra.mxu0 0
        %2556 = vmatprep.mubr.bf16.mxu0 0
        %2557 = vmatmul.mubr.bf16.gmra.mrb[0].mxu0 %v2522
        %v2558 = vpop.f32.mrb[0].mxu0
        %v2559 = vadd.f32 0.0, %v2558
        %v2560 = vpop.f32.mrb[0].mxu0
        %v2561 = vadd.f32 0.0, %v2560
        %v2562 = vpop.f32.mrb[0].mxu0
        %v2563 = vpop.f32.mrb[0].mxu0
        %2564 = vdwg.mxu0
        %2565 = vmatprep.subr.bf16.mxu0 0
        %2566 = vmatpush1.bf16.msra.mxu0 %v2515
        %2567 = vmatprep.subr.bf16.mxu0 0
        %2568 = vmatpush1.bf16.msra.mxu0 0
        %2569 = vmatprep.subr.bf16.mxu0 0
        %2570 = vmatpush1.bf16.msra.mxu0 0
        %2571 = vmatprep.subr.bf16.mxu0 0
        %2572 = vmatpush1.bf16.msra.mxu0 0
        %2573 = vmatprep.subr.bf16.mxu0 0
        %2574 = vmatpush1.bf16.msra.mxu0 0
        %2575 = vmatprep.subr.bf16.mxu0 0
        %2576 = vmatpush1.bf16.msra.mxu0 0
        %2577 = vmatprep.subr.bf16.mxu0 0
        %2578 = vmatpush1.bf16.msra.mxu0 0
        %2579 = vmatprep.subr.bf16.mxu0 0
        %2580 = vmatpush1.bf16.msra.mxu0 0
        %2581 = vmatprep.subr.bf16.mxu0 0
        %2582 = vmatpush1.bf16.msra.mxu0 0
        %2583 = vmatprep.subr.bf16.mxu0 0
        %2584 = vmatpush1.bf16.msra.mxu0 0
        %2585 = vmatprep.subr.bf16.mxu0 0
        %2586 = vmatpush1.bf16.msra.mxu0 0
        %2587 = vmatprep.subr.bf16.mxu0 0
        %2588 = vmatpush1.bf16.msra.mxu0 0
        %2589 = vmatprep.subr.bf16.mxu0 0
        %2590 = vmatpush1.bf16.msra.mxu0 0
        %2591 = vmatprep.subr.bf16.mxu0 0
        %2592 = vmatpush1.bf16.msra.mxu0 0
        %2593 = vmatprep.subr.bf16.mxu0 0
        %2594 = vmatpush1.bf16.msra.mxu0 0
        %2595 = vmatprep.subr.bf16.mxu0 0
        %2596 = vmatpush1.bf16.msra.mxu0 0
        %2597 = vmatprep.mubr.bf16.mxu0 0
        %2598 = vmatmul.mubr.bf16.gmra.mrb[0].mxu0 %v2522
        %v2599 = vpop.f32.mrb[0].mxu0
        %v2600 = vadd.f32 0.0, %v2599
        %v2601 = vpop.f32.mrb[0].mxu0
        %v2602 = vpop.f32.mrb[0].mxu0
        %v2603 = vpop.f32.mrb[0].mxu0
        %2604 = vdwg.mxu0
        %v2605 = vadd.f32 %v2462, %v2559
        %v2606 = vadd.f32 %v2464, %v2561
        %v2607 = vadd.f32 %v2503, %v2600
        %v2608 = vld [vmem:[%s579 + $0x40] sm:$0xff]
        %v2609 = vpack.c.bf16 %v2608, %v2608
        %2610 = vrot.lane.b32.xlu0 %v2321, 125
        %v2611 = vpop.permute.xlu0 %2610
        %2612 = vrot.lane.b32.xlu0 %v2322, 125
        %v2613 = vpop.permute.xlu0 %2612
        %2614 = vrot.lane.b32.xlu0 %v2323, 125
        %v2615 = vpop.permute.xlu0 %2614
        %v2616 = vsel %vm589, %v2611, %v2613
        %v2617 = vsel %vm589, %v2613, %v2615
        %v2622 = vsel %vm912, %v2609, 0
        %2624 = vmatprep.subr.bf16.mxu0 %v2617
        %2625 = vmatpush1.bf16.msra.mxu0 %v2616
        %2626 = vmatprep.subr.bf16.mxu0 0
        %2627 = vmatpush1.bf16.msra.mxu0 0
        %2628 = vmatprep.subr.bf16.mxu0 0
        %2629 = vmatpush1.bf16.msra.mxu0 0
        %2630 = vmatprep.subr.bf16.mxu0 0
        %2631 = vmatpush1.bf16.msra.mxu0 0
        %2632 = vmatprep.subr.bf16.mxu0 0
        %2633 = vmatpush1.bf16.msra.mxu0 0
        %2634 = vmatprep.subr.bf16.mxu0 0
        %2635 = vmatpush1.bf16.msra.mxu0 0
        %2636 = vmatprep.subr.bf16.mxu0 0
        %2637 = vmatpush1.bf16.msra.mxu0 0
        %2638 = vmatprep.subr.bf16.mxu0 0
        %2639 = vmatpush1.bf16.msra.mxu0 0
        %2640 = vmatprep.subr.bf16.mxu0 0
        %2641 = vmatpush1.bf16.msra.mxu0 0
        %2642 = vmatprep.subr.bf16.mxu0 0
        %2643 = vmatpush1.bf16.msra.mxu0 0
        %2644 = vmatprep.subr.bf16.mxu0 0
        %2645 = vmatpush1.bf16.msra.mxu0 0
        %2646 = vmatprep.subr.bf16.mxu0 0
        %2647 = vmatpush1.bf16.msra.mxu0 0
        %2648 = vmatprep.subr.bf16.mxu0 0
        %2649 = vmatpush1.bf16.msra.mxu0 0
        %2650 = vmatprep.subr.bf16.mxu0 0
        %2651 = vmatpush1.bf16.msra.mxu0 0
        %2652 = vmatprep.subr.bf16.mxu0 0
        %2653 = vmatpush1.bf16.msra.mxu0 0
        %2654 = vmatprep.subr.bf16.mxu0 0
        %2655 = vmatpush1.bf16.msra.mxu0 0
        %2656 = vmatprep.mubr.bf16.mxu0 0
        %2657 = vmatmul.mubr.bf16.gmra.mrb[0].mxu0 %v2622
        %v2658 = vpop.f32.mrb[0].mxu0
        %v2659 = vadd.f32 0.0, %v2658
        %v2660 = vpop.f32.mrb[0].mxu0
        %v2661 = vadd.f32 0.0, %v2660
        %v2662 = vpop.f32.mrb[0].mxu0
        %v2663 = vpop.f32.mrb[0].mxu0
        %2664 = vdwg.mxu0
        %2665 = vmatprep.subr.bf16.mxu0 0
        %2666 = vmatpush1.bf16.msra.mxu0 %v2615
        %2667 = vmatprep.subr.bf16.mxu0 0
        %2668 = vmatpush1.bf16.msra.mxu0 0
        %2669 = vmatprep.subr.bf16.mxu0 0
        %2670 = vmatpush1.bf16.msra.mxu0 0
        %2671 = vmatprep.subr.bf16.mxu0 0
        %2672 = vmatpush1.bf16.msra.mxu0 0
        %2673 = vmatprep.subr.bf16.mxu0 0
        %2674 = vmatpush1.bf16.msra.mxu0 0
        %2675 = vmatprep.subr.bf16.mxu0 0
        %2676 = vmatpush1.bf16.msra.mxu0 0
        %2677 = vmatprep.subr.bf16.mxu0 0
        %2678 = vmatpush1.bf16.msra.mxu0 0
        %2679 = vmatprep.subr.bf16.mxu0 0
        %2680 = vmatpush1.bf16.msra.mxu0 0
        %2681 = vmatprep.subr.bf16.mxu0 0
        %2682 = vmatpush1.bf16.msra.mxu0 0
        %2683 = vmatprep.subr.bf16.mxu0 0
        %2684 = vmatpush1.bf16.msra.mxu0 0
        %2685 = vmatprep.subr.bf16.mxu0 0
        %2686 = vmatpush1.bf16.msra.mxu0 0
        %2687 = vmatprep.subr.bf16.mxu0 0
        %2688 = vmatpush1.bf16.msra.mxu0 0
        %2689 = vmatprep.subr.bf16.mxu0 0
        %2690 = vmatpush1.bf16.msra.mxu0 0
        %2691 = vmatprep.subr.bf16.mxu0 0
        %2692 = vmatpush1.bf16.msra.mxu0 0
        %2693 = vmatprep.subr.bf16.mxu0 0
        %2694 = vmatpush1.bf16.msra.mxu0 0
        %2695 = vmatprep.subr.bf16.mxu0 0
        %2696 = vmatpush1.bf16.msra.mxu0 0
        %2697 = vmatprep.mubr.bf16.mxu0 0
        %2698 = vmatmul.mubr.bf16.gmra.mrb[0].mxu0 %v2622
        %v2699 = vpop.f32.mrb[0].mxu0
        %v2700 = vadd.f32 0.0, %v2699
        %v2701 = vpop.f32.mrb[0].mxu0
        %v2702 = vpop.f32.mrb[0].mxu0
        %v2703 = vpop.f32.mrb[0].mxu0
        %2704 = vdwg.mxu0
        %v2705 = vadd.f32 %v2605, %v2659
        %v2706 = vadd.f32 %v2606, %v2661
        %v2707 = vadd.f32 %v2607, %v2700
        %v2708 = vld [vmem:[%s694 + $0x40] sm:$0xff]
        %v2709 = vpack.c.bf16 %v2708, %v2708
        %2710 = vrot.lane.b32.xlu0 %v2321, 124
        %v2711 = vpop.permute.xlu0 %2710
        %2712 = vrot.lane.b32.xlu0 %v2322, 124
        %v2713 = vpop.permute.xlu0 %2712
        %2714 = vrot.lane.b32.xlu0 %v2323, 124
        %v2715 = vpop.permute.xlu0 %2714
        %v2716 = vsel %vm704, %v2711, %v2713
        %v2717 = vsel %vm704, %v2713, %v2715
        %v2722 = vsel %vm912, %v2709, 0
        %2724 = vmatprep.subr.bf16.mxu0 %v2717
        %2725 = vmatpush1.bf16.msra.mxu0 %v2716
        %2726 = vmatprep.subr.bf16.mxu0 0
        %2727 = vmatpush1.bf16.msra.mxu0 0
        %2728 = vmatprep.subr.bf16.mxu0 0
        %2729 = vmatpush1.bf16.msra.mxu0 0
        %2730 = vmatprep.subr.bf16.mxu0 0
        %2731 = vmatpush1.bf16.msra.mxu0 0
        %2732 = vmatprep.subr.bf16.mxu0 0
        %2733 = vmatpush1.bf16.msra.mxu0 0
        %2734 = vmatprep.subr.bf16.mxu0 0
        %2735 = vmatpush1.bf16.msra.mxu0 0
        %2736 = vmatprep.subr.bf16.mxu0 0
        %2737 = vmatpush1.bf16.msra.mxu0 0
        %2738 = vmatprep.subr.bf16.mxu0 0
        %2739 = vmatpush1.bf16.msra.mxu0 0
        %2740 = vmatprep.subr.bf16.mxu0 0
        %2741 = vmatpush1.bf16.msra.mxu0 0
        %2742 = vmatprep.subr.bf16.mxu0 0
        %2743 = vmatpush1.bf16.msra.mxu0 0
        %2744 = vmatprep.subr.bf16.mxu0 0
        %2745 = vmatpush1.bf16.msra.mxu0 0
        %2746 = vmatprep.subr.bf16.mxu0 0
        %2747 = vmatpush1.bf16.msra.mxu0 0
        %2748 = vmatprep.subr.bf16.mxu0 0
        %2749 = vmatpush1.bf16.msra.mxu0 0
        %2750 = vmatprep.subr.bf16.mxu0 0
        %2751 = vmatpush1.bf16.msra.mxu0 0
        %2752 = vmatprep.subr.bf16.mxu0 0
        %2753 = vmatpush1.bf16.msra.mxu0 0
        %2754 = vmatprep.subr.bf16.mxu0 0
        %2755 = vmatpush1.bf16.msra.mxu0 0
        %2756 = vmatprep.mubr.bf16.mxu0 0
        %2757 = vmatmul.mubr.bf16.gmra.mrb[0].mxu0 %v2722
        %v2758 = vpop.f32.mrb[0].mxu0
        %v2759 = vadd.f32 0.0, %v2758
        %v2760 = vpop.f32.mrb[0].mxu0
        %v2761 = vadd.f32 0.0, %v2760
        %v2762 = vpop.f32.mrb[0].mxu0
        %v2763 = vpop.f32.mrb[0].mxu0
        %2764 = vdwg.mxu0
        %2765 = vmatprep.subr.bf16.mxu0 0
        %2766 = vmatpush1.bf16.msra.mxu0 %v2715
        %2767 = vmatprep.subr.bf16.mxu0 0
        %2768 = vmatpush1.bf16.msra.mxu0 0
        %2769 = vmatprep.subr.bf16.mxu0 0
        %2770 = vmatpush1.bf16.msra.mxu0 0
        %2771 = vmatprep.subr.bf16.mxu0 0
        %2772 = vmatpush1.bf16.msra.mxu0 0
        %2773 = vmatprep.subr.bf16.mxu0 0
        %2774 = vmatpush1.bf16.msra.mxu0 0
        %2775 = vmatprep.subr.bf16.mxu0 0
        %2776 = vmatpush1.bf16.msra.mxu0 0
        %2777 = vmatprep.subr.bf16.mxu0 0
        %2778 = vmatpush1.bf16.msra.mxu0 0
        %2779 = vmatprep.subr.bf16.mxu0 0
        %2780 = vmatpush1.bf16.msra.mxu0 0
        %2781 = vmatprep.subr.bf16.mxu0 0
        %2782 = vmatpush1.bf16.msra.mxu0 0
        %2783 = vmatprep.subr.bf16.mxu0 0
        %2784 = vmatpush1.bf16.msra.mxu0 0
        %2785 = vmatprep.subr.bf16.mxu0 0
        %2786 = vmatpush1.bf16.msra.mxu0 0
        %2787 = vmatprep.subr.bf16.mxu0 0
        %2788 = vmatpush1.bf16.msra.mxu0 0
        %2789 = vmatprep.subr.bf16.mxu0 0
        %2790 = vmatpush1.bf16.msra.mxu0 0
        %2791 = vmatprep.subr.bf16.mxu0 0
        %2792 = vmatpush1.bf16.msra.mxu0 0
        %2793 = vmatprep.subr.bf16.mxu0 0
        %2794 = vmatpush1.bf16.msra.mxu0 0
        %2795 = vmatprep.subr.bf16.mxu0 0
        %2796 = vmatpush1.bf16.msra.mxu0 0
        %2797 = vmatprep.mubr.bf16.mxu0 0
        %2798 = vmatmul.mubr.bf16.gmra.mrb[0].mxu0 %v2722
        %v2799 = vpop.f32.mrb[0].mxu0
        %v2800 = vadd.f32 0.0, %v2799
        %v2801 = vpop.f32.mrb[0].mxu0
        %v2802 = vpop.f32.mrb[0].mxu0
        %v2803 = vpop.f32.mrb[0].mxu0
        %2804 = vdwg.mxu0
        %v2805 = vadd.f32 %v2705, %v2759
        %v2806 = vadd.f32 %v2706, %v2761
        %v2807 = vadd.f32 %v2707, %v2800
        %v2808 = vld [vmem:[%s809 + $0x40] sm:$0xff]
        %2810 = vset.pattern.permute.xlu0 0
        %2811 = vperm.xlu0 %2810, %v2808
        %v2812 = vpop.permute.xlu0 %2811
        %v2814 = vadd.f32 %v2805, %v2812
        %v2815 = vadd.f32 %v2806, %v2812
        %v2816 = vadd.f32 %v2807, %v2812
        %vm2817 = vcmp.gt.f32.partialorder %v2814, 20.0
        %vm2818 = vcmp.gt.f32.partialorder %v2815, 20.0
        %vm2819 = vcmp.gt.f32.partialorder %v2816, 20.0
        %v2820 = vmin.f32 %v2814, 20.0
        %v2821 = vmin.f32 %v2815, 20.0
        %v2822 = vmin.f32 %v2816, 20.0
        %v2823 = vmul.f32 %v2820, 1.442695
        %v2824 = vpow.pop %v2823
        %v2825 = vmul.f32 %v2821, 1.442695
        %v2826 = vpow.pop %v2825
        %v2827 = vmul.f32 %v2822, 1.442695
        %v2828 = vpow.pop %v2827
        %v2829 = vadd.f32 %v2824, 1.0
        %v2830 = vlog2.pop %v2829
        %v2831 = vmul.f32 %v2830, 0.6931472
        %v2832 = vmul.f32 -0.5, %v2824
        %v2833 = vadd.f32 %v2832, 1.0
        %v2834 = vmul.f32 %v2833, %v2824
        %v2835 = vand.u32 2147483647, %v2824
        %vm2836 = vcmp.lt.f32.partialorder %v2835, 0.0004427343
        %v2837 = vsel %vm2836, %v2834, %v2831
        %v2838 = vadd.f32 %v2826, 1.0
        %v2839 = vlog2.pop %v2838
        %v2840 = vmul.f32 %v2839, 0.6931472
        %v2841 = vmul.f32 -0.5, %v2826
        %v2842 = vadd.f32 %v2841, 1.0
        %v2843 = vmul.f32 %v2842, %v2826
        %v2844 = vand.u32 2147483647, %v2826
        %vm2845 = vcmp.lt.f32.partialorder %v2844, 0.0004427343
        %v2846 = vsel %vm2845, %v2843, %v2840
        %v2847 = vadd.f32 %v2828, 1.0
        %v2848 = vlog2.pop %v2847
        %v2849 = vmul.f32 %v2848, 0.6931472
        %v2850 = vmul.f32 -0.5, %v2828
        %v2851 = vadd.f32 %v2850, 1.0
        %v2852 = vmul.f32 %v2851, %v2828
        %v2853 = vand.u32 2147483647, %v2828
        %vm2854 = vcmp.lt.f32.partialorder %v2853, 0.0004427343
        %v2855 = vsel %vm2854, %v2852, %v2849
        %v2856 = vsel %vm2817, %v2814, %v2837
        %v2857 = vsel %vm2818, %v2815, %v2846
        %v2858 = vsel %vm2819, %v2816, %v2855
        %v2859 = vlaneseq
        %v2860 = vshrl.u32 %v2859, 7
        %vm2861 = vcmp.eq.s32.totalorder %v2860, 1
        %v2862 = vsel %vm2861, %v2856, %v2814
        %v2863 = vsel %vm2861, %v2857, %v2815
        %v2864 = vsel %vm2861, %v2858, %v2816
        %2867 = vrot.lane.b32.xlu0 %v2862, 126
        %v2868 = vpop.permute.xlu0 %2867
        %2869 = vrot.lane.b32.xlu0 %v2863, 126
        %v2870 = vpop.permute.xlu0 %2869
        %vm2871 = vcmask 1031168
        %v2872 = vsel %vm2871, %v2868, %v2870
        %2874 = vst [vmem:[%s179] sm:$0xff] %v2872
        %2876 = vrot.lane.b32.xlu0 %v2863, 122
        %v2877 = vpop.permute.xlu0 %2876
        %2878 = vrot.lane.b32.xlu0 %v2864, 122
        %v2879 = vpop.permute.xlu0 %2878
        %vm2880 = vcmask 998400
        %v2881 = vsel %vm2880, %v2877, %v2879
        %s2883 = scalar_lea.vmem %s179, 8
        %2884 = vst [vmem:[%s2883] sm:$0xff] %v2881
        %s2885 = smul.u32 2, %s17
        %p2886 = scmp.lt.s32.totalorder %s2885, 3
        %s2887 = scalar_select %p2886, %s2885, 3
        %s2888 = smul.addr %s2887, 8
        %s2889 = scalar_lea.vmem %s2, %s2888
        // Predicated region
        $region37: #{simple_cnn_forward.1} parent=27 // pred_check
          %p2890 = pneg %p82
        $region38: #{simple_cnn_forward.1} parent=27 // pred_check_branch
          %2892 = sbr.rel (%p2890) target = $region40
        $region39: #{simple_cnn_forward.1} parent=27 // pred_region
          %s2893 = smul.u32 2, %s17
        $region40: #{simple_cnn_forward.1} parent=27 // pred_fallthru
          _
      $region28: #{simple_cnn_forward.1} parent=5 // pred_fallthru
        _
      %p2894 = scmp.le.s32.totalorder 2, %s12
      // Predicated region
      $region41: #{simple_cnn_forward.1} parent=5 // pred_check
        %p2895 = pneg %p2894
      $region42: #{simple_cnn_forward.1} parent=5 // pred_check_branch
        %2897 = sbr.rel (%p2895) target = $region44
      $region43: #{simple_cnn_forward.1} parent=5 // pred_region
        %s2898 = ssub.s32 %s12, 2
        // Predicated region
        $region45: #{simple_cnn_forward.1} parent=43 // pred_check
          %p2899 = pneg %p88
        $region46: #{simple_cnn_forward.1} parent=43 // pred_check_branch
          %2901 = sbr.rel (%p2899) target = $region48
        $region47: #{simple_cnn_forward.1} parent=43 // pred_region
          %s2902 = smul.u32 2, %s18
          %p2903 = scmp.lt.s32.totalorder %s2902, 3
          %s2904 = scalar_select %p2903, %s2902, 3
          %s2905 = smul.addr %s2904, 8
          %s2906 = scalar_lea.vmem %s2, %s2905
        $region48: #{simple_cnn_forward.1} parent=43 // pred_fallthru
          _
      $region44: #{simple_cnn_forward.1} parent=5 // pred_fallthru
        _
    $region6: #{simple_cnn_forward.1} parent=1 // loop_footer
      %s16 = sadd.s32 1, %s12
    $region7: #{simple_cnn_forward.1} parent=1 // loop_footer_branch
      %11 = sbr.rel target = $region3
    $region8: #{simple_cnn_forward.1} parent=1 // loop_exit
      _
    %2907 = vsyncpa [#allocation4], 1
    %s2908 = scalar_lea.sflag [#allocation4], 1
    %2909 = vsyncpa %s2908, 1
    %2910 = vsyncpa [#allocation6], 1

</llo_original>
